<compile_context>
chip_gen: v5e
topology: v5e:2x2
jax: 0.10.0
libtpu: 0.0.40
codegen_flags: <defaults>
</compile_context>

<pallas_src>
import functools
import math

import jax
import jax.numpy as jnp
from jax.experimental import pallas as pl
from jax.experimental.pallas import tpu as pltpu

LN_EPS = 1e-5
NEG_INF = -1e9

# small synthetic config consistent with HubertCTC's __init__/forward
B = 2
T_WAV = 128
CONV_LAYERS = [(16, 4), (16, 2)]   # (out_channels, kernel == stride) per conv block
C_FEAT = CONV_LAYERS[-1][0]
D = 32                             # cfg.encoder_embed_dim
H = 4
DH = D // H
FFN = 64
N_LAYERS = 2
NUM_LABELS = 8                     # cfg.num_labels

assert len(CONV_LAYERS) == 2, "fused frontend below is written for 2 conv blocks"
TOTAL_STRIDE = 1
for _, _k in CONV_LAYERS:
    TOTAL_STRIDE *= _k
T_FEAT = T_WAV // TOTAL_STRIDE
assert T_WAV % TOTAL_STRIDE == 0


# --------------------------- fused Pallas kernel ------------------------------

def _gelu(x):
    return jax.nn.gelu(x, approximate=True)


def _ln(x, g, b):
    mean = jnp.mean(x, axis=-1, keepdims=True)
    var = jnp.mean(jnp.square(x - mean), axis=-1, keepdims=True)
    return (x - mean) * jax.lax.rsqrt(var + LN_EPS) * g + b


def _hubert_ctc_kernel(*refs):
    """One grid step == one batch element; all activations stay in VMEM."""
    f32 = jnp.float32
    (src_ref, bias_ref, valid_ref,
     c1w_ref, c1b_ref, c2w_ref, c2b_ref,
     lfg_ref, lfb_ref, pw_ref, pb_ref, leg_ref, leb_ref) = refs[:13]
    n_layer_refs = 12 * N_LAYERS
    layer_refs = refs[13:13 + n_layer_refs]
    clsw_ref, clsb_ref = refs[13 + n_layer_refs:15 + n_layer_refs]
    out_ref = refs[15 + n_layer_refs]

    # ---- hubert.feature_extractor: stacked Conv1d(k==stride) + GELU ---------
    # src row t holds the TOTAL_STRIDE raw samples feeding output frame t.
    # conv1 is applied to each k1-sample chunk; the results concatenated along
    # lanes form conv2's im2col (k-major, c_in-minor), all inside VMEM.
    k1 = CONV_LAYERS[0][1]
    k2 = CONV_LAYERS[1][1]
    x_raw = src_ref[...].astype(f32)                        # (T, k1*k2)
    w1 = c1w_ref[...]
    b1 = c1b_ref[...]
    chunks = []
    for j in range(k2):
        xc = x_raw[:, j * k1:(j + 1) * k1]
        chunks.append(_gelu(jnp.dot(xc, w1, preferred_element_type=f32) + b1))
    h = jnp.concatenate(chunks, axis=-1)                    # (T, k2 * C1)
    h = _gelu(jnp.dot(h, c2w_ref[...], preferred_element_type=f32) + c2b_ref[...])
    # TODO(synk): fairseq's GroupNorm in the first conv block is omitted in this synthetic extractor.

    # ---- hubert.layer_norm + post_extract_proj ------------------------------
    h = _ln(h, lfg_ref[...], lfb_ref[...])
    x = jnp.dot(h, pw_ref[...], preferred_element_type=f32) + pb_ref[...]   # (T, D)

    # ---- encoder pre-processing: zero padded frames + LayerNorm -------------
    x = x * valid_ref[...]                                  # (T, 1) broadcast
    # TODO(synk): wav2vec2 positional grouped-conv embedding omitted.
    x = _ln(x, leg_ref[...], leb_ref[...])

    bias = bias_ref[...][0]                                 # (1, T) key-padding bias
    scale = 1.0 / math.sqrt(DH)

    # ---- transformer encoder layers (post-LN, layer_norm_first=False) -------
    for li in range(N_LAYERS):
        (wqkv, bqkv, wo, bo, ln1g, ln1b,
         wfc1, bfc1, wfc2, bfc2, ln2g, ln2b) = layer_refs[12 * li:12 * (li + 1)]

        residual = x
        qkv = jnp.dot(x, wqkv[...], preferred_element_type=f32) + bqkv[...]   # (T, 3D)
        q = qkv[:, 0:D] * scale
        k = qkv[:, D:2 * D]
        v = qkv[:, 2 * D:3 * D]
        heads = []
        for hh in range(H):
            lo, hi = hh * DH, (hh + 1) * DH
            s = jnp.dot(q[:, lo:hi], k[:, lo:hi].T,
                        preferred_element_type=f32) + bias                    # (T, T)
            m = jnp.max(s, axis=-1, keepdims=True)
            p = jnp.exp(s - m)
            l = jnp.sum(p, axis=-1, keepdims=True)
            o = jnp.dot(p, v[:, lo:hi], preferred_element_type=f32)
            heads.append(o * pl.reciprocal(l, approx=True))
        attn = jnp.concatenate(heads, axis=-1)                                # (T, D)
        attn = jnp.dot(attn, wo[...], preferred_element_type=f32) + bo[...]
        x = _ln(residual + attn, ln1g[...], ln1b[...])

        residual = x
        hdn = _gelu(jnp.dot(x, wfc1[...], preferred_element_type=f32) + bfc1[...])
        ff = jnp.dot(hdn, wfc2[...], preferred_element_type=f32) + bfc2[...]
        x = _ln(residual + ff, ln2g[...], ln2b[...])

    # ---- classifier (final_dropout is identity in eval) ---------------------
    logits = jnp.dot(x, clsw_ref[...], preferred_element_type=f32) + clsb_ref[...]
    out_ref[...] = logits.astype(out_ref.dtype)


# --------------------------- wrapper / glue -----------------------------------

def _row(v):
    return v.reshape(1, -1)


def _flatten_weights(params):
    (w1, b1), (w2, b2) = params["conv"]
    flat = [w1, _row(b1), w2, _row(b2),
            _row(params["ln_feat"][0]), _row(params["ln_feat"][1]),
            params["post_proj"][0], _row(params["post_proj"][1]),
            _row(params["ln_enc"][0]), _row(params["ln_enc"][1])]
    for lp in params["layers"]:
        flat += [lp["qkv"][0], _row(lp["qkv"][1]),
                 lp["out"][0], _row(lp["out"][1]),
                 _row(lp["ln1"][0]), _row(lp["ln1"][1]),
                 lp["fc1"][0], _row(lp["fc1"][1]),
                 lp["fc2"][0], _row(lp["fc2"][1]),
                 _row(lp["ln2"][0]), _row(lp["ln2"][1])]
    flat += [params["classifier"][0], _row(params["classifier"][1])]
    return flat


def forward_padding_mask(padding_mask, t_feat):
    """HubertCTC.forward_padding_mask: view (B, T_feat, -1).all(-1)."""
    b, t_wav = padding_mask.shape
    extra = t_wav % t_feat
    if extra > 0:
        padding_mask = padding_mask[:, :-extra]
    return jnp.all(padding_mask.reshape(b, t_feat, -1), axis=-1)


def hubert_ctc_forward(params, source, padding_mask=None):
    """Reproduces HubertCTC.forward in eval mode (dropout / apply_mask are identity)."""
    t_feat = T_FEAT
    # composite im2col of the conv stack (kernel == stride): free row-major reshape
    src_col = source.reshape(B * t_feat, TOTAL_STRIDE)

    if padding_mask is not None:
        pad = forward_padding_mask(padding_mask, t_feat)                    # (B, T) bool
        key_bias = jnp.where(pad, NEG_INF, 0.0).astype(jnp.float32).reshape(B, 1, t_feat)
        valid = (~pad).astype(jnp.float32).reshape(B * t_feat, 1)
    else:
        pad = None
        key_bias = jnp.zeros((B, 1, t_feat), jnp.float32)
        valid = jnp.ones((B * t_feat, 1), jnp.float32)

    flat_w = _flatten_weights(params)

    in_specs = [
        pl.BlockSpec((t_feat, TOTAL_STRIDE), lambda b: (b, 0)),   # per-batch waveform columns
        pl.BlockSpec((1, 1, t_feat), lambda b: (b, 0, 0)),        # per-batch key-padding bias
        pl.BlockSpec((t_feat, 1), lambda b: (b, 0)),              # per-batch valid-frame mask
    ]
    for w in flat_w:                                              # weights shared across grid
        in_specs.append(pl.BlockSpec(w.shape, lambda b: (0, 0)))

    logits2d = pl.pallas_call(
        _hubert_ctc_kernel,
        out_shape=jax.ShapeDtypeStruct((B * t_feat, NUM_LABELS), jnp.float32),
        grid=(B,),
        in_specs=in_specs,
        out_specs=pl.BlockSpec((t_feat, NUM_LABELS), lambda b: (b, 0)),
        compiler_params=pltpu.CompilerParams(
            dimension_semantics=("parallel",)),   # lets v7x shard batches over its 2 TCs
    )(src_col, key_bias, valid, *flat_w)

    return logits2d.reshape(B, t_feat, NUM_LABELS), pad


# --------------------------- params -------------------------------------------

def init_params(key):
    keys = iter(jax.random.split(key, 64))

    def w_init(shape, scale=0.02):
        return (scale * jax.random.normal(next(keys), shape)).astype(jnp.float32)

    def zeros(n):
        return jnp.zeros((n,), jnp.float32)

    def ln(n):
        return (jnp.ones((n,), jnp.float32), jnp.zeros((n,), jnp.float32))

    params = {}
    conv, c_in = [], 1
    for c_out, k in CONV_LAYERS:
        conv.append((w_init((k * c_in, c_out)), zeros(c_out)))
        c_in = c_out
    params["conv"] = conv
    params["ln_feat"] = ln(C_FEAT)
    params["post_proj"] = (w_init((C_FEAT, D)), zeros(D))
    params["ln_enc"] = ln(D)
    params["layers"] = [
        {
            "qkv": (w_init((D, 3 * D)), zeros(3 * D)),   # fused Q|K|V projection
            "out": (w_init((D, D)), zeros(D)),
            "ln1": ln(D),
            "fc1": (w_init((D, FFN)), zeros(FFN)),
            "fc2": (w_init((FFN, D)), zeros(D)),
            "ln2": ln(D),
        }
        for _ in range(N_LAYERS)
    ]
    # classifier: xavier_uniform weight, zero bias (matches nn.init in HubertCTC.__init__)
    limit = math.sqrt(6.0 / (D + NUM_LABELS))
    cw = jax.random.uniform(next(keys), (D, NUM_LABELS), jnp.float32, -limit, limit)
    params["classifier"] = (cw, zeros(NUM_LABELS))
    return params


# --------------------------- main ----------------------------------------------

if __name__ == "__main__":
    key = jax.random.PRNGKey(0)
    pkey, skey = jax.random.split(key)
    params = init_params(pkey)

    source = jax.random.normal(skey, (B, T_WAV), jnp.float32)
    # padding mask: True == padded. sample 0 fully valid, sample 1 last 32 samples padded.
    lengths = jnp.array([T_WAV, T_WAV - 32], jnp.int32)
    padding_mask = jnp.arange(T_WAV)[None, :] >= lengths[:, None]

    fwd = jax.jit(hubert_ctc_forward)
    logits, out_pad = fwd(params, source, padding_mask)
    logits = jax.block_until_ready(logits)
    out_pad = jax.block_until_ready(out_pad)

    assert logits.shape == (B, T_FEAT, NUM_LABELS), logits.shape
    assert out_pad.shape == (B, T_FEAT), out_pad.shape
    assert bool(jnp.all(jnp.isfinite(logits)))
    print("KERNEL_OK")
</pallas_src>

<mosaic_0001>
module attributes {stable_mosaic.version = 11 : i64} {
  func.func @_hubert_ctc_kernel(%arg0: i32, %arg1: memref<16x8xf32, #tpu.memory_space<vmem>>, %arg2: memref<1x1x16xf32, #tpu.memory_space<vmem>>, %arg3: memref<16x1xf32, #tpu.memory_space<vmem>>, %arg4: memref<4x16xf32, #tpu.memory_space<vmem>>, %arg5: memref<1x16xf32, #tpu.memory_space<vmem>>, %arg6: memref<32x16xf32, #tpu.memory_space<vmem>>, %arg7: memref<1x16xf32, #tpu.memory_space<vmem>>, %arg8: memref<1x16xf32, #tpu.memory_space<vmem>>, %arg9: memref<1x16xf32, #tpu.memory_space<vmem>>, %arg10: memref<16x32xf32, #tpu.memory_space<vmem>>, %arg11: memref<1x32xf32, #tpu.memory_space<vmem>>, %arg12: memref<1x32xf32, #tpu.memory_space<vmem>>, %arg13: memref<1x32xf32, #tpu.memory_space<vmem>>, %arg14: memref<32x96xf32, #tpu.memory_space<vmem>>, %arg15: memref<1x96xf32, #tpu.memory_space<vmem>>, %arg16: memref<32x32xf32, #tpu.memory_space<vmem>>, %arg17: memref<1x32xf32, #tpu.memory_space<vmem>>, %arg18: memref<1x32xf32, #tpu.memory_space<vmem>>, %arg19: memref<1x32xf32, #tpu.memory_space<vmem>>, %arg20: memref<32x64xf32, #tpu.memory_space<vmem>>, %arg21: memref<1x64xf32, #tpu.memory_space<vmem>>, %arg22: memref<64x32xf32, #tpu.memory_space<vmem>>, %arg23: memref<1x32xf32, #tpu.memory_space<vmem>>, %arg24: memref<1x32xf32, #tpu.memory_space<vmem>>, %arg25: memref<1x32xf32, #tpu.memory_space<vmem>>, %arg26: memref<32x96xf32, #tpu.memory_space<vmem>>, %arg27: memref<1x96xf32, #tpu.memory_space<vmem>>, %arg28: memref<32x32xf32, #tpu.memory_space<vmem>>, %arg29: memref<1x32xf32, #tpu.memory_space<vmem>>, %arg30: memref<1x32xf32, #tpu.memory_space<vmem>>, %arg31: memref<1x32xf32, #tpu.memory_space<vmem>>, %arg32: memref<32x64xf32, #tpu.memory_space<vmem>>, %arg33: memref<1x64xf32, #tpu.memory_space<vmem>>, %arg34: memref<64x32xf32, #tpu.memory_space<vmem>>, %arg35: memref<1x32xf32, #tpu.memory_space<vmem>>, %arg36: memref<1x32xf32, #tpu.memory_space<vmem>>, %arg37: memref<1x32xf32, #tpu.memory_space<vmem>>, %arg38: memref<32x8xf32, #tpu.memory_space<vmem>>, %arg39: memref<1x8xf32, #tpu.memory_space<vmem>>, %arg40: memref<16x8xf32, #tpu.memory_space<vmem>>) attributes {dimension_semantics = [#tpu.dimension_semantics<parallel>], iteration_bounds = array<i64: 2>, scalar_prefetch = 0 : i64, scratch_operands = 0 : i64, tpu.core_type = #tpu.core_type<tc>, window_params = [{transform_indices = @transform_0, window_bounds = array<i64: 16, 8>}, {transform_indices = @transform_1, window_bounds = array<i64: 1, 1, 16>}, {transform_indices = @transform_2, window_bounds = array<i64: 16, 1>}, {pipeline_mode = #tpu.pipeline_mode<synchronous>, transform_indices = @transform_3, window_bounds = array<i64: 4, 16>}, {pipeline_mode = #tpu.pipeline_mode<synchronous>, transform_indices = @transform_4, window_bounds = array<i64: 1, 16>}, {pipeline_mode = #tpu.pipeline_mode<synchronous>, transform_indices = @transform_5, window_bounds = array<i64: 32, 16>}, {pipeline_mode = #tpu.pipeline_mode<synchronous>, transform_indices = @transform_6, window_bounds = array<i64: 1, 16>}, {pipeline_mode = #tpu.pipeline_mode<synchronous>, transform_indices = @transform_7, window_bounds = array<i64: 1, 16>}, {pipeline_mode = #tpu.pipeline_mode<synchronous>, transform_indices = @transform_8, window_bounds = array<i64: 1, 16>}, {pipeline_mode = #tpu.pipeline_mode<synchronous>, transform_indices = @transform_9, window_bounds = array<i64: 16, 32>}, {pipeline_mode = #tpu.pipeline_mode<synchronous>, transform_indices = @transform_10, window_bounds = array<i64: 1, 32>}, {pipeline_mode = #tpu.pipeline_mode<synchronous>, transform_indices = @transform_11, window_bounds = array<i64: 1, 32>}, {pipeline_mode = #tpu.pipeline_mode<synchronous>, transform_indices = @transform_12, window_bounds = array<i64: 1, 32>}, {pipeline_mode = #tpu.pipeline_mode<synchronous>, transform_indices = @transform_13, window_bounds = array<i64: 32, 96>}, {pipeline_mode = #tpu.pipeline_mode<synchronous>, transform_indices = @transform_14, window_bounds = array<i64: 1, 96>}, {pipeline_mode = #tpu.pipeline_mode<synchronous>, transform_indices = @transform_15, window_bounds = array<i64: 32, 32>}, {pipeline_mode = #tpu.pipeline_mode<synchronous>, transform_indices = @transform_16, window_bounds = array<i64: 1, 32>}, {pipeline_mode = #tpu.pipeline_mode<synchronous>, transform_indices = @transform_17, window_bounds = array<i64: 1, 32>}, {pipeline_mode = #tpu.pipeline_mode<synchronous>, transform_indices = @transform_18, window_bounds = array<i64: 1, 32>}, {pipeline_mode = #tpu.pipeline_mode<synchronous>, transform_indices = @transform_19, window_bounds = array<i64: 32, 64>}, {pipeline_mode = #tpu.pipeline_mode<synchronous>, transform_indices = @transform_20, window_bounds = array<i64: 1, 64>}, {pipeline_mode = #tpu.pipeline_mode<synchronous>, transform_indices = @transform_21, window_bounds = array<i64: 64, 32>}, {pipeline_mode = #tpu.pipeline_mode<synchronous>, transform_indices = @transform_22, window_bounds = array<i64: 1, 32>}, {pipeline_mode = #tpu.pipeline_mode<synchronous>, transform_indices = @transform_23, window_bounds = array<i64: 1, 32>}, {pipeline_mode = #tpu.pipeline_mode<synchronous>, transform_indices = @transform_24, window_bounds = array<i64: 1, 32>}, {pipeline_mode = #tpu.pipeline_mode<synchronous>, transform_indices = @transform_25, window_bounds = array<i64: 32, 96>}, {pipeline_mode = #tpu.pipeline_mode<synchronous>, transform_indices = @transform_26, window_bounds = array<i64: 1, 96>}, {pipeline_mode = #tpu.pipeline_mode<synchronous>, transform_indices = @transform_27, window_bounds = array<i64: 32, 32>}, {pipeline_mode = #tpu.pipeline_mode<synchronous>, transform_indices = @transform_28, window_bounds = array<i64: 1, 32>}, {pipeline_mode = #tpu.pipeline_mode<synchronous>, transform_indices = @transform_29, window_bounds = array<i64: 1, 32>}, {pipeline_mode = #tpu.pipeline_mode<synchronous>, transform_indices = @transform_30, window_bounds = array<i64: 1, 32>}, {pipeline_mode = #tpu.pipeline_mode<synchronous>, transform_indices = @transform_31, window_bounds = array<i64: 32, 64>}, {pipeline_mode = #tpu.pipeline_mode<synchronous>, transform_indices = @transform_32, window_bounds = array<i64: 1, 64>}, {pipeline_mode = #tpu.pipeline_mode<synchronous>, transform_indices = @transform_33, window_bounds = array<i64: 64, 32>}, {pipeline_mode = #tpu.pipeline_mode<synchronous>, transform_indices = @transform_34, window_bounds = array<i64: 1, 32>}, {pipeline_mode = #tpu.pipeline_mode<synchronous>, transform_indices = @transform_35, window_bounds = array<i64: 1, 32>}, {pipeline_mode = #tpu.pipeline_mode<synchronous>, transform_indices = @transform_36, window_bounds = array<i64: 1, 32>}, {pipeline_mode = #tpu.pipeline_mode<synchronous>, transform_indices = @transform_37, window_bounds = array<i64: 32, 8>}, {pipeline_mode = #tpu.pipeline_mode<synchronous>, transform_indices = @transform_38, window_bounds = array<i64: 1, 8>}, {transform_indices = @transform_39, window_bounds = array<i64: 16, 8>}]} {
    %c0 = arith.constant 0 : index
    %c0_0 = arith.constant 0 : index
    %0 = vector.load %arg1[%c0, %c0_0] : memref<16x8xf32, #tpu.memory_space<vmem>>, vector<16x8xf32>
    %c0_1 = arith.constant 0 : index
    %c0_2 = arith.constant 0 : index
    %1 = vector.load %arg4[%c0_1, %c0_2] : memref<4x16xf32, #tpu.memory_space<vmem>>, vector<4x16xf32>
    %c0_3 = arith.constant 0 : index
    %c0_4 = arith.constant 0 : index
    %2 = vector.load %arg5[%c0_3, %c0_4] : memref<1x16xf32, #tpu.memory_space<vmem>>, vector<1x16xf32>
    %3 = vector.extract_strided_slice %0 {offsets = [0, 0], sizes = [16, 4], strides = [1, 1]} : vector<16x8xf32> to vector<16x4xf32>
    %cst = arith.constant dense<0.000000e+00> : vector<16x16xf32>
    %4 = tpu.matmul %3, %1, %cst {dimension_numbers = #tpu.dot_dimension_numbers<[1], [0], [0], [1], [0, 0, 1, 1], [], []>} : vector<16x4xf32>, vector<4x16xf32>, vector<16x16xf32> -> vector<16x16xf32>
    %5 = vector.broadcast %2 : vector<1x16xf32> to vector<16x16xf32>
    %6 = arith.addf %4, %5 : vector<16x16xf32>
    %7 = arith.mulf %6, %6 : vector<16x16xf32>
    %8 = arith.mulf %6, %7 : vector<16x16xf32>
    %cst_5 = arith.constant 4.471500e-02 : f32
    %9 = vector.broadcast %cst_5 : f32 to vector<16x16xf32>
    %10 = arith.mulf %9, %8 : vector<16x16xf32>
    %11 = arith.addf %6, %10 : vector<16x16xf32>
    %cst_6 = arith.constant 0.797884583 : f32
    %12 = vector.broadcast %cst_6 : f32 to vector<16x16xf32>
    %13 = arith.mulf %12, %11 : vector<16x16xf32>
    %14 = math.tanh %13 : vector<16x16xf32>
    %cst_7 = arith.constant 1.000000e+00 : f32
    %15 = vector.broadcast %cst_7 : f32 to vector<16x16xf32>
    %16 = arith.addf %15, %14 : vector<16x16xf32>
    %cst_8 = arith.constant 5.000000e-01 : f32
    %17 = vector.broadcast %cst_8 : f32 to vector<16x16xf32>
    %18 = arith.mulf %17, %16 : vector<16x16xf32>
    %19 = arith.mulf %6, %18 : vector<16x16xf32>
    %20 = vector.extract_strided_slice %0 {offsets = [0, 4], sizes = [16, 4], strides = [1, 1]} : vector<16x8xf32> to vector<16x4xf32>
    %cst_9 = arith.constant dense<0.000000e+00> : vector<16x16xf32>
    %21 = tpu.matmul %20, %1, %cst_9 {dimension_numbers = #tpu.dot_dimension_numbers<[1], [0], [0], [1], [0, 0, 1, 1], [], []>} : vector<16x4xf32>, vector<4x16xf32>, vector<16x16xf32> -> vector<16x16xf32>
    %22 = vector.broadcast %2 : vector<1x16xf32> to vector<16x16xf32>
    %23 = arith.addf %21, %22 : vector<16x16xf32>
    %24 = arith.mulf %23, %23 : vector<16x16xf32>
    %25 = arith.mulf %23, %24 : vector<16x16xf32>
    %cst_10 = arith.constant 4.471500e-02 : f32
    %26 = vector.broadcast %cst_10 : f32 to vector<16x16xf32>
    %27 = arith.mulf %26, %25 : vector<16x16xf32>
    %28 = arith.addf %23, %27 : vector<16x16xf32>
    %cst_11 = arith.constant 0.797884583 : f32
    %29 = vector.broadcast %cst_11 : f32 to vector<16x16xf32>
    %30 = arith.mulf %29, %28 : vector<16x16xf32>
    %31 = math.tanh %30 : vector<16x16xf32>
    %cst_12 = arith.constant 1.000000e+00 : f32
    %32 = vector.broadcast %cst_12 : f32 to vector<16x16xf32>
    %33 = arith.addf %32, %31 : vector<16x16xf32>
    %cst_13 = arith.constant 5.000000e-01 : f32
    %34 = vector.broadcast %cst_13 : f32 to vector<16x16xf32>
    %35 = arith.mulf %34, %33 : vector<16x16xf32>
    %36 = arith.mulf %23, %35 : vector<16x16xf32>
    %37 = tpu.concatenate %19, %36 in 1 : vector<16x16xf32>, vector<16x16xf32> -> vector<16x32xf32>
    %c0_14 = arith.constant 0 : index
    %c0_15 = arith.constant 0 : index
    %38 = vector.load %arg6[%c0_14, %c0_15] : memref<32x16xf32, #tpu.memory_space<vmem>>, vector<32x16xf32>
    %cst_16 = arith.constant dense<0.000000e+00> : vector<16x16xf32>
    %39 = tpu.matmul %37, %38, %cst_16 {dimension_numbers = #tpu.dot_dimension_numbers<[1], [0], [0], [1], [0, 0, 1, 1], [], []>} : vector<16x32xf32>, vector<32x16xf32>, vector<16x16xf32> -> vector<16x16xf32>
    %c0_17 = arith.constant 0 : index
    %c0_18 = arith.constant 0 : index
    %40 = vector.load %arg7[%c0_17, %c0_18] : memref<1x16xf32, #tpu.memory_space<vmem>>, vector<1x16xf32>
    %41 = vector.broadcast %40 : vector<1x16xf32> to vector<16x16xf32>
    %42 = arith.addf %39, %41 : vector<16x16xf32>
    %43 = arith.mulf %42, %42 : vector<16x16xf32>
    %44 = arith.mulf %42, %43 : vector<16x16xf32>
    %cst_19 = arith.constant 4.471500e-02 : f32
    %45 = vector.broadcast %cst_19 : f32 to vector<16x16xf32>
    %46 = arith.mulf %45, %44 : vector<16x16xf32>
    %47 = arith.addf %42, %46 : vector<16x16xf32>
    %cst_20 = arith.constant 0.797884583 : f32
    %48 = vector.broadcast %cst_20 : f32 to vector<16x16xf32>
    %49 = arith.mulf %48, %47 : vector<16x16xf32>
    %50 = math.tanh %49 : vector<16x16xf32>
    %cst_21 = arith.constant 1.000000e+00 : f32
    %51 = vector.broadcast %cst_21 : f32 to vector<16x16xf32>
    %52 = arith.addf %51, %50 : vector<16x16xf32>
    %cst_22 = arith.constant 5.000000e-01 : f32
    %53 = vector.broadcast %cst_22 : f32 to vector<16x16xf32>
    %54 = arith.mulf %53, %52 : vector<16x16xf32>
    %55 = arith.mulf %42, %54 : vector<16x16xf32>
    %c0_23 = arith.constant 0 : index
    %c0_24 = arith.constant 0 : index
    %56 = vector.load %arg8[%c0_23, %c0_24] : memref<1x16xf32, #tpu.memory_space<vmem>>, vector<1x16xf32>
    %c0_25 = arith.constant 0 : index
    %c0_26 = arith.constant 0 : index
    %57 = vector.load %arg9[%c0_25, %c0_26] : memref<1x16xf32, #tpu.memory_space<vmem>>, vector<1x16xf32>
    %cst_27 = arith.constant dense<0.000000e+00> : vector<16xf32>
    %58 = vector.multi_reduction <add>, %55, %cst_27 [1] : vector<16x16xf32> to vector<16xf32>
    %59 = vector.shape_cast %58 : vector<16xf32> to vector<16x1xf32>
    %cst_28 = arith.constant 1.600000e+01 : f32
    %60 = vector.broadcast %cst_28 : f32 to vector<16x1xf32>
    %61 = arith.divf %59, %60 : vector<16x1xf32>
    %62 = vector.broadcast %61 : vector<16x1xf32> to vector<16x16xf32>
    %63 = arith.subf %55, %62 : vector<16x16xf32>
    %64 = arith.mulf %63, %63 : vector<16x16xf32>
    %cst_29 = arith.constant dense<0.000000e+00> : vector<16xf32>
    %65 = vector.multi_reduction <add>, %64, %cst_29 [1] : vector<16x16xf32> to vector<16xf32>
    %66 = vector.shape_cast %65 : vector<16xf32> to vector<16x1xf32>
    %cst_30 = arith.constant 1.600000e+01 : f32
    %67 = vector.broadcast %cst_30 : f32 to vector<16x1xf32>
    %68 = arith.divf %66, %67 : vector<16x1xf32>
    %69 = vector.broadcast %61 : vector<16x1xf32> to vector<16x16xf32>
    %70 = arith.subf %55, %69 : vector<16x16xf32>
    %cst_31 = arith.constant 9.99999974E-6 : f32
    %71 = vector.broadcast %cst_31 : f32 to vector<16x1xf32>
    %72 = arith.addf %68, %71 : vector<16x1xf32>
    %73 = math.rsqrt %72 : vector<16x1xf32>
    %74 = vector.broadcast %73 : vector<16x1xf32> to vector<16x16xf32>
    %75 = arith.mulf %70, %74 : vector<16x16xf32>
    %76 = vector.broadcast %56 : vector<1x16xf32> to vector<16x16xf32>
    %77 = arith.mulf %75, %76 : vector<16x16xf32>
    %78 = vector.broadcast %57 : vector<1x16xf32> to vector<16x16xf32>
    %79 = arith.addf %77, %78 : vector<16x16xf32>
    %c0_32 = arith.constant 0 : index
    %c0_33 = arith.constant 0 : index
    %80 = vector.load %arg10[%c0_32, %c0_33] : memref<16x32xf32, #tpu.memory_space<vmem>>, vector<16x32xf32>
    %cst_34 = arith.constant dense<0.000000e+00> : vector<16x32xf32>
    %81 = tpu.matmul %79, %80, %cst_34 {dimension_numbers = #tpu.dot_dimension_numbers<[1], [0], [0], [1], [0, 0, 1, 1], [], []>} : vector<16x16xf32>, vector<16x32xf32>, vector<16x32xf32> -> vector<16x32xf32>
    %c0_35 = arith.constant 0 : index
    %c0_36 = arith.constant 0 : index
    %82 = vector.load %arg11[%c0_35, %c0_36] : memref<1x32xf32, #tpu.memory_space<vmem>>, vector<1x32xf32>
    %83 = vector.broadcast %82 : vector<1x32xf32> to vector<16x32xf32>
    %84 = arith.addf %81, %83 : vector<16x32xf32>
    %c0_37 = arith.constant 0 : index
    %c0_38 = arith.constant 0 : index
    %85 = vector.load %arg3[%c0_37, %c0_38] : memref<16x1xf32, #tpu.memory_space<vmem>>, vector<16x1xf32>
    %86 = vector.broadcast %85 : vector<16x1xf32> to vector<16x32xf32>
    %87 = arith.mulf %84, %86 : vector<16x32xf32>
    %c0_39 = arith.constant 0 : index
    %c0_40 = arith.constant 0 : index
    %88 = vector.load %arg12[%c0_39, %c0_40] : memref<1x32xf32, #tpu.memory_space<vmem>>, vector<1x32xf32>
    %c0_41 = arith.constant 0 : index
    %c0_42 = arith.constant 0 : index
    %89 = vector.load %arg13[%c0_41, %c0_42] : memref<1x32xf32, #tpu.memory_space<vmem>>, vector<1x32xf32>
    %cst_43 = arith.constant dense<0.000000e+00> : vector<16xf32>
    %90 = vector.multi_reduction <add>, %87, %cst_43 [1] : vector<16x32xf32> to vector<16xf32>
    %91 = vector.shape_cast %90 : vector<16xf32> to vector<16x1xf32>
    %cst_44 = arith.constant 3.200000e+01 : f32
    %92 = vector.broadcast %cst_44 : f32 to vector<16x1xf32>
    %93 = arith.divf %91, %92 : vector<16x1xf32>
    %94 = vector.broadcast %93 : vector<16x1xf32> to vector<16x32xf32>
    %95 = arith.subf %87, %94 : vector<16x32xf32>
    %96 = arith.mulf %95, %95 : vector<16x32xf32>
    %cst_45 = arith.constant dense<0.000000e+00> : vector<16xf32>
    %97 = vector.multi_reduction <add>, %96, %cst_45 [1] : vector<16x32xf32> to vector<16xf32>
    %98 = vector.shape_cast %97 : vector<16xf32> to vector<16x1xf32>
    %cst_46 = arith.constant 3.200000e+01 : f32
    %99 = vector.broadcast %cst_46 : f32 to vector<16x1xf32>
    %100 = arith.divf %98, %99 : vector<16x1xf32>
    %101 = vector.broadcast %93 : vector<16x1xf32> to vector<16x32xf32>
    %102 = arith.subf %87, %101 : vector<16x32xf32>
    %cst_47 = arith.constant 9.99999974E-6 : f32
    %103 = vector.broadcast %cst_47 : f32 to vector<16x1xf32>
    %104 = arith.addf %100, %103 : vector<16x1xf32>
    %105 = math.rsqrt %104 : vector<16x1xf32>
    %106 = vector.broadcast %105 : vector<16x1xf32> to vector<16x32xf32>
    %107 = arith.mulf %102, %106 : vector<16x32xf32>
    %108 = vector.broadcast %88 : vector<1x32xf32> to vector<16x32xf32>
    %109 = arith.mulf %107, %108 : vector<16x32xf32>
    %110 = vector.broadcast %89 : vector<1x32xf32> to vector<16x32xf32>
    %111 = arith.addf %109, %110 : vector<16x32xf32>
    %c0_48 = arith.constant 0 : index
    %c0_49 = arith.constant 0 : index
    %c0_50 = arith.constant 0 : index
    %112 = vector.load %arg2[%c0_48, %c0_49, %c0_50] : memref<1x1x16xf32, #tpu.memory_space<vmem>>, vector<1x1x16xf32>
    %113 = vector.shape_cast %112 : vector<1x1x16xf32> to vector<1x16xf32>
    %c0_51 = arith.constant 0 : index
    %c0_52 = arith.constant 0 : index
    %114 = vector.load %arg14[%c0_51, %c0_52] : memref<32x96xf32, #tpu.memory_space<vmem>>, vector<32x96xf32>
    %cst_53 = arith.constant dense<0.000000e+00> : vector<16x96xf32>
    %115 = tpu.matmul %111, %114, %cst_53 {dimension_numbers = #tpu.dot_dimension_numbers<[1], [0], [0], [1], [0, 0, 1, 1], [], []>} : vector<16x32xf32>, vector<32x96xf32>, vector<16x96xf32> -> vector<16x96xf32>
    %c0_54 = arith.constant 0 : index
    %c0_55 = arith.constant 0 : index
    %116 = vector.load %arg15[%c0_54, %c0_55] : memref<1x96xf32, #tpu.memory_space<vmem>>, vector<1x96xf32>
    %117 = vector.broadcast %116 : vector<1x96xf32> to vector<16x96xf32>
    %118 = arith.addf %115, %117 : vector<16x96xf32>
    %119 = vector.extract_strided_slice %118 {offsets = [0, 0], sizes = [16, 32], strides = [1, 1]} : vector<16x96xf32> to vector<16x32xf32>
    %cst_56 = arith.constant 0.353553385 : f32
    %120 = vector.broadcast %cst_56 : f32 to vector<16x32xf32>
    %121 = arith.mulf %119, %120 : vector<16x32xf32>
    %122 = vector.extract_strided_slice %118 {offsets = [0, 32], sizes = [16, 32], strides = [1, 1]} : vector<16x96xf32> to vector<16x32xf32>
    %123 = vector.extract_strided_slice %118 {offsets = [0, 64], sizes = [16, 32], strides = [1, 1]} : vector<16x96xf32> to vector<16x32xf32>
    %124 = vector.extract_strided_slice %121 {offsets = [0, 0], sizes = [16, 8], strides = [1, 1]} : vector<16x32xf32> to vector<16x8xf32>
    %125 = vector.extract_strided_slice %122 {offsets = [0, 0], sizes = [16, 8], strides = [1, 1]} : vector<16x32xf32> to vector<16x8xf32>
    %126 = tpu.transpose %125, [1, 0] : vector<16x8xf32> -> vector<8x16xf32>
    %cst_57 = arith.constant dense<0.000000e+00> : vector<16x16xf32>
    %127 = tpu.matmul %124, %126, %cst_57 {dimension_numbers = #tpu.dot_dimension_numbers<[1], [0], [0], [1], [0, 0, 1, 1], [], []>} : vector<16x8xf32>, vector<8x16xf32>, vector<16x16xf32> -> vector<16x16xf32>
    %128 = vector.broadcast %113 : vector<1x16xf32> to vector<16x16xf32>
    %129 = arith.addf %127, %128 : vector<16x16xf32>
    %cst_58 = arith.constant dense<0xFF800000> : vector<16xf32>
    %130 = vector.multi_reduction <maximumf>, %129, %cst_58 [1] : vector<16x16xf32> to vector<16xf32>
    %131 = vector.shape_cast %130 : vector<16xf32> to vector<16x1xf32>
    %132 = vector.broadcast %131 : vector<16x1xf32> to vector<16x16xf32>
    %133 = arith.subf %129, %132 : vector<16x16xf32>
    %134 = math.exp %133 : vector<16x16xf32>
    %cst_59 = arith.constant dense<0.000000e+00> : vector<16xf32>
    %135 = vector.multi_reduction <add>, %134, %cst_59 [1] : vector<16x16xf32> to vector<16xf32>
    %136 = vector.shape_cast %135 : vector<16xf32> to vector<16x1xf32>
    %137 = vector.extract_strided_slice %123 {offsets = [0, 0], sizes = [16, 8], strides = [1, 1]} : vector<16x32xf32> to vector<16x8xf32>
    %cst_60 = arith.constant dense<0.000000e+00> : vector<16x8xf32>
    %138 = tpu.matmul %134, %137, %cst_60 {dimension_numbers = #tpu.dot_dimension_numbers<[1], [0], [0], [1], [0, 0, 1, 1], [], []>} : vector<16x16xf32>, vector<16x8xf32>, vector<16x8xf32> -> vector<16x8xf32>
    %139 = tpu.reciprocal %136 {approx = true} : vector<16x1xf32> -> vector<16x1xf32>
    %140 = vector.broadcast %139 : vector<16x1xf32> to vector<16x8xf32>
    %141 = arith.mulf %138, %140 : vector<16x8xf32>
    %142 = vector.extract_strided_slice %121 {offsets = [0, 8], sizes = [16, 8], strides = [1, 1]} : vector<16x32xf32> to vector<16x8xf32>
    %143 = vector.extract_strided_slice %122 {offsets = [0, 8], sizes = [16, 8], strides = [1, 1]} : vector<16x32xf32> to vector<16x8xf32>
    %144 = tpu.transpose %143, [1, 0] : vector<16x8xf32> -> vector<8x16xf32>
    %cst_61 = arith.constant dense<0.000000e+00> : vector<16x16xf32>
    %145 = tpu.matmul %142, %144, %cst_61 {dimension_numbers = #tpu.dot_dimension_numbers<[1], [0], [0], [1], [0, 0, 1, 1], [], []>} : vector<16x8xf32>, vector<8x16xf32>, vector<16x16xf32> -> vector<16x16xf32>
    %146 = vector.broadcast %113 : vector<1x16xf32> to vector<16x16xf32>
    %147 = arith.addf %145, %146 : vector<16x16xf32>
    %cst_62 = arith.constant dense<0xFF800000> : vector<16xf32>
    %148 = vector.multi_reduction <maximumf>, %147, %cst_62 [1] : vector<16x16xf32> to vector<16xf32>
    %149 = vector.shape_cast %148 : vector<16xf32> to vector<16x1xf32>
    %150 = vector.broadcast %149 : vector<16x1xf32> to vector<16x16xf32>
    %151 = arith.subf %147, %150 : vector<16x16xf32>
    %152 = math.exp %151 : vector<16x16xf32>
    %cst_63 = arith.constant dense<0.000000e+00> : vector<16xf32>
    %153 = vector.multi_reduction <add>, %152, %cst_63 [1] : vector<16x16xf32> to vector<16xf32>
    %154 = vector.shape_cast %153 : vector<16xf32> to vector<16x1xf32>
    %155 = vector.extract_strided_slice %123 {offsets = [0, 8], sizes = [16, 8], strides = [1, 1]} : vector<16x32xf32> to vector<16x8xf32>
    %cst_64 = arith.constant dense<0.000000e+00> : vector<16x8xf32>
    %156 = tpu.matmul %152, %155, %cst_64 {dimension_numbers = #tpu.dot_dimension_numbers<[1], [0], [0], [1], [0, 0, 1, 1], [], []>} : vector<16x16xf32>, vector<16x8xf32>, vector<16x8xf32> -> vector<16x8xf32>
    %157 = tpu.reciprocal %154 {approx = true} : vector<16x1xf32> -> vector<16x1xf32>
    %158 = vector.broadcast %157 : vector<16x1xf32> to vector<16x8xf32>
    %159 = arith.mulf %156, %158 : vector<16x8xf32>
    %160 = vector.extract_strided_slice %121 {offsets = [0, 16], sizes = [16, 8], strides = [1, 1]} : vector<16x32xf32> to vector<16x8xf32>
    %161 = vector.extract_strided_slice %122 {offsets = [0, 16], sizes = [16, 8], strides = [1, 1]} : vector<16x32xf32> to vector<16x8xf32>
    %162 = tpu.transpose %161, [1, 0] : vector<16x8xf32> -> vector<8x16xf32>
    %cst_65 = arith.constant dense<0.000000e+00> : vector<16x16xf32>
    %163 = tpu.matmul %160, %162, %cst_65 {dimension_numbers = #tpu.dot_dimension_numbers<[1], [0], [0], [1], [0, 0, 1, 1], [], []>} : vector<16x8xf32>, vector<8x16xf32>, vector<16x16xf32> -> vector<16x16xf32>
    %164 = vector.broadcast %113 : vector<1x16xf32> to vector<16x16xf32>
    %165 = arith.addf %163, %164 : vector<16x16xf32>
    %cst_66 = arith.constant dense<0xFF800000> : vector<16xf32>
    %166 = vector.multi_reduction <maximumf>, %165, %cst_66 [1] : vector<16x16xf32> to vector<16xf32>
    %167 = vector.shape_cast %166 : vector<16xf32> to vector<16x1xf32>
    %168 = vector.broadcast %167 : vector<16x1xf32> to vector<16x16xf32>
    %169 = arith.subf %165, %168 : vector<16x16xf32>
    %170 = math.exp %169 : vector<16x16xf32>
    %cst_67 = arith.constant dense<0.000000e+00> : vector<16xf32>
    %171 = vector.multi_reduction <add>, %170, %cst_67 [1] : vector<16x16xf32> to vector<16xf32>
    %172 = vector.shape_cast %171 : vector<16xf32> to vector<16x1xf32>
    %173 = vector.extract_strided_slice %123 {offsets = [0, 16], sizes = [16, 8], strides = [1, 1]} : vector<16x32xf32> to vector<16x8xf32>
    %cst_68 = arith.constant dense<0.000000e+00> : vector<16x8xf32>
    %174 = tpu.matmul %170, %173, %cst_68 {dimension_numbers = #tpu.dot_dimension_numbers<[1], [0], [0], [1], [0, 0, 1, 1], [], []>} : vector<16x16xf32>, vector<16x8xf32>, vector<16x8xf32> -> vector<16x8xf32>
    %175 = tpu.reciprocal %172 {approx = true} : vector<16x1xf32> -> vector<16x1xf32>
    %176 = vector.broadcast %175 : vector<16x1xf32> to vector<16x8xf32>
    %177 = arith.mulf %174, %176 : vector<16x8xf32>
    %178 = vector.extract_strided_slice %121 {offsets = [0, 24], sizes = [16, 8], strides = [1, 1]} : vector<16x32xf32> to vector<16x8xf32>
    %179 = vector.extract_strided_slice %122 {offsets = [0, 24], sizes = [16, 8], strides = [1, 1]} : vector<16x32xf32> to vector<16x8xf32>
    %180 = tpu.transpose %179, [1, 0] : vector<16x8xf32> -> vector<8x16xf32>
    %cst_69 = arith.constant dense<0.000000e+00> : vector<16x16xf32>
    %181 = tpu.matmul %178, %180, %cst_69 {dimension_numbers = #tpu.dot_dimension_numbers<[1], [0], [0], [1], [0, 0, 1, 1], [], []>} : vector<16x8xf32>, vector<8x16xf32>, vector<16x16xf32> -> vector<16x16xf32>
    %182 = vector.broadcast %113 : vector<1x16xf32> to vector<16x16xf32>
    %183 = arith.addf %181, %182 : vector<16x16xf32>
    %cst_70 = arith.constant dense<0xFF800000> : vector<16xf32>
    %184 = vector.multi_reduction <maximumf>, %183, %cst_70 [1] : vector<16x16xf32> to vector<16xf32>
    %185 = vector.shape_cast %184 : vector<16xf32> to vector<16x1xf32>
    %186 = vector.broadcast %185 : vector<16x1xf32> to vector<16x16xf32>
    %187 = arith.subf %183, %186 : vector<16x16xf32>
    %188 = math.exp %187 : vector<16x16xf32>
    %cst_71 = arith.constant dense<0.000000e+00> : vector<16xf32>
    %189 = vector.multi_reduction <add>, %188, %cst_71 [1] : vector<16x16xf32> to vector<16xf32>
    %190 = vector.shape_cast %189 : vector<16xf32> to vector<16x1xf32>
    %191 = vector.extract_strided_slice %123 {offsets = [0, 24], sizes = [16, 8], strides = [1, 1]} : vector<16x32xf32> to vector<16x8xf32>
    %cst_72 = arith.constant dense<0.000000e+00> : vector<16x8xf32>
    %192 = tpu.matmul %188, %191, %cst_72 {dimension_numbers = #tpu.dot_dimension_numbers<[1], [0], [0], [1], [0, 0, 1, 1], [], []>} : vector<16x16xf32>, vector<16x8xf32>, vector<16x8xf32> -> vector<16x8xf32>
    %193 = tpu.reciprocal %190 {approx = true} : vector<16x1xf32> -> vector<16x1xf32>
    %194 = vector.broadcast %193 : vector<16x1xf32> to vector<16x8xf32>
    %195 = arith.mulf %192, %194 : vector<16x8xf32>
    %196 = tpu.concatenate %141, %159, %177, %195 in 1 : vector<16x8xf32>, vector<16x8xf32>, vector<16x8xf32>, vector<16x8xf32> -> vector<16x32xf32>
    %c0_73 = arith.constant 0 : index
    %c0_74 = arith.constant 0 : index
    %197 = vector.load %arg16[%c0_73, %c0_74] : memref<32x32xf32, #tpu.memory_space<vmem>>, vector<32x32xf32>
    %cst_75 = arith.constant dense<0.000000e+00> : vector<16x32xf32>
    %198 = tpu.matmul %196, %197, %cst_75 {dimension_numbers = #tpu.dot_dimension_numbers<[1], [0], [0], [1], [0, 0, 1, 1], [], []>} : vector<16x32xf32>, vector<32x32xf32>, vector<16x32xf32> -> vector<16x32xf32>
    %c0_76 = arith.constant 0 : index
    %c0_77 = arith.constant 0 : index
    %199 = vector.load %arg17[%c0_76, %c0_77] : memref<1x32xf32, #tpu.memory_space<vmem>>, vector<1x32xf32>
    %200 = vector.broadcast %199 : vector<1x32xf32> to vector<16x32xf32>
    %201 = arith.addf %198, %200 : vector<16x32xf32>
    %202 = arith.addf %111, %201 : vector<16x32xf32>
    %c0_78 = arith.constant 0 : index
    %c0_79 = arith.constant 0 : index
    %203 = vector.load %arg18[%c0_78, %c0_79] : memref<1x32xf32, #tpu.memory_space<vmem>>, vector<1x32xf32>
    %c0_80 = arith.constant 0 : index
    %c0_81 = arith.constant 0 : index
    %204 = vector.load %arg19[%c0_80, %c0_81] : memref<1x32xf32, #tpu.memory_space<vmem>>, vector<1x32xf32>
    %cst_82 = arith.constant dense<0.000000e+00> : vector<16xf32>
    %205 = vector.multi_reduction <add>, %202, %cst_82 [1] : vector<16x32xf32> to vector<16xf32>
    %206 = vector.shape_cast %205 : vector<16xf32> to vector<16x1xf32>
    %cst_83 = arith.constant 3.200000e+01 : f32
    %207 = vector.broadcast %cst_83 : f32 to vector<16x1xf32>
    %208 = arith.divf %206, %207 : vector<16x1xf32>
    %209 = vector.broadcast %208 : vector<16x1xf32> to vector<16x32xf32>
    %210 = arith.subf %202, %209 : vector<16x32xf32>
    %211 = arith.mulf %210, %210 : vector<16x32xf32>
    %cst_84 = arith.constant dense<0.000000e+00> : vector<16xf32>
    %212 = vector.multi_reduction <add>, %211, %cst_84 [1] : vector<16x32xf32> to vector<16xf32>
    %213 = vector.shape_cast %212 : vector<16xf32> to vector<16x1xf32>
    %cst_85 = arith.constant 3.200000e+01 : f32
    %214 = vector.broadcast %cst_85 : f32 to vector<16x1xf32>
    %215 = arith.divf %213, %214 : vector<16x1xf32>
    %216 = vector.broadcast %208 : vector<16x1xf32> to vector<16x32xf32>
    %217 = arith.subf %202, %216 : vector<16x32xf32>
    %cst_86 = arith.constant 9.99999974E-6 : f32
    %218 = vector.broadcast %cst_86 : f32 to vector<16x1xf32>
    %219 = arith.addf %215, %218 : vector<16x1xf32>
    %220 = math.rsqrt %219 : vector<16x1xf32>
    %221 = vector.broadcast %220 : vector<16x1xf32> to vector<16x32xf32>
    %222 = arith.mulf %217, %221 : vector<16x32xf32>
    %223 = vector.broadcast %203 : vector<1x32xf32> to vector<16x32xf32>
    %224 = arith.mulf %222, %223 : vector<16x32xf32>
    %225 = vector.broadcast %204 : vector<1x32xf32> to vector<16x32xf32>
    %226 = arith.addf %224, %225 : vector<16x32xf32>
    %c0_87 = arith.constant 0 : index
    %c0_88 = arith.constant 0 : index
    %227 = vector.load %arg20[%c0_87, %c0_88] : memref<32x64xf32, #tpu.memory_space<vmem>>, vector<32x64xf32>
    %cst_89 = arith.constant dense<0.000000e+00> : vector<16x64xf32>
    %228 = tpu.matmul %226, %227, %cst_89 {dimension_numbers = #tpu.dot_dimension_numbers<[1], [0], [0], [1], [0, 0, 1, 1], [], []>} : vector<16x32xf32>, vector<32x64xf32>, vector<16x64xf32> -> vector<16x64xf32>
    %c0_90 = arith.constant 0 : index
    %c0_91 = arith.constant 0 : index
    %229 = vector.load %arg21[%c0_90, %c0_91] : memref<1x64xf32, #tpu.memory_space<vmem>>, vector<1x64xf32>
    %230 = vector.broadcast %229 : vector<1x64xf32> to vector<16x64xf32>
    %231 = arith.addf %228, %230 : vector<16x64xf32>
    %232 = arith.mulf %231, %231 : vector<16x64xf32>
    %233 = arith.mulf %231, %232 : vector<16x64xf32>
    %cst_92 = arith.constant 4.471500e-02 : f32
    %234 = vector.broadcast %cst_92 : f32 to vector<16x64xf32>
    %235 = arith.mulf %234, %233 : vector<16x64xf32>
    %236 = arith.addf %231, %235 : vector<16x64xf32>
    %cst_93 = arith.constant 0.797884583 : f32
    %237 = vector.broadcast %cst_93 : f32 to vector<16x64xf32>
    %238 = arith.mulf %237, %236 : vector<16x64xf32>
    %239 = math.tanh %238 : vector<16x64xf32>
    %cst_94 = arith.constant 1.000000e+00 : f32
    %240 = vector.broadcast %cst_94 : f32 to vector<16x64xf32>
    %241 = arith.addf %240, %239 : vector<16x64xf32>
    %cst_95 = arith.constant 5.000000e-01 : f32
    %242 = vector.broadcast %cst_95 : f32 to vector<16x64xf32>
    %243 = arith.mulf %242, %241 : vector<16x64xf32>
    %244 = arith.mulf %231, %243 : vector<16x64xf32>
    %c0_96 = arith.constant 0 : index
    %c0_97 = arith.constant 0 : index
    %245 = vector.load %arg22[%c0_96, %c0_97] : memref<64x32xf32, #tpu.memory_space<vmem>>, vector<64x32xf32>
    %cst_98 = arith.constant dense<0.000000e+00> : vector<16x32xf32>
    %246 = tpu.matmul %244, %245, %cst_98 {dimension_numbers = #tpu.dot_dimension_numbers<[1], [0], [0], [1], [0, 0, 1, 1], [], []>} : vector<16x64xf32>, vector<64x32xf32>, vector<16x32xf32> -> vector<16x32xf32>
    %c0_99 = arith.constant 0 : index
    %c0_100 = arith.constant 0 : index
    %247 = vector.load %arg23[%c0_99, %c0_100] : memref<1x32xf32, #tpu.memory_space<vmem>>, vector<1x32xf32>
    %248 = vector.broadcast %247 : vector<1x32xf32> to vector<16x32xf32>
    %249 = arith.addf %246, %248 : vector<16x32xf32>
    %250 = arith.addf %226, %249 : vector<16x32xf32>
    %c0_101 = arith.constant 0 : index
    %c0_102 = arith.constant 0 : index
    %251 = vector.load %arg24[%c0_101, %c0_102] : memref<1x32xf32, #tpu.memory_space<vmem>>, vector<1x32xf32>
    %c0_103 = arith.constant 0 : index
    %c0_104 = arith.constant 0 : index
    %252 = vector.load %arg25[%c0_103, %c0_104] : memref<1x32xf32, #tpu.memory_space<vmem>>, vector<1x32xf32>
    %cst_105 = arith.constant dense<0.000000e+00> : vector<16xf32>
    %253 = vector.multi_reduction <add>, %250, %cst_105 [1] : vector<16x32xf32> to vector<16xf32>
    %254 = vector.shape_cast %253 : vector<16xf32> to vector<16x1xf32>
    %cst_106 = arith.constant 3.200000e+01 : f32
    %255 = vector.broadcast %cst_106 : f32 to vector<16x1xf32>
    %256 = arith.divf %254, %255 : vector<16x1xf32>
    %257 = vector.broadcast %256 : vector<16x1xf32> to vector<16x32xf32>
    %258 = arith.subf %250, %257 : vector<16x32xf32>
    %259 = arith.mulf %258, %258 : vector<16x32xf32>
    %cst_107 = arith.constant dense<0.000000e+00> : vector<16xf32>
    %260 = vector.multi_reduction <add>, %259, %cst_107 [1] : vector<16x32xf32> to vector<16xf32>
    %261 = vector.shape_cast %260 : vector<16xf32> to vector<16x1xf32>
    %cst_108 = arith.constant 3.200000e+01 : f32
    %262 = vector.broadcast %cst_108 : f32 to vector<16x1xf32>
    %263 = arith.divf %261, %262 : vector<16x1xf32>
    %264 = vector.broadcast %256 : vector<16x1xf32> to vector<16x32xf32>
    %265 = arith.subf %250, %264 : vector<16x32xf32>
    %cst_109 = arith.constant 9.99999974E-6 : f32
    %266 = vector.broadcast %cst_109 : f32 to vector<16x1xf32>
    %267 = arith.addf %263, %266 : vector<16x1xf32>
    %268 = math.rsqrt %267 : vector<16x1xf32>
    %269 = vector.broadcast %268 : vector<16x1xf32> to vector<16x32xf32>
    %270 = arith.mulf %265, %269 : vector<16x32xf32>
    %271 = vector.broadcast %251 : vector<1x32xf32> to vector<16x32xf32>
    %272 = arith.mulf %270, %271 : vector<16x32xf32>
    %273 = vector.broadcast %252 : vector<1x32xf32> to vector<16x32xf32>
    %274 = arith.addf %272, %273 : vector<16x32xf32>
    %c0_110 = arith.constant 0 : index
    %c0_111 = arith.constant 0 : index
    %275 = vector.load %arg26[%c0_110, %c0_111] : memref<32x96xf32, #tpu.memory_space<vmem>>, vector<32x96xf32>
    %cst_112 = arith.constant dense<0.000000e+00> : vector<16x96xf32>
    %276 = tpu.matmul %274, %275, %cst_112 {dimension_numbers = #tpu.dot_dimension_numbers<[1], [0], [0], [1], [0, 0, 1, 1], [], []>} : vector<16x32xf32>, vector<32x96xf32>, vector<16x96xf32> -> vector<16x96xf32>
    %c0_113 = arith.constant 0 : index
    %c0_114 = arith.constant 0 : index
    %277 = vector.load %arg27[%c0_113, %c0_114] : memref<1x96xf32, #tpu.memory_space<vmem>>, vector<1x96xf32>
    %278 = vector.broadcast %277 : vector<1x96xf32> to vector<16x96xf32>
    %279 = arith.addf %276, %278 : vector<16x96xf32>
    %280 = vector.extract_strided_slice %279 {offsets = [0, 0], sizes = [16, 32], strides = [1, 1]} : vector<16x96xf32> to vector<16x32xf32>
    %cst_115 = arith.constant 0.353553385 : f32
    %281 = vector.broadcast %cst_115 : f32 to vector<16x32xf32>
    %282 = arith.mulf %280, %281 : vector<16x32xf32>
    %283 = vector.extract_strided_slice %279 {offsets = [0, 32], sizes = [16, 32], strides = [1, 1]} : vector<16x96xf32> to vector<16x32xf32>
    %284 = vector.extract_strided_slice %279 {offsets = [0, 64], sizes = [16, 32], strides = [1, 1]} : vector<16x96xf32> to vector<16x32xf32>
    %285 = vector.extract_strided_slice %282 {offsets = [0, 0], sizes = [16, 8], strides = [1, 1]} : vector<16x32xf32> to vector<16x8xf32>
    %286 = vector.extract_strided_slice %283 {offsets = [0, 0], sizes = [16, 8], strides = [1, 1]} : vector<16x32xf32> to vector<16x8xf32>
    %287 = tpu.transpose %286, [1, 0] : vector<16x8xf32> -> vector<8x16xf32>
    %cst_116 = arith.constant dense<0.000000e+00> : vector<16x16xf32>
    %288 = tpu.matmul %285, %287, %cst_116 {dimension_numbers = #tpu.dot_dimension_numbers<[1], [0], [0], [1], [0, 0, 1, 1], [], []>} : vector<16x8xf32>, vector<8x16xf32>, vector<16x16xf32> -> vector<16x16xf32>
    %289 = vector.broadcast %113 : vector<1x16xf32> to vector<16x16xf32>
    %290 = arith.addf %288, %289 : vector<16x16xf32>
    %cst_117 = arith.constant dense<0xFF800000> : vector<16xf32>
    %291 = vector.multi_reduction <maximumf>, %290, %cst_117 [1] : vector<16x16xf32> to vector<16xf32>
    %292 = vector.shape_cast %291 : vector<16xf32> to vector<16x1xf32>
    %293 = vector.broadcast %292 : vector<16x1xf32> to vector<16x16xf32>
    %294 = arith.subf %290, %293 : vector<16x16xf32>
    %295 = math.exp %294 : vector<16x16xf32>
    %cst_118 = arith.constant dense<0.000000e+00> : vector<16xf32>
    %296 = vector.multi_reduction <add>, %295, %cst_118 [1] : vector<16x16xf32> to vector<16xf32>
    %297 = vector.shape_cast %296 : vector<16xf32> to vector<16x1xf32>
    %298 = vector.extract_strided_slice %284 {offsets = [0, 0], sizes = [16, 8], strides = [1, 1]} : vector<16x32xf32> to vector<16x8xf32>
    %cst_119 = arith.constant dense<0.000000e+00> : vector<16x8xf32>
    %299 = tpu.matmul %295, %298, %cst_119 {dimension_numbers = #tpu.dot_dimension_numbers<[1], [0], [0], [1], [0, 0, 1, 1], [], []>} : vector<16x16xf32>, vector<16x8xf32>, vector<16x8xf32> -> vector<16x8xf32>
    %300 = tpu.reciprocal %297 {approx = true} : vector<16x1xf32> -> vector<16x1xf32>
    %301 = vector.broadcast %300 : vector<16x1xf32> to vector<16x8xf32>
    %302 = arith.mulf %299, %301 : vector<16x8xf32>
    %303 = vector.extract_strided_slice %282 {offsets = [0, 8], sizes = [16, 8], strides = [1, 1]} : vector<16x32xf32> to vector<16x8xf32>
    %304 = vector.extract_strided_slice %283 {offsets = [0, 8], sizes = [16, 8], strides = [1, 1]} : vector<16x32xf32> to vector<16x8xf32>
    %305 = tpu.transpose %304, [1, 0] : vector<16x8xf32> -> vector<8x16xf32>
    %cst_120 = arith.constant dense<0.000000e+00> : vector<16x16xf32>
    %306 = tpu.matmul %303, %305, %cst_120 {dimension_numbers = #tpu.dot_dimension_numbers<[1], [0], [0], [1], [0, 0, 1, 1], [], []>} : vector<16x8xf32>, vector<8x16xf32>, vector<16x16xf32> -> vector<16x16xf32>
    %307 = vector.broadcast %113 : vector<1x16xf32> to vector<16x16xf32>
    %308 = arith.addf %306, %307 : vector<16x16xf32>
    %cst_121 = arith.constant dense<0xFF800000> : vector<16xf32>
    %309 = vector.multi_reduction <maximumf>, %308, %cst_121 [1] : vector<16x16xf32> to vector<16xf32>
    %310 = vector.shape_cast %309 : vector<16xf32> to vector<16x1xf32>
    %311 = vector.broadcast %310 : vector<16x1xf32> to vector<16x16xf32>
    %312 = arith.subf %308, %311 : vector<16x16xf32>
    %313 = math.exp %312 : vector<16x16xf32>
    %cst_122 = arith.constant dense<0.000000e+00> : vector<16xf32>
    %314 = vector.multi_reduction <add>, %313, %cst_122 [1] : vector<16x16xf32> to vector<16xf32>
    %315 = vector.shape_cast %314 : vector<16xf32> to vector<16x1xf32>
    %316 = vector.extract_strided_slice %284 {offsets = [0, 8], sizes = [16, 8], strides = [1, 1]} : vector<16x32xf32> to vector<16x8xf32>
    %cst_123 = arith.constant dense<0.000000e+00> : vector<16x8xf32>
    %317 = tpu.matmul %313, %316, %cst_123 {dimension_numbers = #tpu.dot_dimension_numbers<[1], [0], [0], [1], [0, 0, 1, 1], [], []>} : vector<16x16xf32>, vector<16x8xf32>, vector<16x8xf32> -> vector<16x8xf32>
    %318 = tpu.reciprocal %315 {approx = true} : vector<16x1xf32> -> vector<16x1xf32>
    %319 = vector.broadcast %318 : vector<16x1xf32> to vector<16x8xf32>
    %320 = arith.mulf %317, %319 : vector<16x8xf32>
    %321 = vector.extract_strided_slice %282 {offsets = [0, 16], sizes = [16, 8], strides = [1, 1]} : vector<16x32xf32> to vector<16x8xf32>
    %322 = vector.extract_strided_slice %283 {offsets = [0, 16], sizes = [16, 8], strides = [1, 1]} : vector<16x32xf32> to vector<16x8xf32>
    %323 = tpu.transpose %322, [1, 0] : vector<16x8xf32> -> vector<8x16xf32>
    %cst_124 = arith.constant dense<0.000000e+00> : vector<16x16xf32>
    %324 = tpu.matmul %321, %323, %cst_124 {dimension_numbers = #tpu.dot_dimension_numbers<[1], [0], [0], [1], [0, 0, 1, 1], [], []>} : vector<16x8xf32>, vector<8x16xf32>, vector<16x16xf32> -> vector<16x16xf32>
    %325 = vector.broadcast %113 : vector<1x16xf32> to vector<16x16xf32>
    %326 = arith.addf %324, %325 : vector<16x16xf32>
    %cst_125 = arith.constant dense<0xFF800000> : vector<16xf32>
    %327 = vector.multi_reduction <maximumf>, %326, %cst_125 [1] : vector<16x16xf32> to vector<16xf32>
    %328 = vector.shape_cast %327 : vector<16xf32> to vector<16x1xf32>
    %329 = vector.broadcast %328 : vector<16x1xf32> to vector<16x16xf32>
    %330 = arith.subf %326, %329 : vector<16x16xf32>
    %331 = math.exp %330 : vector<16x16xf32>
    %cst_126 = arith.constant dense<0.000000e+00> : vector<16xf32>
    %332 = vector.multi_reduction <add>, %331, %cst_126 [1] : vector<16x16xf32> to vector<16xf32>
    %333 = vector.shape_cast %332 : vector<16xf32> to vector<16x1xf32>
    %334 = vector.extract_strided_slice %284 {offsets = [0, 16], sizes = [16, 8], strides = [1, 1]} : vector<16x32xf32> to vector<16x8xf32>
    %cst_127 = arith.constant dense<0.000000e+00> : vector<16x8xf32>
    %335 = tpu.matmul %331, %334, %cst_127 {dimension_numbers = #tpu.dot_dimension_numbers<[1], [0], [0], [1], [0, 0, 1, 1], [], []>} : vector<16x16xf32>, vector<16x8xf32>, vector<16x8xf32> -> vector<16x8xf32>
    %336 = tpu.reciprocal %333 {approx = true} : vector<16x1xf32> -> vector<16x1xf32>
    %337 = vector.broadcast %336 : vector<16x1xf32> to vector<16x8xf32>
    %338 = arith.mulf %335, %337 : vector<16x8xf32>
    %339 = vector.extract_strided_slice %282 {offsets = [0, 24], sizes = [16, 8], strides = [1, 1]} : vector<16x32xf32> to vector<16x8xf32>
    %340 = vector.extract_strided_slice %283 {offsets = [0, 24], sizes = [16, 8], strides = [1, 1]} : vector<16x32xf32> to vector<16x8xf32>
    %341 = tpu.transpose %340, [1, 0] : vector<16x8xf32> -> vector<8x16xf32>
    %cst_128 = arith.constant dense<0.000000e+00> : vector<16x16xf32>
    %342 = tpu.matmul %339, %341, %cst_128 {dimension_numbers = #tpu.dot_dimension_numbers<[1], [0], [0], [1], [0, 0, 1, 1], [], []>} : vector<16x8xf32>, vector<8x16xf32>, vector<16x16xf32> -> vector<16x16xf32>
    %343 = vector.broadcast %113 : vector<1x16xf32> to vector<16x16xf32>
    %344 = arith.addf %342, %343 : vector<16x16xf32>
    %cst_129 = arith.constant dense<0xFF800000> : vector<16xf32>
    %345 = vector.multi_reduction <maximumf>, %344, %cst_129 [1] : vector<16x16xf32> to vector<16xf32>
    %346 = vector.shape_cast %345 : vector<16xf32> to vector<16x1xf32>
    %347 = vector.broadcast %346 : vector<16x1xf32> to vector<16x16xf32>
    %348 = arith.subf %344, %347 : vector<16x16xf32>
    %349 = math.exp %348 : vector<16x16xf32>
    %cst_130 = arith.constant dense<0.000000e+00> : vector<16xf32>
    %350 = vector.multi_reduction <add>, %349, %cst_130 [1] : vector<16x16xf32> to vector<16xf32>
    %351 = vector.shape_cast %350 : vector<16xf32> to vector<16x1xf32>
    %352 = vector.extract_strided_slice %284 {offsets = [0, 24], sizes = [16, 8], strides = [1, 1]} : vector<16x32xf32> to vector<16x8xf32>
    %cst_131 = arith.constant dense<0.000000e+00> : vector<16x8xf32>
    %353 = tpu.matmul %349, %352, %cst_131 {dimension_numbers = #tpu.dot_dimension_numbers<[1], [0], [0], [1], [0, 0, 1, 1], [], []>} : vector<16x16xf32>, vector<16x8xf32>, vector<16x8xf32> -> vector<16x8xf32>
    %354 = tpu.reciprocal %351 {approx = true} : vector<16x1xf32> -> vector<16x1xf32>
    %355 = vector.broadcast %354 : vector<16x1xf32> to vector<16x8xf32>
    %356 = arith.mulf %353, %355 : vector<16x8xf32>
    %357 = tpu.concatenate %302, %320, %338, %356 in 1 : vector<16x8xf32>, vector<16x8xf32>, vector<16x8xf32>, vector<16x8xf32> -> vector<16x32xf32>
    %c0_132 = arith.constant 0 : index
    %c0_133 = arith.constant 0 : index
    %358 = vector.load %arg28[%c0_132, %c0_133] : memref<32x32xf32, #tpu.memory_space<vmem>>, vector<32x32xf32>
    %cst_134 = arith.constant dense<0.000000e+00> : vector<16x32xf32>
    %359 = tpu.matmul %357, %358, %cst_134 {dimension_numbers = #tpu.dot_dimension_numbers<[1], [0], [0], [1], [0, 0, 1, 1], [], []>} : vector<16x32xf32>, vector<32x32xf32>, vector<16x32xf32> -> vector<16x32xf32>
    %c0_135 = arith.constant 0 : index
    %c0_136 = arith.constant 0 : index
    %360 = vector.load %arg29[%c0_135, %c0_136] : memref<1x32xf32, #tpu.memory_space<vmem>>, vector<1x32xf32>
    %361 = vector.broadcast %360 : vector<1x32xf32> to vector<16x32xf32>
    %362 = arith.addf %359, %361 : vector<16x32xf32>
    %363 = arith.addf %274, %362 : vector<16x32xf32>
    %c0_137 = arith.constant 0 : index
    %c0_138 = arith.constant 0 : index
    %364 = vector.load %arg30[%c0_137, %c0_138] : memref<1x32xf32, #tpu.memory_space<vmem>>, vector<1x32xf32>
    %c0_139 = arith.constant 0 : index
    %c0_140 = arith.constant 0 : index
    %365 = vector.load %arg31[%c0_139, %c0_140] : memref<1x32xf32, #tpu.memory_space<vmem>>, vector<1x32xf32>
    %cst_141 = arith.constant dense<0.000000e+00> : vector<16xf32>
    %366 = vector.multi_reduction <add>, %363, %cst_141 [1] : vector<16x32xf32> to vector<16xf32>
    %367 = vector.shape_cast %366 : vector<16xf32> to vector<16x1xf32>
    %cst_142 = arith.constant 3.200000e+01 : f32
    %368 = vector.broadcast %cst_142 : f32 to vector<16x1xf32>
    %369 = arith.divf %367, %368 : vector<16x1xf32>
    %370 = vector.broadcast %369 : vector<16x1xf32> to vector<16x32xf32>
    %371 = arith.subf %363, %370 : vector<16x32xf32>
    %372 = arith.mulf %371, %371 : vector<16x32xf32>
    %cst_143 = arith.constant dense<0.000000e+00> : vector<16xf32>
    %373 = vector.multi_reduction <add>, %372, %cst_143 [1] : vector<16x32xf32> to vector<16xf32>
    %374 = vector.shape_cast %373 : vector<16xf32> to vector<16x1xf32>
    %cst_144 = arith.constant 3.200000e+01 : f32
    %375 = vector.broadcast %cst_144 : f32 to vector<16x1xf32>
    %376 = arith.divf %374, %375 : vector<16x1xf32>
    %377 = vector.broadcast %369 : vector<16x1xf32> to vector<16x32xf32>
    %378 = arith.subf %363, %377 : vector<16x32xf32>
    %cst_145 = arith.constant 9.99999974E-6 : f32
    %379 = vector.broadcast %cst_145 : f32 to vector<16x1xf32>
    %380 = arith.addf %376, %379 : vector<16x1xf32>
    %381 = math.rsqrt %380 : vector<16x1xf32>
    %382 = vector.broadcast %381 : vector<16x1xf32> to vector<16x32xf32>
    %383 = arith.mulf %378, %382 : vector<16x32xf32>
    %384 = vector.broadcast %364 : vector<1x32xf32> to vector<16x32xf32>
    %385 = arith.mulf %383, %384 : vector<16x32xf32>
    %386 = vector.broadcast %365 : vector<1x32xf32> to vector<16x32xf32>
    %387 = arith.addf %385, %386 : vector<16x32xf32>
    %c0_146 = arith.constant 0 : index
    %c0_147 = arith.constant 0 : index
    %388 = vector.load %arg32[%c0_146, %c0_147] : memref<32x64xf32, #tpu.memory_space<vmem>>, vector<32x64xf32>
    %cst_148 = arith.constant dense<0.000000e+00> : vector<16x64xf32>
    %389 = tpu.matmul %387, %388, %cst_148 {dimension_numbers = #tpu.dot_dimension_numbers<[1], [0], [0], [1], [0, 0, 1, 1], [], []>} : vector<16x32xf32>, vector<32x64xf32>, vector<16x64xf32> -> vector<16x64xf32>
    %c0_149 = arith.constant 0 : index
    %c0_150 = arith.constant 0 : index
    %390 = vector.load %arg33[%c0_149, %c0_150] : memref<1x64xf32, #tpu.memory_space<vmem>>, vector<1x64xf32>
    %391 = vector.broadcast %390 : vector<1x64xf32> to vector<16x64xf32>
    %392 = arith.addf %389, %391 : vector<16x64xf32>
    %393 = arith.mulf %392, %392 : vector<16x64xf32>
    %394 = arith.mulf %392, %393 : vector<16x64xf32>
    %cst_151 = arith.constant 4.471500e-02 : f32
    %395 = vector.broadcast %cst_151 : f32 to vector<16x64xf32>
    %396 = arith.mulf %395, %394 : vector<16x64xf32>
    %397 = arith.addf %392, %396 : vector<16x64xf32>
    %cst_152 = arith.constant 0.797884583 : f32
    %398 = vector.broadcast %cst_152 : f32 to vector<16x64xf32>
    %399 = arith.mulf %398, %397 : vector<16x64xf32>
    %400 = math.tanh %399 : vector<16x64xf32>
    %cst_153 = arith.constant 1.000000e+00 : f32
    %401 = vector.broadcast %cst_153 : f32 to vector<16x64xf32>
    %402 = arith.addf %401, %400 : vector<16x64xf32>
    %cst_154 = arith.constant 5.000000e-01 : f32
    %403 = vector.broadcast %cst_154 : f32 to vector<16x64xf32>
    %404 = arith.mulf %403, %402 : vector<16x64xf32>
    %405 = arith.mulf %392, %404 : vector<16x64xf32>
    %c0_155 = arith.constant 0 : index
    %c0_156 = arith.constant 0 : index
    %406 = vector.load %arg34[%c0_155, %c0_156] : memref<64x32xf32, #tpu.memory_space<vmem>>, vector<64x32xf32>
    %cst_157 = arith.constant dense<0.000000e+00> : vector<16x32xf32>
    %407 = tpu.matmul %405, %406, %cst_157 {dimension_numbers = #tpu.dot_dimension_numbers<[1], [0], [0], [1], [0, 0, 1, 1], [], []>} : vector<16x64xf32>, vector<64x32xf32>, vector<16x32xf32> -> vector<16x32xf32>
    %c0_158 = arith.constant 0 : index
    %c0_159 = arith.constant 0 : index
    %408 = vector.load %arg35[%c0_158, %c0_159] : memref<1x32xf32, #tpu.memory_space<vmem>>, vector<1x32xf32>
    %409 = vector.broadcast %408 : vector<1x32xf32> to vector<16x32xf32>
    %410 = arith.addf %407, %409 : vector<16x32xf32>
    %411 = arith.addf %387, %410 : vector<16x32xf32>
    %c0_160 = arith.constant 0 : index
    %c0_161 = arith.constant 0 : index
    %412 = vector.load %arg36[%c0_160, %c0_161] : memref<1x32xf32, #tpu.memory_space<vmem>>, vector<1x32xf32>
    %c0_162 = arith.constant 0 : index
    %c0_163 = arith.constant 0 : index
    %413 = vector.load %arg37[%c0_162, %c0_163] : memref<1x32xf32, #tpu.memory_space<vmem>>, vector<1x32xf32>
    %cst_164 = arith.constant dense<0.000000e+00> : vector<16xf32>
    %414 = vector.multi_reduction <add>, %411, %cst_164 [1] : vector<16x32xf32> to vector<16xf32>
    %415 = vector.shape_cast %414 : vector<16xf32> to vector<16x1xf32>
    %cst_165 = arith.constant 3.200000e+01 : f32
    %416 = vector.broadcast %cst_165 : f32 to vector<16x1xf32>
    %417 = arith.divf %415, %416 : vector<16x1xf32>
    %418 = vector.broadcast %417 : vector<16x1xf32> to vector<16x32xf32>
    %419 = arith.subf %411, %418 : vector<16x32xf32>
    %420 = arith.mulf %419, %419 : vector<16x32xf32>
    %cst_166 = arith.constant dense<0.000000e+00> : vector<16xf32>
    %421 = vector.multi_reduction <add>, %420, %cst_166 [1] : vector<16x32xf32> to vector<16xf32>
    %422 = vector.shape_cast %421 : vector<16xf32> to vector<16x1xf32>
    %cst_167 = arith.constant 3.200000e+01 : f32
    %423 = vector.broadcast %cst_167 : f32 to vector<16x1xf32>
    %424 = arith.divf %422, %423 : vector<16x1xf32>
    %425 = vector.broadcast %417 : vector<16x1xf32> to vector<16x32xf32>
    %426 = arith.subf %411, %425 : vector<16x32xf32>
    %cst_168 = arith.constant 9.99999974E-6 : f32
    %427 = vector.broadcast %cst_168 : f32 to vector<16x1xf32>
    %428 = arith.addf %424, %427 : vector<16x1xf32>
    %429 = math.rsqrt %428 : vector<16x1xf32>
    %430 = vector.broadcast %429 : vector<16x1xf32> to vector<16x32xf32>
    %431 = arith.mulf %426, %430 : vector<16x32xf32>
    %432 = vector.broadcast %412 : vector<1x32xf32> to vector<16x32xf32>
    %433 = arith.mulf %431, %432 : vector<16x32xf32>
    %434 = vector.broadcast %413 : vector<1x32xf32> to vector<16x32xf32>
    %435 = arith.addf %433, %434 : vector<16x32xf32>
    %c0_169 = arith.constant 0 : index
    %c0_170 = arith.constant 0 : index
    %436 = vector.load %arg38[%c0_169, %c0_170] : memref<32x8xf32, #tpu.memory_space<vmem>>, vector<32x8xf32>
    %cst_171 = arith.constant dense<0.000000e+00> : vector<16x8xf32>
    %437 = tpu.matmul %435, %436, %cst_171 {dimension_numbers = #tpu.dot_dimension_numbers<[1], [0], [0], [1], [0, 0, 1, 1], [], []>} : vector<16x32xf32>, vector<32x8xf32>, vector<16x8xf32> -> vector<16x8xf32>
    %c0_172 = arith.constant 0 : index
    %c0_173 = arith.constant 0 : index
    %438 = vector.load %arg39[%c0_172, %c0_173] : memref<1x8xf32, #tpu.memory_space<vmem>>, vector<1x8xf32>
    %439 = vector.broadcast %438 : vector<1x8xf32> to vector<16x8xf32>
    %440 = arith.addf %437, %439 : vector<16x8xf32>
    %c0_174 = arith.constant 0 : index
    %c0_175 = arith.constant 0 : index
    %441 = vector.load %arg40[%c0_174, %c0_175] : memref<16x8xf32, #tpu.memory_space<vmem>>, vector<16x8xf32>
    tpu.vector_store %arg40[%c0_174, %c0_175], %440 {strides = array<i32>} : memref<16x8xf32, #tpu.memory_space<vmem>>, vector<16x8xf32>,
    return
  }
  func.func @transform_0(%arg0: i32) -> (i32, i32) {
    %c0_i32 = arith.constant 0 : i32
    %c0_i32_0 = arith.constant 0 : i32
    return %arg0, %c0_i32 : i32, i32
  }
  func.func @transform_1(%arg0: i32) -> (i32, i32, i32) {
    %c0_i32 = arith.constant 0 : i32
    %c0_i32_0 = arith.constant 0 : i32
    %c0_i32_1 = arith.constant 0 : i32
    return %arg0, %c0_i32, %c0_i32_0 : i32, i32, i32
  }
  func.func @transform_2(%arg0: i32) -> (i32, i32) {
    %c0_i32 = arith.constant 0 : i32
    %c0_i32_0 = arith.constant 0 : i32
    return %arg0, %c0_i32 : i32, i32
  }
  func.func @transform_3(%arg0: i32) -> (i32, i32) {
    %c0_i32 = arith.constant 0 : i32
    %c0_i32_0 = arith.constant 0 : i32
    %c0_i32_1 = arith.constant 0 : i32
    return %c0_i32, %c0_i32_0 : i32, i32
  }
  func.func @transform_4(%arg0: i32) -> (i32, i32) {
    %c0_i32 = arith.constant 0 : i32
    %c0_i32_0 = arith.constant 0 : i32
    %c0_i32_1 = arith.constant 0 : i32
    return %c0_i32, %c0_i32_0 : i32, i32
  }
  func.func @transform_5(%arg0: i32) -> (i32, i32) {
    %c0_i32 = arith.constant 0 : i32
    %c0_i32_0 = arith.constant 0 : i32
    %c0_i32_1 = arith.constant 0 : i32
    return %c0_i32, %c0_i32_0 : i32, i32
  }
  func.func @transform_6(%arg0: i32) -> (i32, i32) {
    %c0_i32 = arith.constant 0 : i32
    %c0_i32_0 = arith.constant 0 : i32
    %c0_i32_1 = arith.constant 0 : i32
    return %c0_i32, %c0_i32_0 : i32, i32
  }
  func.func @transform_7(%arg0: i32) -> (i32, i32) {
    %c0_i32 = arith.constant 0 : i32
    %c0_i32_0 = arith.constant 0 : i32
    %c0_i32_1 = arith.constant 0 : i32
    return %c0_i32, %c0_i32_0 : i32, i32
  }
  func.func @transform_8(%arg0: i32) -> (i32, i32) {
    %c0_i32 = arith.constant 0 : i32
    %c0_i32_0 = arith.constant 0 : i32
    %c0_i32_1 = arith.constant 0 : i32
    return %c0_i32, %c0_i32_0 : i32, i32
  }
  func.func @transform_9(%arg0: i32) -> (i32, i32) {
    %c0_i32 = arith.constant 0 : i32
    %c0_i32_0 = arith.constant 0 : i32
    %c0_i32_1 = arith.constant 0 : i32
    return %c0_i32, %c0_i32_0 : i32, i32
  }
  func.func @transform_10(%arg0: i32) -> (i32, i32) {
    %c0_i32 = arith.constant 0 : i32
    %c0_i32_0 = arith.constant 0 : i32
    %c0_i32_1 = arith.constant 0 : i32
    return %c0_i32, %c0_i32_0 : i32, i32
  }
  func.func @transform_11(%arg0: i32) -> (i32, i32) {
    %c0_i32 = arith.constant 0 : i32
    %c0_i32_0 = arith.constant 0 : i32
    %c0_i32_1 = arith.constant 0 : i32
    return %c0_i32, %c0_i32_0 : i32, i32
  }
  func.func @transform_12(%arg0: i32) -> (i32, i32) {
    %c0_i32 = arith.constant 0 : i32
    %c0_i32_0 = arith.constant 0 : i32
    %c0_i32_1 = arith.constant 0 : i32
    return %c0_i32, %c0_i32_0 : i32, i32
  }
  func.func @transform_13(%arg0: i32) -> (i32, i32) {
    %c0_i32 = arith.constant 0 : i32
    %c0_i32_0 = arith.constant 0 : i32
    %c0_i32_1 = arith.constant 0 : i32
    return %c0_i32, %c0_i32_0 : i32, i32
  }
  func.func @transform_14(%arg0: i32) -> (i32, i32) {
    %c0_i32 = arith.constant 0 : i32
    %c0_i32_0 = arith.constant 0 : i32
    %c0_i32_1 = arith.constant 0 : i32
    return %c0_i32, %c0_i32_0 : i32, i32
  }
  func.func @transform_15(%arg0: i32) -> (i32, i32) {
    %c0_i32 = arith.constant 0 : i32
    %c0_i32_0 = arith.constant 0 : i32
    %c0_i32_1 = arith.constant 0 : i32
    return %c0_i32, %c0_i32_0 : i32, i32
  }
  func.func @transform_16(%arg0: i32) -> (i32, i32) {
    %c0_i32 = arith.constant 0 : i32
    %c0_i32_0 = arith.constant 0 : i32
    %c0_i32_1 = arith.constant 0 : i32
    return %c0_i32, %c0_i32_0 : i32, i32
  }
  func.func @transform_17(%arg0: i32) -> (i32, i32) {
    %c0_i32 = arith.constant 0 : i32
    %c0_i32_0 = arith.constant 0 : i32
    %c0_i32_1 = arith.constant 0 : i32
    return %c0_i32, %c0_i32_0 : i32, i32
  }
  func.func @transform_18(%arg0: i32) -> (i32, i32) {
    %c0_i32 = arith.constant 0 : i32
    %c0_i32_0 = arith.constant 0 : i32
    %c0_i32_1 = arith.constant 0 : i32
    return %c0_i32, %c0_i32_0 : i32, i32
  }
  func.func @transform_19(%arg0: i32) -> (i32, i32) {
    %c0_i32 = arith.constant 0 : i32
    %c0_i32_0 = arith.constant 0 : i32
    %c0_i32_1 = arith.constant 0 : i32
    return %c0_i32, %c0_i32_0 : i32, i32
  }
  func.func @transform_20(%arg0: i32) -> (i32, i32) {
    %c0_i32 = arith.constant 0 : i32
    %c0_i32_0 = arith.constant 0 : i32
    %c0_i32_1 = arith.constant 0 : i32
    return %c0_i32, %c0_i32_0 : i32, i32
  }
  func.func @transform_21(%arg0: i32) -> (i32, i32) {
    %c0_i32 = arith.constant 0 : i32
    %c0_i32_0 = arith.constant 0 : i32
    %c0_i32_1 = arith.constant 0 : i32
    return %c0_i32, %c0_i32_0 : i32, i32
  }
  func.func @transform_22(%arg0: i32) -> (i32, i32) {
    %c0_i32 = arith.constant 0 : i32
    %c0_i32_0 = arith.constant 0 : i32
    %c0_i32_1 = arith.constant 0 : i32
    return %c0_i32, %c0_i32_0 : i32, i32
  }
  func.func @transform_23(%arg0: i32) -> (i32, i32) {
    %c0_i32 = arith.constant 0 : i32
    %c0_i32_0 = arith.constant 0 : i32
    %c0_i32_1 = arith.constant 0 : i32
    return %c0_i32, %c0_i32_0 : i32, i32
  }
  func.func @transform_24(%arg0: i32) -> (i32, i32) {
    %c0_i32 = arith.constant 0 : i32
    %c0_i32_0 = arith.constant 0 : i32
    %c0_i32_1 = arith.constant 0 : i32
    return %c0_i32, %c0_i32_0 : i32, i32
  }
  func.func @transform_25(%arg0: i32) -> (i32, i32) {
    %c0_i32 = arith.constant 0 : i32
    %c0_i32_0 = arith.constant 0 : i32
    %c0_i32_1 = arith.constant 0 : i32
    return %c0_i32, %c0_i32_0 : i32, i32
  }
  func.func @transform_26(%arg0: i32) -> (i32, i32) {
    %c0_i32 = arith.constant 0 : i32
    %c0_i32_0 = arith.constant 0 : i32
    %c0_i32_1 = arith.constant 0 : i32
    return %c0_i32, %c0_i32_0 : i32, i32
  }
  func.func @transform_27(%arg0: i32) -> (i32, i32) {
    %c0_i32 = arith.constant 0 : i32
    %c0_i32_0 = arith.constant 0 : i32
    %c0_i32_1 = arith.constant 0 : i32
    return %c0_i32, %c0_i32_0 : i32, i32
  }
  func.func @transform_28(%arg0: i32) -> (i32, i32) {
    %c0_i32 = arith.constant 0 : i32
    %c0_i32_0 = arith.constant 0 : i32
    %c0_i32_1 = arith.constant 0 : i32
    return %c0_i32, %c0_i32_0 : i32, i32
  }
  func.func @transform_29(%arg0: i32) -> (i32, i32) {
    %c0_i32 = arith.constant 0 : i32
    %c0_i32_0 = arith.constant 0 : i32
    %c0_i32_1 = arith.constant 0 : i32
    return %c0_i32, %c0_i32_0 : i32, i32
  }
  func.func @transform_30(%arg0: i32) -> (i32, i32) {
    %c0_i32 = arith.constant 0 : i32
    %c0_i32_0 = arith.constant 0 : i32
    %c0_i32_1 = arith.constant 0 : i32
    return %c0_i32, %c0_i32_0 : i32, i32
  }
  func.func @transform_31(%arg0: i32) -> (i32, i32) {
    %c0_i32 = arith.constant 0 : i32
    %c0_i32_0 = arith.constant 0 : i32
    %c0_i32_1 = arith.constant 0 : i32
    return %c0_i32, %c0_i32_0 : i32, i32
  }
  func.func @transform_32(%arg0: i32) -> (i32, i32) {
    %c0_i32 = arith.constant 0 : i32
    %c0_i32_0 = arith.constant 0 : i32
    %c0_i32_1 = arith.constant 0 : i32
    return %c0_i32, %c0_i32_0 : i32, i32
  }
  func.func @transform_33(%arg0: i32) -> (i32, i32) {
    %c0_i32 = arith.constant 0 : i32
    %c0_i32_0 = arith.constant 0 : i32
    %c0_i32_1 = arith.constant 0 : i32
    return %c0_i32, %c0_i32_0 : i32, i32
  }
  func.func @transform_34(%arg0: i32) -> (i32, i32) {
    %c0_i32 = arith.constant 0 : i32
    %c0_i32_0 = arith.constant 0 : i32
    %c0_i32_1 = arith.constant 0 : i32
    return %c0_i32, %c0_i32_0 : i32, i32
  }
  func.func @transform_35(%arg0: i32) -> (i32, i32) {
    %c0_i32 = arith.constant 0 : i32
    %c0_i32_0 = arith.constant 0 : i32
    %c0_i32_1 = arith.constant 0 : i32
    return %c0_i32, %c0_i32_0 : i32, i32
  }
  func.func @transform_36(%arg0: i32) -> (i32, i32) {
    %c0_i32 = arith.constant 0 : i32
    %c0_i32_0 = arith.constant 0 : i32
    %c0_i32_1 = arith.constant 0 : i32
    return %c0_i32, %c0_i32_0 : i32, i32
  }
  func.func @transform_37(%arg0: i32) -> (i32, i32) {
    %c0_i32 = arith.constant 0 : i32
    %c0_i32_0 = arith.constant 0 : i32
    %c0_i32_1 = arith.constant 0 : i32
    return %c0_i32, %c0_i32_0 : i32, i32
  }
  func.func @transform_38(%arg0: i32) -> (i32, i32) {
    %c0_i32 = arith.constant 0 : i32
    %c0_i32_0 = arith.constant 0 : i32
    %c0_i32_1 = arith.constant 0 : i32
    return %c0_i32, %c0_i32_0 : i32, i32
  }
  func.func @transform_39(%arg0: i32) -> (i32, i32) {
    %c0_i32 = arith.constant 0 : i32
    %c0_i32_0 = arith.constant 0 : i32
    return %arg0, %c0_i32 : i32, i32
  }
}

</mosaic_0001>

<llo_original>
// kernel: hubert_ctc_forward.1
$region0: #{hubert_ctc_forward.1}
  #allocation0 [shape = 'u32[]', space=smem, size = 0x4, offset = 0x4, fixed_abs, tag = 'smem constant byte address 0x4 - core index']
  #allocation1 [shape = 'u32[72,128]{1,0:T(1,128)}', space=vmem, size = 0x9000, scoped, tag = 'internal scratch']
  %s0 = inlined_call_operand.smem [shape: u32[40], index: -1, kind: input, shape index: {}]
  %s1 = sld [smem:[%s0]]
  %s2 = scalar_lea.smem %s0, 1
  %s3 = sld [smem:[%s2]]
  %s4 = scalar_lea.smem %s0, 2
  %s5 = sld [smem:[%s4]]
  %s6 = scalar_lea.smem %s0, 3
  %s7 = sld [smem:[%s6]]
  %s8 = scalar_lea.smem %s0, 4
  %s9 = sld [smem:[%s8]]
  %s10 = scalar_lea.smem %s0, 5
  %s11 = sld [smem:[%s10]]
  %s12 = scalar_lea.smem %s0, 6
  %s13 = sld [smem:[%s12]]
  %s14 = scalar_lea.smem %s0, 7
  %s15 = sld [smem:[%s14]]
  %s16 = scalar_lea.smem %s0, 8
  %s17 = sld [smem:[%s16]]
  %s18 = scalar_lea.smem %s0, 9
  %s19 = sld [smem:[%s18]]
  %s20 = scalar_lea.smem %s0, 10
  %s21 = sld [smem:[%s20]]
  %s22 = scalar_lea.smem %s0, 11
  %s23 = sld [smem:[%s22]]
  %s24 = scalar_lea.smem %s0, 12
  %s25 = sld [smem:[%s24]]
  %s26 = scalar_lea.smem %s0, 13
  %s27 = sld [smem:[%s26]]
  %s28 = scalar_lea.smem %s0, 14
  %s29 = sld [smem:[%s28]]
  %s30 = scalar_lea.smem %s0, 15
  %s31 = sld [smem:[%s30]]
  %s32 = scalar_lea.smem %s0, 16
  %s33 = sld [smem:[%s32]]
  %s34 = scalar_lea.smem %s0, 17
  %s35 = sld [smem:[%s34]]
  %s36 = scalar_lea.smem %s0, 18
  %s37 = sld [smem:[%s36]]
  %s38 = scalar_lea.smem %s0, 19
  %s39 = sld [smem:[%s38]]
  %s40 = scalar_lea.smem %s0, 20
  %s41 = sld [smem:[%s40]]
  %s42 = scalar_lea.smem %s0, 21
  %s43 = sld [smem:[%s42]]
  %s44 = scalar_lea.smem %s0, 22
  %s45 = sld [smem:[%s44]]
  %s46 = scalar_lea.smem %s0, 23
  %s47 = sld [smem:[%s46]]
  %s48 = scalar_lea.smem %s0, 24
  %s49 = sld [smem:[%s48]]
  %s50 = scalar_lea.smem %s0, 25
  %s51 = sld [smem:[%s50]]
  %s52 = scalar_lea.smem %s0, 26
  %s53 = sld [smem:[%s52]]
  %s54 = scalar_lea.smem %s0, 27
  %s55 = sld [smem:[%s54]]
  %s56 = scalar_lea.smem %s0, 28
  %s57 = sld [smem:[%s56]]
  %s58 = scalar_lea.smem %s0, 29
  %s59 = sld [smem:[%s58]]
  %s60 = scalar_lea.smem %s0, 30
  %s61 = sld [smem:[%s60]]
  %s62 = scalar_lea.smem %s0, 31
  %s63 = sld [smem:[%s62]]
  %s64 = scalar_lea.smem %s0, 32
  %s65 = sld [smem:[%s64]]
  %s66 = scalar_lea.smem %s0, 33
  %s67 = sld [smem:[%s66]]
  %s68 = scalar_lea.smem %s0, 34
  %s69 = sld [smem:[%s68]]
  %s70 = scalar_lea.smem %s0, 35
  %s71 = sld [smem:[%s70]]
  %s72 = scalar_lea.smem %s0, 36
  %s73 = sld [smem:[%s72]]
  %s74 = scalar_lea.smem %s0, 37
  %s75 = sld [smem:[%s74]]
  %s76 = scalar_lea.smem %s0, 38
  %s77 = sld [smem:[%s76]]
  %s78 = scalar_lea.smem %s0, 39
  %s79 = sld [smem:[%s78]]
  %s80 = sld [smem:[#allocation0]]
  $region189: #{hubert_ctc_forward.1} parent=0
    _
  %s82 = ssub.s32 1, %s80
  %s83 = scalar_select 0, %s82, %s80
  loop: start=0, step=1, limit=4
  $region2: #{hubert_ctc_forward.1} parent=0 // loop_pre_header
    _
  $region3: #{hubert_ctc_forward.1} parent=0 // loop_header
    %s85 = sphi 0, %s89
    %p86 = scmp.ge.s32.totalorder %s85, 4
    %s95 = sphi 0, %s97
    %s98 = sphi 0, %s95
    %s99 = sphi 0, %s98
    %s115 = sphi 0, %s99
    %s121 = sphi 0, %s123
    %s124 = sphi 0, %s121
    %s125 = sphi 0, %s124
    %s141 = sphi 0, %s125
    %s147 = sphi 0, %s149
    %s150 = sphi 0, %s147
    %s151 = sphi 0, %s150
    %s167 = sphi 0, %s151
    %s171 = sphi 0, %s171
    %s173 = sphi 0, %s171
    %s174 = sphi 0, %s173
    %s188 = sphi 0, %s174
    %s192 = sphi 0, %s192
    %s194 = sphi 0, %s192
    %s195 = sphi 0, %s194
    %s209 = sphi 0, %s195
    %s213 = sphi 0, %s213
    %s215 = sphi 0, %s213
    %s216 = sphi 0, %s215
    %s230 = sphi 0, %s216
    %s234 = sphi 0, %s234
    %s236 = sphi 0, %s234
    %s237 = sphi 0, %s236
    %s251 = sphi 0, %s237
    %s255 = sphi 0, %s255
    %s257 = sphi 0, %s255
    %s258 = sphi 0, %s257
    %s272 = sphi 0, %s258
    %s276 = sphi 0, %s276
    %s278 = sphi 0, %s276
    %s279 = sphi 0, %s278
    %s293 = sphi 0, %s279
    %s297 = sphi 0, %s297
    %s299 = sphi 0, %s297
    %s300 = sphi 0, %s299
    %s314 = sphi 0, %s300
    %s318 = sphi 0, %s318
    %s320 = sphi 0, %s318
    %s321 = sphi 0, %s320
    %s335 = sphi 0, %s321
    %s339 = sphi 0, %s339
    %s341 = sphi 0, %s339
    %s342 = sphi 0, %s341
    %s356 = sphi 0, %s342
    %s360 = sphi 0, %s360
    %s362 = sphi 0, %s360
    %s363 = sphi 0, %s362
    %s377 = sphi 0, %s363
    %s381 = sphi 0, %s381
    %s383 = sphi 0, %s381
    %s384 = sphi 0, %s383
    %s398 = sphi 0, %s384
    %s402 = sphi 0, %s402
    %s404 = sphi 0, %s402
    %s405 = sphi 0, %s404
    %s419 = sphi 0, %s405
    %s423 = sphi 0, %s423
    %s425 = sphi 0, %s423
    %s426 = sphi 0, %s425
    %s440 = sphi 0, %s426
    %s444 = sphi 0, %s444
    %s446 = sphi 0, %s444
    %s447 = sphi 0, %s446
    %s461 = sphi 0, %s447
    %s465 = sphi 0, %s465
    %s467 = sphi 0, %s465
    %s468 = sphi 0, %s467
    %s482 = sphi 0, %s468
    %s486 = sphi 0, %s486
    %s488 = sphi 0, %s486
    %s489 = sphi 0, %s488
    %s503 = sphi 0, %s489
    %s507 = sphi 0, %s507
    %s509 = sphi 0, %s507
    %s510 = sphi 0, %s509
    %s524 = sphi 0, %s510
    %s528 = sphi 0, %s528
    %s530 = sphi 0, %s528
    %s531 = sphi 0, %s530
    %s545 = sphi 0, %s531
    %s549 = sphi 0, %s549
    %s551 = sphi 0, %s549
    %s552 = sphi 0, %s551
    %s566 = sphi 0, %s552
    %s570 = sphi 0, %s570
    %s572 = sphi 0, %s570
    %s573 = sphi 0, %s572
    %s587 = sphi 0, %s573
    %s591 = sphi 0, %s591
    %s593 = sphi 0, %s591
    %s594 = sphi 0, %s593
    %s608 = sphi 0, %s594
    %s612 = sphi 0, %s612
    %s614 = sphi 0, %s612
    %s615 = sphi 0, %s614
    %s629 = sphi 0, %s615
    %s633 = sphi 0, %s633
    %s635 = sphi 0, %s633
    %s636 = sphi 0, %s635
    %s650 = sphi 0, %s636
    %s654 = sphi 0, %s654
    %s656 = sphi 0, %s654
    %s657 = sphi 0, %s656
    %s671 = sphi 0, %s657
    %s675 = sphi 0, %s675
    %s677 = sphi 0, %s675
    %s678 = sphi 0, %s677
    %s692 = sphi 0, %s678
    %s696 = sphi 0, %s696
    %s698 = sphi 0, %s696
    %s699 = sphi 0, %s698
    %s713 = sphi 0, %s699
    %s717 = sphi 0, %s717
    %s719 = sphi 0, %s717
    %s720 = sphi 0, %s719
    %s734 = sphi 0, %s720
    %s738 = sphi 0, %s738
    %s740 = sphi 0, %s738
    %s741 = sphi 0, %s740
    %s755 = sphi 0, %s741
    %s759 = sphi 0, %s759
    %s761 = sphi 0, %s759
    %s762 = sphi 0, %s761
    %s776 = sphi 0, %s762
    %s780 = sphi 0, %s780
    %s782 = sphi 0, %s780
    %s783 = sphi 0, %s782
    %s797 = sphi 0, %s783
    %s801 = sphi 0, %s801
    %s803 = sphi 0, %s801
    %s804 = sphi 0, %s803
    %s818 = sphi 0, %s804
    %s822 = sphi 0, %s822
    %s824 = sphi 0, %s822
    %s825 = sphi 0, %s824
    %s839 = sphi 0, %s825
    %s843 = sphi 0, %s843
    %s845 = sphi 0, %s843
    %s846 = sphi 0, %s845
    %s860 = sphi 0, %s846
    %s864 = sphi 0, %s864
    %s866 = sphi 0, %s864
    %s867 = sphi 0, %s866
    %s881 = sphi 0, %s867
    %s885 = sphi 0, %s885
    %s887 = sphi 0, %s885
    %s888 = sphi 0, %s887
    %s902 = sphi 0, %s888
    %s906 = sphi 0, %s906
    %s908 = sphi 0, %s906
    %s909 = sphi 0, %s908
    %s923 = sphi 0, %s909
    %s929 = sphi 0, %s931
    %s932 = sphi 0, %s929
    %s933 = sphi 0, %s932
    %s949 = sphi 0, %s933
  $region4: #{hubert_ctc_forward.1} parent=0 // loop_header_branch
    %88 = sbr.rel (%p86) target = $region8
  $region5: #{hubert_ctc_forward.1} parent=0 // loop_body
    %s90 = ssub.s32 %s85, 1
    %s91 = ssub.s32 %s85, 2
    %s92 = sadd.s32 %s85, 1
    %s93 = ssub.s32 %s85, %s92
    %p94 = scmp.eq.s32.totalorder %s93, 0
    %s96 = sadd.s32 %s95, 1
    %s97 = scalar_select %p94, %s95, %s96
    %p100 = pneg %p94
    %p101 = scmp.eq.s32.totalorder %s85, 1
    %p102 = por %p100, %p101
    %p103 = scmp.ne.s32.totalorder %s95, %s98
    %p104 = scmp.eq.s32.totalorder %s85, 0
    %p105 = por %p103, %p104
    %p106 = scmp.ne.s32.totalorder %s95, %s98
    %p107 = scmp.eq.s32.totalorder %s90, 1
    %p108 = por %p106, %p107
    %p109 = scmp.ne.s32.totalorder %s98, %s99
    %p110 = scmp.eq.s32.totalorder %s90, 0
    %p111 = por %p109, %p110
    %p112 = scmp.ne.s32.totalorder %s98, %s99
    %p113 = scmp.eq.s32.totalorder %s91, 1
    %p114 = por %p112, %p113
    %p116 = scmp.ne.s32.totalorder %s99, %s115
    %p117 = scmp.eq.s32.totalorder %s91, 0
    %p118 = por %p116, %p117
    %s119 = ssub.s32 %s85, %s92
    %p120 = scmp.eq.s32.totalorder %s119, 0
    %s122 = sadd.s32 %s121, 1
    %s123 = scalar_select %p120, %s121, %s122
    %p126 = pneg %p120
    %p127 = scmp.eq.s32.totalorder %s85, 1
    %p128 = por %p126, %p127
    %p129 = scmp.ne.s32.totalorder %s121, %s124
    %p130 = scmp.eq.s32.totalorder %s85, 0
    %p131 = por %p129, %p130
    %p132 = scmp.ne.s32.totalorder %s121, %s124
    %p133 = scmp.eq.s32.totalorder %s90, 1
    %p134 = por %p132, %p133
    %p135 = scmp.ne.s32.totalorder %s124, %s125
    %p136 = scmp.eq.s32.totalorder %s90, 0
    %p137 = por %p135, %p136
    %p138 = scmp.ne.s32.totalorder %s124, %s125
    %p139 = scmp.eq.s32.totalorder %s91, 1
    %p140 = por %p138, %p139
    %p142 = scmp.ne.s32.totalorder %s125, %s141
    %p143 = scmp.eq.s32.totalorder %s91, 0
    %p144 = por %p142, %p143
    %s145 = ssub.s32 %s85, %s92
    %p146 = scmp.eq.s32.totalorder %s145, 0
    %s148 = sadd.s32 %s147, 1
    %s149 = scalar_select %p146, %s147, %s148
    %p152 = pneg %p146
    %p153 = scmp.eq.s32.totalorder %s85, 1
    %p154 = por %p152, %p153
    %p155 = scmp.ne.s32.totalorder %s147, %s150
    %p156 = scmp.eq.s32.totalorder %s85, 0
    %p157 = por %p155, %p156
    %p158 = scmp.ne.s32.totalorder %s147, %s150
    %p159 = scmp.eq.s32.totalorder %s90, 1
    %p160 = por %p158, %p159
    %p161 = scmp.ne.s32.totalorder %s150, %s151
    %p162 = scmp.eq.s32.totalorder %s90, 0
    %p163 = por %p161, %p162
    %p164 = scmp.ne.s32.totalorder %s150, %s151
    %p165 = scmp.eq.s32.totalorder %s91, 1
    %p166 = por %p164, %p165
    %p168 = scmp.ne.s32.totalorder %s151, %s167
    %p169 = scmp.eq.s32.totalorder %s91, 0
    %p170 = por %p168, %p169
    %s172 = sadd.s32 %s171, 1
    %p175 = scmp.eq.s32.totalorder %s85, 1
    %p176 = scmp.ne.s32.totalorder %s171, %s173
    %p177 = scmp.eq.s32.totalorder %s85, 0
    %p178 = por %p176, %p177
    %p179 = scmp.ne.s32.totalorder %s171, %s173
    %p180 = scmp.eq.s32.totalorder %s90, 1
    %p181 = por %p179, %p180
    %p182 = scmp.ne.s32.totalorder %s173, %s174
    %p183 = scmp.eq.s32.totalorder %s90, 0
    %p184 = por %p182, %p183
    %p185 = scmp.ne.s32.totalorder %s173, %s174
    %p186 = scmp.eq.s32.totalorder %s91, 1
    %p187 = por %p185, %p186
    %p189 = scmp.ne.s32.totalorder %s174, %s188
    %p190 = scmp.eq.s32.totalorder %s91, 0
    %p191 = por %p189, %p190
    %s193 = sadd.s32 %s192, 1
    %p196 = scmp.eq.s32.totalorder %s85, 1
    %p197 = scmp.ne.s32.totalorder %s192, %s194
    %p198 = scmp.eq.s32.totalorder %s85, 0
    %p199 = por %p197, %p198
    %p200 = scmp.ne.s32.totalorder %s192, %s194
    %p201 = scmp.eq.s32.totalorder %s90, 1
    %p202 = por %p200, %p201
    %p203 = scmp.ne.s32.totalorder %s194, %s195
    %p204 = scmp.eq.s32.totalorder %s90, 0
    %p205 = por %p203, %p204
    %p206 = scmp.ne.s32.totalorder %s194, %s195
    %p207 = scmp.eq.s32.totalorder %s91, 1
    %p208 = por %p206, %p207
    %p210 = scmp.ne.s32.totalorder %s195, %s209
    %p211 = scmp.eq.s32.totalorder %s91, 0
    %p212 = por %p210, %p211
    %s214 = sadd.s32 %s213, 1
    %p217 = scmp.eq.s32.totalorder %s85, 1
    %p218 = scmp.ne.s32.totalorder %s213, %s215
    %p219 = scmp.eq.s32.totalorder %s85, 0
    %p220 = por %p218, %p219
    %p221 = scmp.ne.s32.totalorder %s213, %s215
    %p222 = scmp.eq.s32.totalorder %s90, 1
    %p223 = por %p221, %p222
    %p224 = scmp.ne.s32.totalorder %s215, %s216
    %p225 = scmp.eq.s32.totalorder %s90, 0
    %p226 = por %p224, %p225
    %p227 = scmp.ne.s32.totalorder %s215, %s216
    %p228 = scmp.eq.s32.totalorder %s91, 1
    %p229 = por %p227, %p228
    %p231 = scmp.ne.s32.totalorder %s216, %s230
    %p232 = scmp.eq.s32.totalorder %s91, 0
    %p233 = por %p231, %p232
    %s235 = sadd.s32 %s234, 1
    %p238 = scmp.eq.s32.totalorder %s85, 1
    %p239 = scmp.ne.s32.totalorder %s234, %s236
    %p240 = scmp.eq.s32.totalorder %s85, 0
    %p241 = por %p239, %p240
    %p242 = scmp.ne.s32.totalorder %s234, %s236
    %p243 = scmp.eq.s32.totalorder %s90, 1
    %p244 = por %p242, %p243
    %p245 = scmp.ne.s32.totalorder %s236, %s237
    %p246 = scmp.eq.s32.totalorder %s90, 0
    %p247 = por %p245, %p246
    %p248 = scmp.ne.s32.totalorder %s236, %s237
    %p249 = scmp.eq.s32.totalorder %s91, 1
    %p250 = por %p248, %p249
    %p252 = scmp.ne.s32.totalorder %s237, %s251
    %p253 = scmp.eq.s32.totalorder %s91, 0
    %p254 = por %p252, %p253
    %s256 = sadd.s32 %s255, 1
    %p259 = scmp.eq.s32.totalorder %s85, 1
    %p260 = scmp.ne.s32.totalorder %s255, %s257
    %p261 = scmp.eq.s32.totalorder %s85, 0
    %p262 = por %p260, %p261
    %p263 = scmp.ne.s32.totalorder %s255, %s257
    %p264 = scmp.eq.s32.totalorder %s90, 1
    %p265 = por %p263, %p264
    %p266 = scmp.ne.s32.totalorder %s257, %s258
    %p267 = scmp.eq.s32.totalorder %s90, 0
    %p268 = por %p266, %p267
    %p269 = scmp.ne.s32.totalorder %s257, %s258
    %p270 = scmp.eq.s32.totalorder %s91, 1
    %p271 = por %p269, %p270
    %p273 = scmp.ne.s32.totalorder %s258, %s272
    %p274 = scmp.eq.s32.totalorder %s91, 0
    %p275 = por %p273, %p274
    %s277 = sadd.s32 %s276, 1
    %p280 = scmp.eq.s32.totalorder %s85, 1
    %p281 = scmp.ne.s32.totalorder %s276, %s278
    %p282 = scmp.eq.s32.totalorder %s85, 0
    %p283 = por %p281, %p282
    %p284 = scmp.ne.s32.totalorder %s276, %s278
    %p285 = scmp.eq.s32.totalorder %s90, 1
    %p286 = por %p284, %p285
    %p287 = scmp.ne.s32.totalorder %s278, %s279
    %p288 = scmp.eq.s32.totalorder %s90, 0
    %p289 = por %p287, %p288
    %p290 = scmp.ne.s32.totalorder %s278, %s279
    %p291 = scmp.eq.s32.totalorder %s91, 1
    %p292 = por %p290, %p291
    %p294 = scmp.ne.s32.totalorder %s279, %s293
    %p295 = scmp.eq.s32.totalorder %s91, 0
    %p296 = por %p294, %p295
    %s298 = sadd.s32 %s297, 1
    %p301 = scmp.eq.s32.totalorder %s85, 1
    %p302 = scmp.ne.s32.totalorder %s297, %s299
    %p303 = scmp.eq.s32.totalorder %s85, 0
    %p304 = por %p302, %p303
    %p305 = scmp.ne.s32.totalorder %s297, %s299
    %p306 = scmp.eq.s32.totalorder %s90, 1
    %p307 = por %p305, %p306
    %p308 = scmp.ne.s32.totalorder %s299, %s300
    %p309 = scmp.eq.s32.totalorder %s90, 0
    %p310 = por %p308, %p309
    %p311 = scmp.ne.s32.totalorder %s299, %s300
    %p312 = scmp.eq.s32.totalorder %s91, 1
    %p313 = por %p311, %p312
    %p315 = scmp.ne.s32.totalorder %s300, %s314
    %p316 = scmp.eq.s32.totalorder %s91, 0
    %p317 = por %p315, %p316
    %s319 = sadd.s32 %s318, 1
    %p322 = scmp.eq.s32.totalorder %s85, 1
    %p323 = scmp.ne.s32.totalorder %s318, %s320
    %p324 = scmp.eq.s32.totalorder %s85, 0
    %p325 = por %p323, %p324
    %p326 = scmp.ne.s32.totalorder %s318, %s320
    %p327 = scmp.eq.s32.totalorder %s90, 1
    %p328 = por %p326, %p327
    %p329 = scmp.ne.s32.totalorder %s320, %s321
    %p330 = scmp.eq.s32.totalorder %s90, 0
    %p331 = por %p329, %p330
    %p332 = scmp.ne.s32.totalorder %s320, %s321
    %p333 = scmp.eq.s32.totalorder %s91, 1
    %p334 = por %p332, %p333
    %p336 = scmp.ne.s32.totalorder %s321, %s335
    %p337 = scmp.eq.s32.totalorder %s91, 0
    %p338 = por %p336, %p337
    %s340 = sadd.s32 %s339, 1
    %p343 = scmp.eq.s32.totalorder %s85, 1
    %p344 = scmp.ne.s32.totalorder %s339, %s341
    %p345 = scmp.eq.s32.totalorder %s85, 0
    %p346 = por %p344, %p345
    %p347 = scmp.ne.s32.totalorder %s339, %s341
    %p348 = scmp.eq.s32.totalorder %s90, 1
    %p349 = por %p347, %p348
    %p350 = scmp.ne.s32.totalorder %s341, %s342
    %p351 = scmp.eq.s32.totalorder %s90, 0
    %p352 = por %p350, %p351
    %p353 = scmp.ne.s32.totalorder %s341, %s342
    %p354 = scmp.eq.s32.totalorder %s91, 1
    %p355 = por %p353, %p354
    %p357 = scmp.ne.s32.totalorder %s342, %s356
    %p358 = scmp.eq.s32.totalorder %s91, 0
    %p359 = por %p357, %p358
    %s361 = sadd.s32 %s360, 1
    %p364 = scmp.eq.s32.totalorder %s85, 1
    %p365 = scmp.ne.s32.totalorder %s360, %s362
    %p366 = scmp.eq.s32.totalorder %s85, 0
    %p367 = por %p365, %p366
    %p368 = scmp.ne.s32.totalorder %s360, %s362
    %p369 = scmp.eq.s32.totalorder %s90, 1
    %p370 = por %p368, %p369
    %p371 = scmp.ne.s32.totalorder %s362, %s363
    %p372 = scmp.eq.s32.totalorder %s90, 0
    %p373 = por %p371, %p372
    %p374 = scmp.ne.s32.totalorder %s362, %s363
    %p375 = scmp.eq.s32.totalorder %s91, 1
    %p376 = por %p374, %p375
    %p378 = scmp.ne.s32.totalorder %s363, %s377
    %p379 = scmp.eq.s32.totalorder %s91, 0
    %p380 = por %p378, %p379
    %s382 = sadd.s32 %s381, 1
    %p385 = scmp.eq.s32.totalorder %s85, 1
    %p386 = scmp.ne.s32.totalorder %s381, %s383
    %p387 = scmp.eq.s32.totalorder %s85, 0
    %p388 = por %p386, %p387
    %p389 = scmp.ne.s32.totalorder %s381, %s383
    %p390 = scmp.eq.s32.totalorder %s90, 1
    %p391 = por %p389, %p390
    %p392 = scmp.ne.s32.totalorder %s383, %s384
    %p393 = scmp.eq.s32.totalorder %s90, 0
    %p394 = por %p392, %p393
    %p395 = scmp.ne.s32.totalorder %s383, %s384
    %p396 = scmp.eq.s32.totalorder %s91, 1
    %p397 = por %p395, %p396
    %p399 = scmp.ne.s32.totalorder %s384, %s398
    %p400 = scmp.eq.s32.totalorder %s91, 0
    %p401 = por %p399, %p400
    %s403 = sadd.s32 %s402, 1
    %p406 = scmp.eq.s32.totalorder %s85, 1
    %p407 = scmp.ne.s32.totalorder %s402, %s404
    %p408 = scmp.eq.s32.totalorder %s85, 0
    %p409 = por %p407, %p408
    %p410 = scmp.ne.s32.totalorder %s402, %s404
    %p411 = scmp.eq.s32.totalorder %s90, 1
    %p412 = por %p410, %p411
    %p413 = scmp.ne.s32.totalorder %s404, %s405
    %p414 = scmp.eq.s32.totalorder %s90, 0
    %p415 = por %p413, %p414
    %p416 = scmp.ne.s32.totalorder %s404, %s405
    %p417 = scmp.eq.s32.totalorder %s91, 1
    %p418 = por %p416, %p417
    %p420 = scmp.ne.s32.totalorder %s405, %s419
    %p421 = scmp.eq.s32.totalorder %s91, 0
    %p422 = por %p420, %p421
    %s424 = sadd.s32 %s423, 1
    %p427 = scmp.eq.s32.totalorder %s85, 1
    %p428 = scmp.ne.s32.totalorder %s423, %s425
    %p429 = scmp.eq.s32.totalorder %s85, 0
    %p430 = por %p428, %p429
    %p431 = scmp.ne.s32.totalorder %s423, %s425
    %p432 = scmp.eq.s32.totalorder %s90, 1
    %p433 = por %p431, %p432
    %p434 = scmp.ne.s32.totalorder %s425, %s426
    %p435 = scmp.eq.s32.totalorder %s90, 0
    %p436 = por %p434, %p435
    %p437 = scmp.ne.s32.totalorder %s425, %s426
    %p438 = scmp.eq.s32.totalorder %s91, 1
    %p439 = por %p437, %p438
    %p441 = scmp.ne.s32.totalorder %s426, %s440
    %p442 = scmp.eq.s32.totalorder %s91, 0
    %p443 = por %p441, %p442
    %s445 = sadd.s32 %s444, 1
    %p448 = scmp.eq.s32.totalorder %s85, 1
    %p449 = scmp.ne.s32.totalorder %s444, %s446
    %p450 = scmp.eq.s32.totalorder %s85, 0
    %p451 = por %p449, %p450
    %p452 = scmp.ne.s32.totalorder %s444, %s446
    %p453 = scmp.eq.s32.totalorder %s90, 1
    %p454 = por %p452, %p453
    %p455 = scmp.ne.s32.totalorder %s446, %s447
    %p456 = scmp.eq.s32.totalorder %s90, 0
    %p457 = por %p455, %p456
    %p458 = scmp.ne.s32.totalorder %s446, %s447
    %p459 = scmp.eq.s32.totalorder %s91, 1
    %p460 = por %p458, %p459
    %p462 = scmp.ne.s32.totalorder %s447, %s461
    %p463 = scmp.eq.s32.totalorder %s91, 0
    %p464 = por %p462, %p463
    %s466 = sadd.s32 %s465, 1
    %p469 = scmp.eq.s32.totalorder %s85, 1
    %p470 = scmp.ne.s32.totalorder %s465, %s467
    %p471 = scmp.eq.s32.totalorder %s85, 0
    %p472 = por %p470, %p471
    %p473 = scmp.ne.s32.totalorder %s465, %s467
    %p474 = scmp.eq.s32.totalorder %s90, 1
    %p475 = por %p473, %p474
    %p476 = scmp.ne.s32.totalorder %s467, %s468
    %p477 = scmp.eq.s32.totalorder %s90, 0
    %p478 = por %p476, %p477
    %p479 = scmp.ne.s32.totalorder %s467, %s468
    %p480 = scmp.eq.s32.totalorder %s91, 1
    %p481 = por %p479, %p480
    %p483 = scmp.ne.s32.totalorder %s468, %s482
    %p484 = scmp.eq.s32.totalorder %s91, 0
    %p485 = por %p483, %p484
    %s487 = sadd.s32 %s486, 1
    %p490 = scmp.eq.s32.totalorder %s85, 1
    %p491 = scmp.ne.s32.totalorder %s486, %s488
    %p492 = scmp.eq.s32.totalorder %s85, 0
    %p493 = por %p491, %p492
    %p494 = scmp.ne.s32.totalorder %s486, %s488
    %p495 = scmp.eq.s32.totalorder %s90, 1
    %p496 = por %p494, %p495
    %p497 = scmp.ne.s32.totalorder %s488, %s489
    %p498 = scmp.eq.s32.totalorder %s90, 0
    %p499 = por %p497, %p498
    %p500 = scmp.ne.s32.totalorder %s488, %s489
    %p501 = scmp.eq.s32.totalorder %s91, 1
    %p502 = por %p500, %p501
    %p504 = scmp.ne.s32.totalorder %s489, %s503
    %p505 = scmp.eq.s32.totalorder %s91, 0
    %p506 = por %p504, %p505
    %s508 = sadd.s32 %s507, 1
    %p511 = scmp.eq.s32.totalorder %s85, 1
    %p512 = scmp.ne.s32.totalorder %s507, %s509
    %p513 = scmp.eq.s32.totalorder %s85, 0
    %p514 = por %p512, %p513
    %p515 = scmp.ne.s32.totalorder %s507, %s509
    %p516 = scmp.eq.s32.totalorder %s90, 1
    %p517 = por %p515, %p516
    %p518 = scmp.ne.s32.totalorder %s509, %s510
    %p519 = scmp.eq.s32.totalorder %s90, 0
    %p520 = por %p518, %p519
    %p521 = scmp.ne.s32.totalorder %s509, %s510
    %p522 = scmp.eq.s32.totalorder %s91, 1
    %p523 = por %p521, %p522
    %p525 = scmp.ne.s32.totalorder %s510, %s524
    %p526 = scmp.eq.s32.totalorder %s91, 0
    %p527 = por %p525, %p526
    %s529 = sadd.s32 %s528, 1
    %p532 = scmp.eq.s32.totalorder %s85, 1
    %p533 = scmp.ne.s32.totalorder %s528, %s530
    %p534 = scmp.eq.s32.totalorder %s85, 0
    %p535 = por %p533, %p534
    %p536 = scmp.ne.s32.totalorder %s528, %s530
    %p537 = scmp.eq.s32.totalorder %s90, 1
    %p538 = por %p536, %p537
    %p539 = scmp.ne.s32.totalorder %s530, %s531
    %p540 = scmp.eq.s32.totalorder %s90, 0
    %p541 = por %p539, %p540
    %p542 = scmp.ne.s32.totalorder %s530, %s531
    %p543 = scmp.eq.s32.totalorder %s91, 1
    %p544 = por %p542, %p543
    %p546 = scmp.ne.s32.totalorder %s531, %s545
    %p547 = scmp.eq.s32.totalorder %s91, 0
    %p548 = por %p546, %p547
    %s550 = sadd.s32 %s549, 1
    %p553 = scmp.eq.s32.totalorder %s85, 1
    %p554 = scmp.ne.s32.totalorder %s549, %s551
    %p555 = scmp.eq.s32.totalorder %s85, 0
    %p556 = por %p554, %p555
    %p557 = scmp.ne.s32.totalorder %s549, %s551
    %p558 = scmp.eq.s32.totalorder %s90, 1
    %p559 = por %p557, %p558
    %p560 = scmp.ne.s32.totalorder %s551, %s552
    %p561 = scmp.eq.s32.totalorder %s90, 0
    %p562 = por %p560, %p561
    %p563 = scmp.ne.s32.totalorder %s551, %s552
    %p564 = scmp.eq.s32.totalorder %s91, 1
    %p565 = por %p563, %p564
    %p567 = scmp.ne.s32.totalorder %s552, %s566
    %p568 = scmp.eq.s32.totalorder %s91, 0
    %p569 = por %p567, %p568
    %s571 = sadd.s32 %s570, 1
    %p574 = scmp.eq.s32.totalorder %s85, 1
    %p575 = scmp.ne.s32.totalorder %s570, %s572
    %p576 = scmp.eq.s32.totalorder %s85, 0
    %p577 = por %p575, %p576
    %p578 = scmp.ne.s32.totalorder %s570, %s572
    %p579 = scmp.eq.s32.totalorder %s90, 1
    %p580 = por %p578, %p579
    %p581 = scmp.ne.s32.totalorder %s572, %s573
    %p582 = scmp.eq.s32.totalorder %s90, 0
    %p583 = por %p581, %p582
    %p584 = scmp.ne.s32.totalorder %s572, %s573
    %p585 = scmp.eq.s32.totalorder %s91, 1
    %p586 = por %p584, %p585
    %p588 = scmp.ne.s32.totalorder %s573, %s587
    %p589 = scmp.eq.s32.totalorder %s91, 0
    %p590 = por %p588, %p589
    %s592 = sadd.s32 %s591, 1
    %p595 = scmp.eq.s32.totalorder %s85, 1
    %p596 = scmp.ne.s32.totalorder %s591, %s593
    %p597 = scmp.eq.s32.totalorder %s85, 0
    %p598 = por %p596, %p597
    %p599 = scmp.ne.s32.totalorder %s591, %s593
    %p600 = scmp.eq.s32.totalorder %s90, 1
    %p601 = por %p599, %p600
    %p602 = scmp.ne.s32.totalorder %s593, %s594
    %p603 = scmp.eq.s32.totalorder %s90, 0
    %p604 = por %p602, %p603
    %p605 = scmp.ne.s32.totalorder %s593, %s594
    %p606 = scmp.eq.s32.totalorder %s91, 1
    %p607 = por %p605, %p606
    %p609 = scmp.ne.s32.totalorder %s594, %s608
    %p610 = scmp.eq.s32.totalorder %s91, 0
    %p611 = por %p609, %p610
    %s613 = sadd.s32 %s612, 1
    %p616 = scmp.eq.s32.totalorder %s85, 1
    %p617 = scmp.ne.s32.totalorder %s612, %s614
    %p618 = scmp.eq.s32.totalorder %s85, 0
    %p619 = por %p617, %p618
    %p620 = scmp.ne.s32.totalorder %s612, %s614
    %p621 = scmp.eq.s32.totalorder %s90, 1
    %p622 = por %p620, %p621
    %p623 = scmp.ne.s32.totalorder %s614, %s615
    %p624 = scmp.eq.s32.totalorder %s90, 0
    %p625 = por %p623, %p624
    %p626 = scmp.ne.s32.totalorder %s614, %s615
    %p627 = scmp.eq.s32.totalorder %s91, 1
    %p628 = por %p626, %p627
    %p630 = scmp.ne.s32.totalorder %s615, %s629
    %p631 = scmp.eq.s32.totalorder %s91, 0
    %p632 = por %p630, %p631
    %s634 = sadd.s32 %s633, 1
    %p637 = scmp.eq.s32.totalorder %s85, 1
    %p638 = scmp.ne.s32.totalorder %s633, %s635
    %p639 = scmp.eq.s32.totalorder %s85, 0
    %p640 = por %p638, %p639
    %p641 = scmp.ne.s32.totalorder %s633, %s635
    %p642 = scmp.eq.s32.totalorder %s90, 1
    %p643 = por %p641, %p642
    %p644 = scmp.ne.s32.totalorder %s635, %s636
    %p645 = scmp.eq.s32.totalorder %s90, 0
    %p646 = por %p644, %p645
    %p647 = scmp.ne.s32.totalorder %s635, %s636
    %p648 = scmp.eq.s32.totalorder %s91, 1
    %p649 = por %p647, %p648
    %p651 = scmp.ne.s32.totalorder %s636, %s650
    %p652 = scmp.eq.s32.totalorder %s91, 0
    %p653 = por %p651, %p652
    %s655 = sadd.s32 %s654, 1
    %p658 = scmp.eq.s32.totalorder %s85, 1
    %p659 = scmp.ne.s32.totalorder %s654, %s656
    %p660 = scmp.eq.s32.totalorder %s85, 0
    %p661 = por %p659, %p660
    %p662 = scmp.ne.s32.totalorder %s654, %s656
    %p663 = scmp.eq.s32.totalorder %s90, 1
    %p664 = por %p662, %p663
    %p665 = scmp.ne.s32.totalorder %s656, %s657
    %p666 = scmp.eq.s32.totalorder %s90, 0
    %p667 = por %p665, %p666
    %p668 = scmp.ne.s32.totalorder %s656, %s657
    %p669 = scmp.eq.s32.totalorder %s91, 1
    %p670 = por %p668, %p669
    %p672 = scmp.ne.s32.totalorder %s657, %s671
    %p673 = scmp.eq.s32.totalorder %s91, 0
    %p674 = por %p672, %p673
    %s676 = sadd.s32 %s675, 1
    %p679 = scmp.eq.s32.totalorder %s85, 1
    %p680 = scmp.ne.s32.totalorder %s675, %s677
    %p681 = scmp.eq.s32.totalorder %s85, 0
    %p682 = por %p680, %p681
    %p683 = scmp.ne.s32.totalorder %s675, %s677
    %p684 = scmp.eq.s32.totalorder %s90, 1
    %p685 = por %p683, %p684
    %p686 = scmp.ne.s32.totalorder %s677, %s678
    %p687 = scmp.eq.s32.totalorder %s90, 0
    %p688 = por %p686, %p687
    %p689 = scmp.ne.s32.totalorder %s677, %s678
    %p690 = scmp.eq.s32.totalorder %s91, 1
    %p691 = por %p689, %p690
    %p693 = scmp.ne.s32.totalorder %s678, %s692
    %p694 = scmp.eq.s32.totalorder %s91, 0
    %p695 = por %p693, %p694
    %s697 = sadd.s32 %s696, 1
    %p700 = scmp.eq.s32.totalorder %s85, 1
    %p701 = scmp.ne.s32.totalorder %s696, %s698
    %p702 = scmp.eq.s32.totalorder %s85, 0
    %p703 = por %p701, %p702
    %p704 = scmp.ne.s32.totalorder %s696, %s698
    %p705 = scmp.eq.s32.totalorder %s90, 1
    %p706 = por %p704, %p705
    %p707 = scmp.ne.s32.totalorder %s698, %s699
    %p708 = scmp.eq.s32.totalorder %s90, 0
    %p709 = por %p707, %p708
    %p710 = scmp.ne.s32.totalorder %s698, %s699
    %p711 = scmp.eq.s32.totalorder %s91, 1
    %p712 = por %p710, %p711
    %p714 = scmp.ne.s32.totalorder %s699, %s713
    %p715 = scmp.eq.s32.totalorder %s91, 0
    %p716 = por %p714, %p715
    %s718 = sadd.s32 %s717, 1
    %p721 = scmp.eq.s32.totalorder %s85, 1
    %p722 = scmp.ne.s32.totalorder %s717, %s719
    %p723 = scmp.eq.s32.totalorder %s85, 0
    %p724 = por %p722, %p723
    %p725 = scmp.ne.s32.totalorder %s717, %s719
    %p726 = scmp.eq.s32.totalorder %s90, 1
    %p727 = por %p725, %p726
    %p728 = scmp.ne.s32.totalorder %s719, %s720
    %p729 = scmp.eq.s32.totalorder %s90, 0
    %p730 = por %p728, %p729
    %p731 = scmp.ne.s32.totalorder %s719, %s720
    %p732 = scmp.eq.s32.totalorder %s91, 1
    %p733 = por %p731, %p732
    %p735 = scmp.ne.s32.totalorder %s720, %s734
    %p736 = scmp.eq.s32.totalorder %s91, 0
    %p737 = por %p735, %p736
    %s739 = sadd.s32 %s738, 1
    %p742 = scmp.eq.s32.totalorder %s85, 1
    %p743 = scmp.ne.s32.totalorder %s738, %s740
    %p744 = scmp.eq.s32.totalorder %s85, 0
    %p745 = por %p743, %p744
    %p746 = scmp.ne.s32.totalorder %s738, %s740
    %p747 = scmp.eq.s32.totalorder %s90, 1
    %p748 = por %p746, %p747
    %p749 = scmp.ne.s32.totalorder %s740, %s741
    %p750 = scmp.eq.s32.totalorder %s90, 0
    %p751 = por %p749, %p750
    %p752 = scmp.ne.s32.totalorder %s740, %s741
    %p753 = scmp.eq.s32.totalorder %s91, 1
    %p754 = por %p752, %p753
    %p756 = scmp.ne.s32.totalorder %s741, %s755
    %p757 = scmp.eq.s32.totalorder %s91, 0
    %p758 = por %p756, %p757
    %s760 = sadd.s32 %s759, 1
    %p763 = scmp.eq.s32.totalorder %s85, 1
    %p764 = scmp.ne.s32.totalorder %s759, %s761
    %p765 = scmp.eq.s32.totalorder %s85, 0
    %p766 = por %p764, %p765
    %p767 = scmp.ne.s32.totalorder %s759, %s761
    %p768 = scmp.eq.s32.totalorder %s90, 1
    %p769 = por %p767, %p768
    %p770 = scmp.ne.s32.totalorder %s761, %s762
    %p771 = scmp.eq.s32.totalorder %s90, 0
    %p772 = por %p770, %p771
    %p773 = scmp.ne.s32.totalorder %s761, %s762
    %p774 = scmp.eq.s32.totalorder %s91, 1
    %p775 = por %p773, %p774
    %p777 = scmp.ne.s32.totalorder %s762, %s776
    %p778 = scmp.eq.s32.totalorder %s91, 0
    %p779 = por %p777, %p778
    %s781 = sadd.s32 %s780, 1
    %p784 = scmp.eq.s32.totalorder %s85, 1
    %p785 = scmp.ne.s32.totalorder %s780, %s782
    %p786 = scmp.eq.s32.totalorder %s85, 0
    %p787 = por %p785, %p786
    %p788 = scmp.ne.s32.totalorder %s780, %s782
    %p789 = scmp.eq.s32.totalorder %s90, 1
    %p790 = por %p788, %p789
    %p791 = scmp.ne.s32.totalorder %s782, %s783
    %p792 = scmp.eq.s32.totalorder %s90, 0
    %p793 = por %p791, %p792
    %p794 = scmp.ne.s32.totalorder %s782, %s783
    %p795 = scmp.eq.s32.totalorder %s91, 1
    %p796 = por %p794, %p795
    %p798 = scmp.ne.s32.totalorder %s783, %s797
    %p799 = scmp.eq.s32.totalorder %s91, 0
    %p800 = por %p798, %p799
    %s802 = sadd.s32 %s801, 1
    %p805 = scmp.eq.s32.totalorder %s85, 1
    %p806 = scmp.ne.s32.totalorder %s801, %s803
    %p807 = scmp.eq.s32.totalorder %s85, 0
    %p808 = por %p806, %p807
    %p809 = scmp.ne.s32.totalorder %s801, %s803
    %p810 = scmp.eq.s32.totalorder %s90, 1
    %p811 = por %p809, %p810
    %p812 = scmp.ne.s32.totalorder %s803, %s804
    %p813 = scmp.eq.s32.totalorder %s90, 0
    %p814 = por %p812, %p813
    %p815 = scmp.ne.s32.totalorder %s803, %s804
    %p816 = scmp.eq.s32.totalorder %s91, 1
    %p817 = por %p815, %p816
    %p819 = scmp.ne.s32.totalorder %s804, %s818
    %p820 = scmp.eq.s32.totalorder %s91, 0
    %p821 = por %p819, %p820
    %s823 = sadd.s32 %s822, 1
    %p826 = scmp.eq.s32.totalorder %s85, 1
    %p827 = scmp.ne.s32.totalorder %s822, %s824
    %p828 = scmp.eq.s32.totalorder %s85, 0
    %p829 = por %p827, %p828
    %p830 = scmp.ne.s32.totalorder %s822, %s824
    %p831 = scmp.eq.s32.totalorder %s90, 1
    %p832 = por %p830, %p831
    %p833 = scmp.ne.s32.totalorder %s824, %s825
    %p834 = scmp.eq.s32.totalorder %s90, 0
    %p835 = por %p833, %p834
    %p836 = scmp.ne.s32.totalorder %s824, %s825
    %p837 = scmp.eq.s32.totalorder %s91, 1
    %p838 = por %p836, %p837
    %p840 = scmp.ne.s32.totalorder %s825, %s839
    %p841 = scmp.eq.s32.totalorder %s91, 0
    %p842 = por %p840, %p841
    %s844 = sadd.s32 %s843, 1
    %p847 = scmp.eq.s32.totalorder %s85, 1
    %p848 = scmp.ne.s32.totalorder %s843, %s845
    %p849 = scmp.eq.s32.totalorder %s85, 0
    %p850 = por %p848, %p849
    %p851 = scmp.ne.s32.totalorder %s843, %s845
    %p852 = scmp.eq.s32.totalorder %s90, 1
    %p853 = por %p851, %p852
    %p854 = scmp.ne.s32.totalorder %s845, %s846
    %p855 = scmp.eq.s32.totalorder %s90, 0
    %p856 = por %p854, %p855
    %p857 = scmp.ne.s32.totalorder %s845, %s846
    %p858 = scmp.eq.s32.totalorder %s91, 1
    %p859 = por %p857, %p858
    %p861 = scmp.ne.s32.totalorder %s846, %s860
    %p862 = scmp.eq.s32.totalorder %s91, 0
    %p863 = por %p861, %p862
    %s865 = sadd.s32 %s864, 1
    %p868 = scmp.eq.s32.totalorder %s85, 1
    %p869 = scmp.ne.s32.totalorder %s864, %s866
    %p870 = scmp.eq.s32.totalorder %s85, 0
    %p871 = por %p869, %p870
    %p872 = scmp.ne.s32.totalorder %s864, %s866
    %p873 = scmp.eq.s32.totalorder %s90, 1
    %p874 = por %p872, %p873
    %p875 = scmp.ne.s32.totalorder %s866, %s867
    %p876 = scmp.eq.s32.totalorder %s90, 0
    %p877 = por %p875, %p876
    %p878 = scmp.ne.s32.totalorder %s866, %s867
    %p879 = scmp.eq.s32.totalorder %s91, 1
    %p880 = por %p878, %p879
    %p882 = scmp.ne.s32.totalorder %s867, %s881
    %p883 = scmp.eq.s32.totalorder %s91, 0
    %p884 = por %p882, %p883
    %s886 = sadd.s32 %s885, 1
    %p889 = scmp.eq.s32.totalorder %s85, 1
    %p890 = scmp.ne.s32.totalorder %s885, %s887
    %p891 = scmp.eq.s32.totalorder %s85, 0
    %p892 = por %p890, %p891
    %p893 = scmp.ne.s32.totalorder %s885, %s887
    %p894 = scmp.eq.s32.totalorder %s90, 1
    %p895 = por %p893, %p894
    %p896 = scmp.ne.s32.totalorder %s887, %s888
    %p897 = scmp.eq.s32.totalorder %s90, 0
    %p898 = por %p896, %p897
    %p899 = scmp.ne.s32.totalorder %s887, %s888
    %p900 = scmp.eq.s32.totalorder %s91, 1
    %p901 = por %p899, %p900
    %p903 = scmp.ne.s32.totalorder %s888, %s902
    %p904 = scmp.eq.s32.totalorder %s91, 0
    %p905 = por %p903, %p904
    %s907 = sadd.s32 %s906, 1
    %p910 = scmp.eq.s32.totalorder %s85, 1
    %p911 = scmp.ne.s32.totalorder %s906, %s908
    %p912 = scmp.eq.s32.totalorder %s85, 0
    %p913 = por %p911, %p912
    %p914 = scmp.ne.s32.totalorder %s906, %s908
    %p915 = scmp.eq.s32.totalorder %s90, 1
    %p916 = por %p914, %p915
    %p917 = scmp.ne.s32.totalorder %s908, %s909
    %p918 = scmp.eq.s32.totalorder %s90, 0
    %p919 = por %p917, %p918
    %p920 = scmp.ne.s32.totalorder %s908, %s909
    %p921 = scmp.eq.s32.totalorder %s91, 1
    %p922 = por %p920, %p921
    %p924 = scmp.ne.s32.totalorder %s909, %s923
    %p925 = scmp.eq.s32.totalorder %s91, 0
    %p926 = por %p924, %p925
    %s927 = ssub.s32 %s85, %s92
    %p928 = scmp.eq.s32.totalorder %s927, 0
    %s930 = sadd.s32 %s929, 1
    %s931 = scalar_select %p928, %s929, %s930
    %p934 = pneg %p928
    %p935 = scmp.eq.s32.totalorder %s85, 1
    %p936 = por %p934, %p935
    %p937 = scmp.ne.s32.totalorder %s929, %s932
    %p938 = scmp.eq.s32.totalorder %s85, 0
    %p939 = por %p937, %p938
    %p940 = scmp.ne.s32.totalorder %s929, %s932
    %p941 = scmp.eq.s32.totalorder %s90, 1
    %p942 = por %p940, %p941
    %p943 = scmp.ne.s32.totalorder %s932, %s933
    %p944 = scmp.eq.s32.totalorder %s90, 0
    %p945 = por %p943, %p944
    %p946 = scmp.ne.s32.totalorder %s932, %s933
    %p947 = scmp.eq.s32.totalorder %s91, 1
    %p948 = por %p946, %p947
    %p950 = scmp.ne.s32.totalorder %s933, %s949
    %p951 = scmp.eq.s32.totalorder %s91, 0
    %p952 = por %p950, %p951
    %p953 = scmp.le.s32.totalorder 1, %s85
    %p954 = scmp.lt.s32.totalorder %s85, 3
    %p955 = pnand %p953, %p954
    %p956 = pneg %p955
    // Predicated region
    $region9: #{hubert_ctc_forward.1} parent=5 // pred_check
      _
    $region10: #{hubert_ctc_forward.1} parent=5 // pred_check_branch
      %958 = sbr.rel (%p955) target = $region12
    $region11: #{hubert_ctc_forward.1} parent=5 // pred_region
      %s959 = ssub.s32 %s85, 1
      // Predicated region
      $region13: #{hubert_ctc_forward.1} parent=11 // pred_check
        %p960 = pneg %p184
      $region14: #{hubert_ctc_forward.1} parent=11 // pred_check_branch
        %962 = sbr.rel (%p960) target = $region16
      $region15: #{hubert_ctc_forward.1} parent=11 // pred_region
        _
      $region16: #{hubert_ctc_forward.1} parent=11 // pred_fallthru
        _
      // Predicated region
      $region17: #{hubert_ctc_forward.1} parent=11 // pred_check
        %p963 = pneg %p205
      $region18: #{hubert_ctc_forward.1} parent=11 // pred_check_branch
        %965 = sbr.rel (%p963) target = $region20
      $region19: #{hubert_ctc_forward.1} parent=11 // pred_region
        _
      $region20: #{hubert_ctc_forward.1} parent=11 // pred_fallthru
        _
      // Predicated region
      $region21: #{hubert_ctc_forward.1} parent=11 // pred_check
        %p966 = pneg %p226
      $region22: #{hubert_ctc_forward.1} parent=11 // pred_check_branch
        %968 = sbr.rel (%p966) target = $region24
      $region23: #{hubert_ctc_forward.1} parent=11 // pred_region
        _
      $region24: #{hubert_ctc_forward.1} parent=11 // pred_fallthru
        _
      // Predicated region
      $region25: #{hubert_ctc_forward.1} parent=11 // pred_check
        %p969 = pneg %p247
      $region26: #{hubert_ctc_forward.1} parent=11 // pred_check_branch
        %971 = sbr.rel (%p969) target = $region28
      $region27: #{hubert_ctc_forward.1} parent=11 // pred_region
        _
      $region28: #{hubert_ctc_forward.1} parent=11 // pred_fallthru
        _
      // Predicated region
      $region29: #{hubert_ctc_forward.1} parent=11 // pred_check
        %p972 = pneg %p268
      $region30: #{hubert_ctc_forward.1} parent=11 // pred_check_branch
        %974 = sbr.rel (%p972) target = $region32
      $region31: #{hubert_ctc_forward.1} parent=11 // pred_region
        _
      $region32: #{hubert_ctc_forward.1} parent=11 // pred_fallthru
        _
      // Predicated region
      $region33: #{hubert_ctc_forward.1} parent=11 // pred_check
        %p975 = pneg %p289
      $region34: #{hubert_ctc_forward.1} parent=11 // pred_check_branch
        %977 = sbr.rel (%p975) target = $region36
      $region35: #{hubert_ctc_forward.1} parent=11 // pred_region
        _
      $region36: #{hubert_ctc_forward.1} parent=11 // pred_fallthru
        _
      // Predicated region
      $region37: #{hubert_ctc_forward.1} parent=11 // pred_check
        %p978 = pneg %p310
      $region38: #{hubert_ctc_forward.1} parent=11 // pred_check_branch
        %980 = sbr.rel (%p978) target = $region40
      $region39: #{hubert_ctc_forward.1} parent=11 // pred_region
        _
      $region40: #{hubert_ctc_forward.1} parent=11 // pred_fallthru
        _
      // Predicated region
      $region41: #{hubert_ctc_forward.1} parent=11 // pred_check
        %p981 = pneg %p331
      $region42: #{hubert_ctc_forward.1} parent=11 // pred_check_branch
        %983 = sbr.rel (%p981) target = $region44
      $region43: #{hubert_ctc_forward.1} parent=11 // pred_region
        _
      $region44: #{hubert_ctc_forward.1} parent=11 // pred_fallthru
        _
      // Predicated region
      $region45: #{hubert_ctc_forward.1} parent=11 // pred_check
        %p984 = pneg %p352
      $region46: #{hubert_ctc_forward.1} parent=11 // pred_check_branch
        %986 = sbr.rel (%p984) target = $region48
      $region47: #{hubert_ctc_forward.1} parent=11 // pred_region
        _
      $region48: #{hubert_ctc_forward.1} parent=11 // pred_fallthru
        _
      // Predicated region
      $region49: #{hubert_ctc_forward.1} parent=11 // pred_check
        %p987 = pneg %p373
      $region50: #{hubert_ctc_forward.1} parent=11 // pred_check_branch
        %989 = sbr.rel (%p987) target = $region52
      $region51: #{hubert_ctc_forward.1} parent=11 // pred_region
        _
      $region52: #{hubert_ctc_forward.1} parent=11 // pred_fallthru
        _
      // Predicated region
      $region53: #{hubert_ctc_forward.1} parent=11 // pred_check
        %p990 = pneg %p394
      $region54: #{hubert_ctc_forward.1} parent=11 // pred_check_branch
        %992 = sbr.rel (%p990) target = $region56
      $region55: #{hubert_ctc_forward.1} parent=11 // pred_region
        _
      $region56: #{hubert_ctc_forward.1} parent=11 // pred_fallthru
        _
      // Predicated region
      $region57: #{hubert_ctc_forward.1} parent=11 // pred_check
        %p993 = pneg %p415
      $region58: #{hubert_ctc_forward.1} parent=11 // pred_check_branch
        %995 = sbr.rel (%p993) target = $region60
      $region59: #{hubert_ctc_forward.1} parent=11 // pred_region
        _
      $region60: #{hubert_ctc_forward.1} parent=11 // pred_fallthru
        _
      // Predicated region
      $region61: #{hubert_ctc_forward.1} parent=11 // pred_check
        %p996 = pneg %p436
      $region62: #{hubert_ctc_forward.1} parent=11 // pred_check_branch
        %998 = sbr.rel (%p996) target = $region64
      $region63: #{hubert_ctc_forward.1} parent=11 // pred_region
        _
      $region64: #{hubert_ctc_forward.1} parent=11 // pred_fallthru
        _
      // Predicated region
      $region65: #{hubert_ctc_forward.1} parent=11 // pred_check
        %p999 = pneg %p457
      $region66: #{hubert_ctc_forward.1} parent=11 // pred_check_branch
        %1001 = sbr.rel (%p999) target = $region68
      $region67: #{hubert_ctc_forward.1} parent=11 // pred_region
        _
      $region68: #{hubert_ctc_forward.1} parent=11 // pred_fallthru
        _
      // Predicated region
      $region69: #{hubert_ctc_forward.1} parent=11 // pred_check
        %p1002 = pneg %p478
      $region70: #{hubert_ctc_forward.1} parent=11 // pred_check_branch
        %1004 = sbr.rel (%p1002) target = $region72
      $region71: #{hubert_ctc_forward.1} parent=11 // pred_region
        _
      $region72: #{hubert_ctc_forward.1} parent=11 // pred_fallthru
        _
      // Predicated region
      $region73: #{hubert_ctc_forward.1} parent=11 // pred_check
        %p1005 = pneg %p499
      $region74: #{hubert_ctc_forward.1} parent=11 // pred_check_branch
        %1007 = sbr.rel (%p1005) target = $region76
      $region75: #{hubert_ctc_forward.1} parent=11 // pred_region
        _
      $region76: #{hubert_ctc_forward.1} parent=11 // pred_fallthru
        _
      // Predicated region
      $region77: #{hubert_ctc_forward.1} parent=11 // pred_check
        %p1008 = pneg %p520
      $region78: #{hubert_ctc_forward.1} parent=11 // pred_check_branch
        %1010 = sbr.rel (%p1008) target = $region80
      $region79: #{hubert_ctc_forward.1} parent=11 // pred_region
        _
      $region80: #{hubert_ctc_forward.1} parent=11 // pred_fallthru
        _
      // Predicated region
      $region81: #{hubert_ctc_forward.1} parent=11 // pred_check
        %p1011 = pneg %p541
      $region82: #{hubert_ctc_forward.1} parent=11 // pred_check_branch
        %1013 = sbr.rel (%p1011) target = $region84
      $region83: #{hubert_ctc_forward.1} parent=11 // pred_region
        _
      $region84: #{hubert_ctc_forward.1} parent=11 // pred_fallthru
        _
      // Predicated region
      $region85: #{hubert_ctc_forward.1} parent=11 // pred_check
        %p1014 = pneg %p562
      $region86: #{hubert_ctc_forward.1} parent=11 // pred_check_branch
        %1016 = sbr.rel (%p1014) target = $region88
      $region87: #{hubert_ctc_forward.1} parent=11 // pred_region
        _
      $region88: #{hubert_ctc_forward.1} parent=11 // pred_fallthru
        _
      // Predicated region
      $region89: #{hubert_ctc_forward.1} parent=11 // pred_check
        %p1017 = pneg %p583
      $region90: #{hubert_ctc_forward.1} parent=11 // pred_check_branch
        %1019 = sbr.rel (%p1017) target = $region92
      $region91: #{hubert_ctc_forward.1} parent=11 // pred_region
        _
      $region92: #{hubert_ctc_forward.1} parent=11 // pred_fallthru
        _
      // Predicated region
      $region93: #{hubert_ctc_forward.1} parent=11 // pred_check
        %p1020 = pneg %p604
      $region94: #{hubert_ctc_forward.1} parent=11 // pred_check_branch
        %1022 = sbr.rel (%p1020) target = $region96
      $region95: #{hubert_ctc_forward.1} parent=11 // pred_region
        _
      $region96: #{hubert_ctc_forward.1} parent=11 // pred_fallthru
        _
      // Predicated region
      $region97: #{hubert_ctc_forward.1} parent=11 // pred_check
        %p1023 = pneg %p625
      $region98: #{hubert_ctc_forward.1} parent=11 // pred_check_branch
        %1025 = sbr.rel (%p1023) target = $region100
      $region99: #{hubert_ctc_forward.1} parent=11 // pred_region
        _
      $region100: #{hubert_ctc_forward.1} parent=11 // pred_fallthru
        _
      // Predicated region
      $region101: #{hubert_ctc_forward.1} parent=11 // pred_check
        %p1026 = pneg %p646
      $region102: #{hubert_ctc_forward.1} parent=11 // pred_check_branch
        %1028 = sbr.rel (%p1026) target = $region104
      $region103: #{hubert_ctc_forward.1} parent=11 // pred_region
        _
      $region104: #{hubert_ctc_forward.1} parent=11 // pred_fallthru
        _
      // Predicated region
      $region105: #{hubert_ctc_forward.1} parent=11 // pred_check
        %p1029 = pneg %p667
      $region106: #{hubert_ctc_forward.1} parent=11 // pred_check_branch
        %1031 = sbr.rel (%p1029) target = $region108
      $region107: #{hubert_ctc_forward.1} parent=11 // pred_region
        _
      $region108: #{hubert_ctc_forward.1} parent=11 // pred_fallthru
        _
      // Predicated region
      $region109: #{hubert_ctc_forward.1} parent=11 // pred_check
        %p1032 = pneg %p688
      $region110: #{hubert_ctc_forward.1} parent=11 // pred_check_branch
        %1034 = sbr.rel (%p1032) target = $region112
      $region111: #{hubert_ctc_forward.1} parent=11 // pred_region
        _
      $region112: #{hubert_ctc_forward.1} parent=11 // pred_fallthru
        _
      // Predicated region
      $region113: #{hubert_ctc_forward.1} parent=11 // pred_check
        %p1035 = pneg %p709
      $region114: #{hubert_ctc_forward.1} parent=11 // pred_check_branch
        %1037 = sbr.rel (%p1035) target = $region116
      $region115: #{hubert_ctc_forward.1} parent=11 // pred_region
        _
      $region116: #{hubert_ctc_forward.1} parent=11 // pred_fallthru
        _
      // Predicated region
      $region117: #{hubert_ctc_forward.1} parent=11 // pred_check
        %p1038 = pneg %p730
      $region118: #{hubert_ctc_forward.1} parent=11 // pred_check_branch
        %1040 = sbr.rel (%p1038) target = $region120
      $region119: #{hubert_ctc_forward.1} parent=11 // pred_region
        _
      $region120: #{hubert_ctc_forward.1} parent=11 // pred_fallthru
        _
      // Predicated region
      $region121: #{hubert_ctc_forward.1} parent=11 // pred_check
        %p1041 = pneg %p751
      $region122: #{hubert_ctc_forward.1} parent=11 // pred_check_branch
        %1043 = sbr.rel (%p1041) target = $region124
      $region123: #{hubert_ctc_forward.1} parent=11 // pred_region
        _
      $region124: #{hubert_ctc_forward.1} parent=11 // pred_fallthru
        _
      // Predicated region
      $region125: #{hubert_ctc_forward.1} parent=11 // pred_check
        %p1044 = pneg %p772
      $region126: #{hubert_ctc_forward.1} parent=11 // pred_check_branch
        %1046 = sbr.rel (%p1044) target = $region128
      $region127: #{hubert_ctc_forward.1} parent=11 // pred_region
        _
      $region128: #{hubert_ctc_forward.1} parent=11 // pred_fallthru
        _
      // Predicated region
      $region129: #{hubert_ctc_forward.1} parent=11 // pred_check
        %p1047 = pneg %p793
      $region130: #{hubert_ctc_forward.1} parent=11 // pred_check_branch
        %1049 = sbr.rel (%p1047) target = $region132
      $region131: #{hubert_ctc_forward.1} parent=11 // pred_region
        _
      $region132: #{hubert_ctc_forward.1} parent=11 // pred_fallthru
        _
      // Predicated region
      $region133: #{hubert_ctc_forward.1} parent=11 // pred_check
        %p1050 = pneg %p814
      $region134: #{hubert_ctc_forward.1} parent=11 // pred_check_branch
        %1052 = sbr.rel (%p1050) target = $region136
      $region135: #{hubert_ctc_forward.1} parent=11 // pred_region
        _
      $region136: #{hubert_ctc_forward.1} parent=11 // pred_fallthru
        _
      // Predicated region
      $region137: #{hubert_ctc_forward.1} parent=11 // pred_check
        %p1053 = pneg %p835
      $region138: #{hubert_ctc_forward.1} parent=11 // pred_check_branch
        %1055 = sbr.rel (%p1053) target = $region140
      $region139: #{hubert_ctc_forward.1} parent=11 // pred_region
        _
      $region140: #{hubert_ctc_forward.1} parent=11 // pred_fallthru
        _
      // Predicated region
      $region141: #{hubert_ctc_forward.1} parent=11 // pred_check
        %p1056 = pneg %p856
      $region142: #{hubert_ctc_forward.1} parent=11 // pred_check_branch
        %1058 = sbr.rel (%p1056) target = $region144
      $region143: #{hubert_ctc_forward.1} parent=11 // pred_region
        _
      $region144: #{hubert_ctc_forward.1} parent=11 // pred_fallthru
        _
      // Predicated region
      $region145: #{hubert_ctc_forward.1} parent=11 // pred_check
        %p1059 = pneg %p877
      $region146: #{hubert_ctc_forward.1} parent=11 // pred_check_branch
        %1061 = sbr.rel (%p1059) target = $region148
      $region147: #{hubert_ctc_forward.1} parent=11 // pred_region
        _
      $region148: #{hubert_ctc_forward.1} parent=11 // pred_fallthru
        _
      // Predicated region
      $region149: #{hubert_ctc_forward.1} parent=11 // pred_check
        %p1062 = pneg %p898
      $region150: #{hubert_ctc_forward.1} parent=11 // pred_check_branch
        %1064 = sbr.rel (%p1062) target = $region152
      $region151: #{hubert_ctc_forward.1} parent=11 // pred_region
        _
      $region152: #{hubert_ctc_forward.1} parent=11 // pred_fallthru
        _
      // Predicated region
      $region153: #{hubert_ctc_forward.1} parent=11 // pred_check
        %p1065 = pneg %p919
      $region154: #{hubert_ctc_forward.1} parent=11 // pred_check_branch
        %1067 = sbr.rel (%p1065) target = $region156
      $region155: #{hubert_ctc_forward.1} parent=11 // pred_region
        _
      $region156: #{hubert_ctc_forward.1} parent=11 // pred_fallthru
        _
    $region12: #{hubert_ctc_forward.1} parent=5 // pred_fallthru
      _
    %p1068 = scmp.lt.s32.totalorder %s85, 2
    // Predicated region
    $region157: #{hubert_ctc_forward.1} parent=5 // pred_check
      %p1069 = pneg %p1068
    $region158: #{hubert_ctc_forward.1} parent=5 // pred_check_branch
      %1071 = sbr.rel (%p1069) target = $region160
    $region159: #{hubert_ctc_forward.1} parent=5 // pred_region
      // Predicated region
      $region161: #{hubert_ctc_forward.1} parent=159 // pred_check
        %p1072 = pneg %p105
      $region162: #{hubert_ctc_forward.1} parent=159 // pred_check_branch
        %1074 = sbr.rel (%p1072) target = $region164
      $region163: #{hubert_ctc_forward.1} parent=159 // pred_region
        %s1075 = smul.u32 2, %s85
        %p1076 = scmp.lt.s32.totalorder %s1075, 3
        %s1077 = scalar_select %p1076, %s1075, 3
        %s1078 = smul.addr %s1077, 8
        %s1079 = scalar_lea.vmem %s1, %s1078
        %s1080 = smul.u32 2, %s85
      $region164: #{hubert_ctc_forward.1} parent=159 // pred_fallthru
        _
      // Predicated region
      $region165: #{hubert_ctc_forward.1} parent=159 // pred_check
        %p1081 = pneg %p131
      $region166: #{hubert_ctc_forward.1} parent=159 // pred_check_branch
        %1083 = sbr.rel (%p1081) target = $region168
      $region167: #{hubert_ctc_forward.1} parent=159 // pred_region
        %p1084 = scmp.lt.s32.totalorder %s85, 1
        %s1085 = scalar_select %p1084, %s85, 1
        %s1086 = scalar_lea.vmem %s3, %s1085
      $region168: #{hubert_ctc_forward.1} parent=159 // pred_fallthru
        _
      // Predicated region
      $region169: #{hubert_ctc_forward.1} parent=159 // pred_check
        %p1087 = pneg %p157
      $region170: #{hubert_ctc_forward.1} parent=159 // pred_check_branch
        %1089 = sbr.rel (%p1087) target = $region172
      $region171: #{hubert_ctc_forward.1} parent=159 // pred_region
        %s1090 = smul.u32 2, %s85
        %p1091 = scmp.lt.s32.totalorder %s1090, 3
        %s1092 = scalar_select %p1091, %s1090, 3
        %s1093 = smul.addr %s1092, 8
        %s1094 = scalar_lea.vmem %s5, %s1093
        %s1095 = smul.u32 2, %s85
      $region172: #{hubert_ctc_forward.1} parent=159 // pred_fallthru
        _
    $region160: #{hubert_ctc_forward.1} parent=5 // pred_fallthru
      _
    %p1096 = scmp.le.s32.totalorder 1, %s85
    %p1097 = scmp.lt.s32.totalorder %s85, 3
    %p1098 = pnand %p1096, %p1097
    %p1099 = pneg %p1098
    // Predicated region
    $region173: #{hubert_ctc_forward.1} parent=5 // pred_check
      _
    $region174: #{hubert_ctc_forward.1} parent=5 // pred_check_branch
      %1101 = sbr.rel (%p1098) target = $region176
    $region175: #{hubert_ctc_forward.1} parent=5 // pred_region
      %s1102 = ssub.s32 %s85, 1
      %s1103 = smul.u32 2, %s90
      %p1104 = scmp.lt.s32.totalorder %s1103, 3
      %s1105 = scalar_select %p1104, %s1103, 3
      %s1106 = smul.addr %s1105, 8
      %s1107 = scalar_lea.vmem %s1, %s1106
      %p1108 = pneg %p111
      %p1109 = pneg %p108
      %p1110 = scmp.lt.s32.totalorder %s90, 1
      %s1111 = scalar_select %p1110, %s90, 1
      %s1112 = scalar_lea.vmem %s3, %s1111
      %p1113 = pneg %p137
      %p1114 = pneg %p134
      %s1115 = smul.u32 2, %s90
      %p1116 = scmp.lt.s32.totalorder %s1115, 3
      %s1117 = scalar_select %p1116, %s1115, 3
      %s1118 = smul.addr %s1117, 8
      %s1119 = scalar_lea.vmem %s5, %s1118
      %p1120 = pneg %p163
      %p1121 = pneg %p160
      %p1122 = pneg %p184
      %p1123 = pneg %p181
      %p1124 = pneg %p205
      %p1125 = pneg %p202
      %p1126 = pneg %p226
      %p1127 = pneg %p223
      %p1128 = pneg %p247
      %p1129 = pneg %p244
      %p1130 = pneg %p268
      %p1131 = pneg %p265
      %p1132 = pneg %p289
      %p1133 = pneg %p286
      %p1134 = pneg %p310
      %p1135 = pneg %p307
      %p1136 = pneg %p331
      %p1137 = pneg %p328
      %p1138 = pneg %p352
      %p1139 = pneg %p349
      %p1140 = pneg %p373
      %p1141 = pneg %p370
      %p1142 = pneg %p394
      %p1143 = pneg %p391
      %p1144 = pneg %p415
      %p1145 = pneg %p412
      %p1146 = pneg %p436
      %p1147 = pneg %p433
      %p1148 = pneg %p457
      %p1149 = pneg %p454
      %p1150 = pneg %p478
      %p1151 = pneg %p475
      %p1152 = pneg %p499
      %p1153 = pneg %p496
      %p1154 = pneg %p520
      %p1155 = pneg %p517
      %p1156 = pneg %p541
      %p1157 = pneg %p538
      %p1158 = pneg %p562
      %p1159 = pneg %p559
      %p1160 = pneg %p583
      %p1161 = pneg %p580
      %p1162 = pneg %p604
      %p1163 = pneg %p601
      %p1164 = pneg %p625
      %p1165 = pneg %p622
      %p1166 = pneg %p646
      %p1167 = pneg %p643
      %p1168 = pneg %p667
      %p1169 = pneg %p664
      %p1170 = pneg %p688
      %p1171 = pneg %p685
      %p1172 = pneg %p709
      %p1173 = pneg %p706
      %p1174 = pneg %p730
      %p1175 = pneg %p727
      %p1176 = pneg %p751
      %p1177 = pneg %p748
      %p1178 = pneg %p772
      %p1179 = pneg %p769
      %p1180 = pneg %p793
      %p1181 = pneg %p790
      %p1182 = pneg %p814
      %p1183 = pneg %p811
      %p1184 = pneg %p835
      %p1185 = pneg %p832
      %p1186 = pneg %p856
      %p1187 = pneg %p853
      %p1188 = pneg %p877
      %p1189 = pneg %p874
      %p1190 = pneg %p898
      %p1191 = pneg %p895
      %p1192 = pneg %p919
      %p1193 = pneg %p916
      %p1194 = pneg %p945
      %p1195 = pneg %p942
      %s1196 = smul.u32 2, %s90
      %p1197 = scmp.lt.s32.totalorder %s1196, 3
      %s1198 = scalar_select %p1197, %s1196, 3
      %s1199 = smul.addr %s1198, 8
      %s1200 = scalar_lea.vmem %s79, %s1199
      %s1201 = smul.u32 2, %s90
      %p1202 = scmp.lt.s32.totalorder %s1201, 3
      %s1203 = scalar_select %p1202, %s1201, 3
      %s1204 = smul.addr %s1203, 8
      %s1205 = scalar_lea.vmem %s1, %s1204
      %s1206 = smul.u32 2, %s90
      %p1207 = scmp.lt.s32.totalorder %s90, 1
      %s1208 = scalar_select %p1207, %s90, 1
      %s1209 = scalar_lea.vmem %s3, %s1208
      %s1210 = smul.u32 2, %s90
      %p1211 = scmp.lt.s32.totalorder %s1210, 3
      %s1212 = scalar_select %p1211, %s1210, 3
      %s1213 = smul.addr %s1212, 8
      %s1214 = scalar_lea.vmem %s5, %s1213
      %s1215 = smul.u32 2, %s90
      %s1216 = smul.u32 2, %s90
      %p1217 = scmp.lt.s32.totalorder %s1216, 3
      %s1218 = scalar_select %p1217, %s1216, 3
      %s1219 = smul.addr %s1218, 8
      %s1220 = scalar_lea.vmem %s79, %s1219
      %s1221 = smul.u32 2, %s90
      %v1222 = vld [vmem:[%s1205] sm:$0xff]
      %v1223 = vld [vmem:[%s1205 + $0x8] sm:$0xff]
      %v1224 = vld [vmem:[%s7] sm:$0xf]
      %v1225 = vld [vmem:[%s9] sm:$0x1]
      %v1227 = vperm.slane %v1225, 0
      %vm1229 = vcmask 31744
      %v1231 = vsel %vm1229, %v1222, 0
      %v1234 = vsel %vm1229, %v1223, 0
      %vm1236 = vcmask 1043456
      %v1238 = vsel %vm1236, %v1224, 0
      %1240 = vmatpush.msra.mxu0 0.0
      %1241 = vmatpush.msra.mxu0 0.0
      %1242 = vmatpush.msra.mxu0 0.0
      %1243 = vmatpush.msra.mxu0 0.0
      %1244 = vmatpush.msra.mxu0 0.0
      %1245 = vmatpush.msra.mxu0 0.0
      %1246 = vmatpush.msra.mxu0 0.0
      %1247 = vmatpush.msra.mxu0 0.0
      %1248 = vmatpush.msra.mxu0 0.0
      %1249 = vmatpush.msra.mxu0 0.0
      %1250 = vmatpush.msra.mxu0 0.0
      %1251 = vmatpush.msra.mxu0 0.0
      %1252 = vmatpush.msra.mxu0 0.0
      %1253 = vmatpush.msra.mxu0 0.0
      %1254 = vmatpush.msra.mxu0 0.0
      %1255 = vmatpush.msra.mxu0 %v1238
      %1256 = vmatmul.f32.gmra.mxu0 %v1231
      %v1257 = vpop.f32.mrf.mxu0
      %v1258 = vadd.f32 %v1227, %v1257
      %1259 = vmatmul.f32.gmra.mxu0 %v1234
      %v1260 = vpop.f32.mrf.mxu0
      %v1261 = vadd.f32 %v1227, %v1260
      %1262 = vdwg.mxu0
      %v1263 = vmul.f32 %v1258, %v1258
      %v1264 = vmul.f32 %v1261, %v1261
      %v1265 = vmul.f32 %v1258, %v1263
      %v1266 = vmul.f32 %v1261, %v1264
      %v1267 = vmul.f32 %v1265, 0.044715
      %v1268 = vmul.f32 %v1266, 0.044715
      %v1269 = vadd.f32 %v1258, %v1267
      %v1270 = vadd.f32 %v1261, %v1268
      %v1271 = vmul.f32 %v1269, 0.7978846
      %v1272 = vmul.f32 %v1270, 0.7978846
      %v1273 = vtanh.pop %v1271
      %v1274 = vtanh.pop %v1272
      %v1275 = vadd.f32 %v1273, 1.0
      %v1276 = vadd.f32 %v1274, 1.0
      %v1277 = vmul.f32 %v1275, 0.5
      %v1278 = vmul.f32 %v1276, 0.5
      %v1279 = vmul.f32 %v1258, %v1277
      %v1280 = vmul.f32 %v1261, %v1278
      %1281 = vrot.lane.b32.xlu0 %v1222, 124
      %v1282 = vpop.permute.xlu0 %1281
      %1283 = vrot.lane.b32.xlu0 %v1223, 124
      %v1284 = vpop.permute.xlu0 %1283
      %v1285 = vsel %vm1229, %v1282, 0
      %v1287 = vsel %vm1229, %v1284, 0
      %1289 = vmatpush.msra.mxu0 0.0
      %1290 = vmatpush.msra.mxu0 0.0
      %1291 = vmatpush.msra.mxu0 0.0
      %1292 = vmatpush.msra.mxu0 0.0
      %1293 = vmatpush.msra.mxu0 0.0
      %1294 = vmatpush.msra.mxu0 0.0
      %1295 = vmatpush.msra.mxu0 0.0
      %1296 = vmatpush.msra.mxu0 0.0
      %1297 = vmatpush.msra.mxu0 0.0
      %1298 = vmatpush.msra.mxu0 0.0
      %1299 = vmatpush.msra.mxu0 0.0
      %1300 = vmatpush.msra.mxu0 0.0
      %1301 = vmatpush.msra.mxu0 0.0
      %1302 = vmatpush.msra.mxu0 0.0
      %1303 = vmatpush.msra.mxu0 0.0
      %1304 = vmatpush.msra.mxu0 %v1238
      %1305 = vmatmul.f32.gmra.mxu0 %v1285
      %v1306 = vpop.f32.mrf.mxu0
      %v1307 = vadd.f32 %v1227, %v1306
      %1308 = vmatmul.f32.gmra.mxu0 %v1287
      %v1309 = vpop.f32.mrf.mxu0
      %v1310 = vadd.f32 %v1227, %v1309
      %1311 = vdwg.mxu0
      %v1312 = vmul.f32 %v1307, %v1307
      %v1313 = vmul.f32 %v1310, %v1310
      %v1314 = vmul.f32 %v1307, %v1312
      %v1315 = vmul.f32 %v1310, %v1313
      %v1316 = vmul.f32 %v1314, 0.044715
      %v1317 = vmul.f32 %v1315, 0.044715
      %v1318 = vadd.f32 %v1307, %v1316
      %v1319 = vadd.f32 %v1310, %v1317
      %v1320 = vmul.f32 %v1318, 0.7978846
      %v1321 = vmul.f32 %v1319, 0.7978846
      %v1322 = vtanh.pop %v1320
      %v1323 = vtanh.pop %v1321
      %v1324 = vadd.f32 %v1322, 1.0
      %v1325 = vadd.f32 %v1323, 1.0
      %v1326 = vmul.f32 %v1324, 0.5
      %v1327 = vmul.f32 %v1325, 0.5
      %v1328 = vmul.f32 %v1307, %v1326
      %v1329 = vmul.f32 %v1310, %v1327
      %1332 = vrot.lane.b32.xlu0 %v1328, 16
      %v1333 = vpop.permute.xlu0 %1332
      %1334 = vrot.lane.b32.xlu0 %v1329, 16
      %v1335 = vpop.permute.xlu0 %1334
      %vm1338 = vcmask 130048
      %v1339 = vsel %vm1338, %v1279, %v1333
      %v1340 = vsel %vm1338, %v1280, %v1335
      %v1341 = vld [vmem:[%s11] sm:$0xff]
      %v1342 = vld [vmem:[%s11 + $0x8] sm:$0xff]
      %v1343 = vld [vmem:[%s11 + $0x10] sm:$0xff]
      %v1344 = vld [vmem:[%s11 + $0x18] sm:$0xff]
      %v1345 = vld [vmem:[%s13] sm:$0x1]
      %v1347 = vperm.slane %v1345, 0
      %vm1349 = vcmask 261120
      %v1351 = vsel %vm1349, %v1339, 0
      %v1354 = vsel %vm1349, %v1340, 0
      %1356 = vmatpush.msra.mxu0 0.0
      %1357 = vmatpush.msra.mxu0 0.0
      %1358 = vmatpush.msra.mxu0 0.0
      %1359 = vmatpush.msra.mxu0 0.0
      %1360 = vmatpush.msra.mxu0 0.0
      %1361 = vmatpush.msra.mxu0 0.0
      %1362 = vmatpush.msra.mxu0 0.0
      %1363 = vmatpush.msra.mxu0 0.0
      %1364 = vmatpush.msra.mxu0 0.0
      %1365 = vmatpush.msra.mxu0 0.0
      %1366 = vmatpush.msra.mxu0 0.0
      %1367 = vmatpush.msra.mxu0 0.0
      %1368 = vmatpush.msra.mxu0 %v1344
      %1369 = vmatpush.msra.mxu0 %v1343
      %1370 = vmatpush.msra.mxu0 %v1342
      %1371 = vmatpush.msra.mxu0 %v1341
      %1372 = vmatmul.f32.gmra.mxu0 %v1351
      %v1373 = vpop.f32.mrf.mxu0
      %v1374 = vadd.f32 %v1347, %v1373
      %1375 = vmatmul.f32.gmra.mxu0 %v1354
      %v1376 = vpop.f32.mrf.mxu0
      %v1377 = vadd.f32 %v1347, %v1376
      %1378 = vdwg.mxu0
      %v1379 = vmul.f32 %v1374, %v1374
      %v1380 = vmul.f32 %v1377, %v1377
      %v1381 = vmul.f32 %v1374, %v1379
      %v1382 = vmul.f32 %v1377, %v1380
      %v1383 = vmul.f32 %v1381, 0.044715
      %v1384 = vmul.f32 %v1382, 0.044715
      %v1385 = vadd.f32 %v1374, %v1383
      %v1386 = vadd.f32 %v1377, %v1384
      %v1387 = vmul.f32 %v1385, 0.7978846
      %v1388 = vmul.f32 %v1386, 0.7978846
      %v1389 = vtanh.pop %v1387
      %v1390 = vtanh.pop %v1388
      %v1391 = vadd.f32 %v1389, 1.0
      %v1392 = vadd.f32 %v1390, 1.0
      %v1393 = vmul.f32 %v1391, 0.5
      %v1394 = vmul.f32 %v1392, 0.5
      %v1395 = vmul.f32 %v1374, %v1393
      %v1396 = vmul.f32 %v1377, %v1394
      %v1397 = vld [vmem:[%s15] sm:$0x1]
      %v1398 = vld [vmem:[%s17] sm:$0x1]
      %v1399 = vsel %vm1338, %v1395, 0.0
      %1400 = vadd.xlane.f32.xlu0 %v1399
      %v1401 = vpop.xlane.xlu0 %1400
      %v1402 = vsel %vm1338, %v1396, 0.0
      %1403 = vadd.xlane.f32.xlu0 %v1402
      %v1404 = vpop.xlane.xlu0 %1403
      %v1405 = vrcp.pop 16.0
      %v1406 = vmul.f32 16.0, %v1405
      %v1407 = vsub.f32 1.0, %v1406
      %v1408 = vmul.f32 %v1405, %v1407
      %v1409 = vadd.f32 %v1405, %v1408
      %vm1410 = vweird.f32 %v1405
      %v1411 = vsel %vm1410, %v1405, %v1409
      %v1412 = vmul.f32 %v1401, %v1411
      %v1413 = vmul.f32 %v1404, %v1411
      %v1414 = vsub.f32 %v1395, %v1412
      %v1415 = vsub.f32 %v1396, %v1413
      %v1416 = vmul.f32 %v1414, %v1414
      %v1417 = vmul.f32 %v1415, %v1415
      %v1418 = vsel %vm1338, %v1416, 0.0
      %1419 = vadd.xlane.f32.xlu0 %v1418
      %v1420 = vpop.xlane.xlu0 %1419
      %v1421 = vsel %vm1338, %v1417, 0.0
      %1422 = vadd.xlane.f32.xlu0 %v1421
      %v1423 = vpop.xlane.xlu0 %1422
      %v1424 = vmul.f32 %v1420, %v1411
      %v1425 = vmul.f32 %v1423, %v1411
      %v1426 = vadd.f32 %v1424, 1e-05
      %v1427 = vadd.f32 %v1425, 1e-05
      %v1428 = vrsqrt.pop %v1426
      %v1429 = vmul.f32 %v1428, %v1426
      %v1430 = vmul.f32 %v1429, %v1428
      %v1431 = vmul.f32 0.5, %v1430
      %v1432 = vsub.f32 1.5, %v1431
      %v1433 = vmul.f32 %v1428, %v1432
      %vm1434 = vweird.f32 %v1426
      %vm1435 = vweird.f32 %v1428
      %vm1436 = vmor %vm1434, %vm1435
      %v1437 = vsel %vm1436, %v1428, %v1433
      %v1438 = vrsqrt.pop %v1427
      %v1439 = vmul.f32 %v1438, %v1427
      %v1440 = vmul.f32 %v1439, %v1438
      %v1441 = vmul.f32 0.5, %v1440
      %v1442 = vsub.f32 1.5, %v1441
      %v1443 = vmul.f32 %v1438, %v1442
      %vm1444 = vweird.f32 %v1427
      %vm1445 = vweird.f32 %v1438
      %vm1446 = vmor %vm1444, %vm1445
      %v1447 = vsel %vm1446, %v1438, %v1443
      %v1448 = vmul.f32 %v1414, %v1437
      %v1449 = vmul.f32 %v1415, %v1447
      %v1451 = vperm.slane %v1397, 0
      %v1453 = vmul.f32 %v1448, %v1451
      %v1454 = vmul.f32 %v1449, %v1451
      %v1456 = vperm.slane %v1398, 0
      %v1458 = vadd.f32 %v1453, %v1456
      %v1459 = vadd.f32 %v1454, %v1456
      %v1460 = vld [vmem:[%s19] sm:$0xff]
      %v1461 = vld [vmem:[%s19 + $0x8] sm:$0xff]
      %v1462 = vld [vmem:[%s21] sm:$0x1]
      %v1464 = vperm.slane %v1462, 0
      %v1467 = vsel %vm1338, %v1458, 0
      %v1470 = vsel %vm1338, %v1459, 0
      %1472 = vmatpush.msra.mxu0 0.0
      %1473 = vmatpush.msra.mxu0 0.0
      %1474 = vmatpush.msra.mxu0 0.0
      %1475 = vmatpush.msra.mxu0 0.0
      %1476 = vmatpush.msra.mxu0 0.0
      %1477 = vmatpush.msra.mxu0 0.0
      %1478 = vmatpush.msra.mxu0 0.0
      %1479 = vmatpush.msra.mxu0 0.0
      %1480 = vmatpush.msra.mxu0 0.0
      %1481 = vmatpush.msra.mxu0 0.0
      %1482 = vmatpush.msra.mxu0 0.0
      %1483 = vmatpush.msra.mxu0 0.0
      %1484 = vmatpush.msra.mxu0 0.0
      %1485 = vmatpush.msra.mxu0 0.0
      %1486 = vmatpush.msra.mxu0 %v1461
      %1487 = vmatpush.msra.mxu0 %v1460
      %1488 = vmatmul.f32.gmra.mxu0 %v1467
      %v1489 = vpop.f32.mrf.mxu0
      %v1490 = vadd.f32 %v1464, %v1489
      %1491 = vmatmul.f32.gmra.mxu0 %v1470
      %v1492 = vpop.f32.mrf.mxu0
      %v1493 = vadd.f32 %v1464, %v1492
      %1494 = vdwg.mxu0
      %v1495 = vld [vmem:[%s1214] sm:$0xff]
      %v1496 = vld [vmem:[%s1214 + $0x8] sm:$0xff]
      %1498 = vset.pattern.permute.xlu0 0
      %1499 = vperm.xlu0 %1498, %v1495
      %v1500 = vpop.permute.xlu0 %1499
      %1503 = vset.pattern.permute.xlu0 0
      %1504 = vperm.xlu0 %1503, %v1496
      %v1505 = vpop.permute.xlu0 %1504
      %v1507 = vmul.f32 %v1490, %v1500
      %v1508 = vmul.f32 %v1493, %v1505
      %v1509 = vld [vmem:[%s23] sm:$0x1]
      %v1510 = vld [vmem:[%s25] sm:$0x1]
      %v1511 = vsel %vm1349, %v1507, 0.0
      %1512 = vadd.xlane.f32.xlu0 %v1511
      %v1513 = vpop.xlane.xlu0 %1512
      %v1514 = vsel %vm1349, %v1508, 0.0
      %1515 = vadd.xlane.f32.xlu0 %v1514
      %v1516 = vpop.xlane.xlu0 %1515
      %v1517 = vrcp.pop 32.0
      %v1518 = vmul.f32 32.0, %v1517
      %v1519 = vsub.f32 1.0, %v1518
      %v1520 = vmul.f32 %v1517, %v1519
      %v1521 = vadd.f32 %v1517, %v1520
      %vm1522 = vweird.f32 %v1517
      %v1523 = vsel %vm1522, %v1517, %v1521
      %v1524 = vmul.f32 %v1513, %v1523
      %v1525 = vmul.f32 %v1516, %v1523
      %v1526 = vsub.f32 %v1507, %v1524
      %v1527 = vsub.f32 %v1508, %v1525
      %v1528 = vmul.f32 %v1526, %v1526
      %v1529 = vmul.f32 %v1527, %v1527
      %v1530 = vsel %vm1349, %v1528, 0.0
      %1531 = vadd.xlane.f32.xlu0 %v1530
      %v1532 = vpop.xlane.xlu0 %1531
      %v1533 = vsel %vm1349, %v1529, 0.0
      %1534 = vadd.xlane.f32.xlu0 %v1533
      %v1535 = vpop.xlane.xlu0 %1534
      %v1536 = vmul.f32 %v1532, %v1523
      %v1537 = vmul.f32 %v1535, %v1523
      %v1538 = vadd.f32 %v1536, 1e-05
      %v1539 = vadd.f32 %v1537, 1e-05
      %v1540 = vrsqrt.pop %v1538
      %v1541 = vmul.f32 %v1540, %v1538
      %v1542 = vmul.f32 %v1541, %v1540
      %v1543 = vmul.f32 0.5, %v1542
      %v1544 = vsub.f32 1.5, %v1543
      %v1545 = vmul.f32 %v1540, %v1544
      %vm1546 = vweird.f32 %v1538
      %vm1547 = vweird.f32 %v1540
      %vm1548 = vmor %vm1546, %vm1547
      %v1549 = vsel %vm1548, %v1540, %v1545
      %v1550 = vrsqrt.pop %v1539
      %v1551 = vmul.f32 %v1550, %v1539
      %v1552 = vmul.f32 %v1551, %v1550
      %v1553 = vmul.f32 0.5, %v1552
      %v1554 = vsub.f32 1.5, %v1553
      %v1555 = vmul.f32 %v1550, %v1554
      %vm1556 = vweird.f32 %v1539
      %vm1557 = vweird.f32 %v1550
      %vm1558 = vmor %vm1556, %vm1557
      %v1559 = vsel %vm1558, %v1550, %v1555
      %v1560 = vmul.f32 %v1526, %v1549
      %v1561 = vmul.f32 %v1527, %v1559
      %v1563 = vperm.slane %v1509, 0
      %v1565 = vmul.f32 %v1560, %v1563
      %v1566 = vmul.f32 %v1561, %v1563
      %v1568 = vperm.slane %v1510, 0
      %v1570 = vadd.f32 %v1565, %v1568
      %v1571 = vadd.f32 %v1566, %v1568
      %v1572 = vld [vmem:[%s1209] sm:$0x1]
      %v1573 = vld [vmem:[%s27] sm:$0xff]
      %v1574 = vld [vmem:[%s27 + $0x8] sm:$0xff]
      %v1575 = vld [vmem:[%s27 + $0x10] sm:$0xff]
      %v1576 = vld [vmem:[%s27 + $0x18] sm:$0xff]
      %v1577 = vld [vmem:[%s29] sm:$0x1]
      %v1579 = vperm.slane %v1577, 0
      %v1582 = vsel %vm1349, %v1570, 0
      %v1585 = vsel %vm1349, %v1571, 0
      %1587 = vmatpush.msra.mxu0 0.0
      %1588 = vmatpush.msra.mxu0 0.0
      %1589 = vmatpush.msra.mxu0 0.0
      %1590 = vmatpush.msra.mxu0 0.0
      %1591 = vmatpush.msra.mxu0 0.0
      %1592 = vmatpush.msra.mxu0 0.0
      %1593 = vmatpush.msra.mxu0 0.0
      %1594 = vmatpush.msra.mxu0 0.0
      %1595 = vmatpush.msra.mxu0 0.0
      %1596 = vmatpush.msra.mxu0 0.0
      %1597 = vmatpush.msra.mxu0 0.0
      %1598 = vmatpush.msra.mxu0 0.0
      %1599 = vmatpush.msra.mxu0 %v1576
      %1600 = vmatpush.msra.mxu0 %v1575
      %1601 = vmatpush.msra.mxu0 %v1574
      %1602 = vmatpush.msra.mxu0 %v1573
      %1603 = vmatmul.f32.gmra.mxu0 %v1582
      %v1604 = vpop.f32.mrf.mxu0
      %v1605 = vadd.f32 %v1579, %v1604
      %1606 = vmatmul.f32.gmra.mxu0 %v1585
      %v1607 = vpop.f32.mrf.mxu0
      %v1608 = vadd.f32 %v1579, %v1607
      %1609 = vdwg.mxu0
      %v1610 = vmul.f32 %v1605, 0.35355338
      %v1611 = vmul.f32 %v1608, 0.35355338
      %v1613 = vperm.slane %v1572, 0
      %1617 = vrot.lane.b32.xlu0 %v1605, 96
      %v1618 = vpop.permute.xlu0 %1617
      %1619 = vrot.lane.b32.xlu0 %v1608, 96
      %v1620 = vpop.permute.xlu0 %1619
      %vm1621 = vcmask 64512
      %v1623 = vsel %vm1621, %v1610, 0
      %v1626 = vsel %vm1621, %v1611, 0
      %v1628 = vsel %vm1621, %v1618, 0
      %v1630 = vsel %vm1621, %v1620, 0
      %1632 = vmatpush.xpose.msra.mxu0 0.0
      %1633 = vmatpush.xpose.msra.mxu0 0.0
      %1634 = vmatpush.xpose.msra.mxu0 0.0
      %1635 = vmatpush.xpose.msra.mxu0 0.0
      %1636 = vmatpush.xpose.msra.mxu0 0.0
      %1637 = vmatpush.xpose.msra.mxu0 0.0
      %1638 = vmatpush.xpose.msra.mxu0 0.0
      %1639 = vmatpush.xpose.msra.mxu0 0.0
      %1640 = vmatpush.xpose.msra.mxu0 0.0
      %1641 = vmatpush.xpose.msra.mxu0 0.0
      %1642 = vmatpush.xpose.msra.mxu0 0.0
      %1643 = vmatpush.xpose.msra.mxu0 0.0
      %1644 = vmatpush.xpose.msra.mxu0 0.0
      %1645 = vmatpush.xpose.msra.mxu0 0.0
      %1646 = vmatpush.xpose.msra.mxu0 %v1630
      %1647 = vmatpush.xpose.msra.mxu0 %v1628
      %1648 = vmatmul.f32.gmra.mxu0 %v1623
      %v1649 = vpop.f32.mrf.mxu0
      %v1650 = vadd.f32 %v1613, %v1649
      %1651 = vmatmul.f32.gmra.mxu0 %v1626
      %v1652 = vpop.f32.mrf.mxu0
      %v1653 = vadd.f32 %v1613, %v1652
      %1654 = vdwg.mxu0
      %v1655 = vsel %vm1338, %v1650, -inf
      %1656 = vmax.xlane.f32.xlu0 %v1655
      %v1657 = vpop.xlane.xlu0 %1656
      %v1658 = vsel %vm1338, %v1653, -inf
      %1659 = vmax.xlane.f32.xlu0 %v1658
      %v1660 = vpop.xlane.xlu0 %1659
      %v1661 = vsub.f32 %v1650, %v1657
      %v1662 = vsub.f32 %v1653, %v1660
      %v1663 = vmul.f32 %v1661, 1.442695
      %v1664 = vpow.pop %v1663
      %v1665 = vmul.f32 %v1662, 1.442695
      %v1666 = vpow.pop %v1665
      %v1667 = vsel %vm1338, %v1664, 0.0
      %1668 = vadd.xlane.f32.xlu0 %v1667
      %v1669 = vpop.xlane.xlu0 %1668
      %v1670 = vsel %vm1338, %v1666, 0.0
      %1671 = vadd.xlane.f32.xlu0 %v1670
      %v1672 = vpop.xlane.xlu0 %1671
      %1673 = vrot.lane.b32.xlu0 %v1605, 64
      %v1674 = vpop.permute.xlu0 %1673
      %1675 = vrot.lane.b32.xlu0 %v1608, 64
      %v1676 = vpop.permute.xlu0 %1675
      %v1680 = vsel %vm1338, %v1664, 0
      %v1683 = vsel %vm1338, %v1666, 0
      %1685 = vmatpush.msra.mxu0 0.0
      %1686 = vmatpush.msra.mxu0 0.0
      %1687 = vmatpush.msra.mxu0 0.0
      %1688 = vmatpush.msra.mxu0 0.0
      %1689 = vmatpush.msra.mxu0 0.0
      %1690 = vmatpush.msra.mxu0 0.0
      %1691 = vmatpush.msra.mxu0 0.0
      %1692 = vmatpush.msra.mxu0 0.0
      %1693 = vmatpush.msra.mxu0 0.0
      %1694 = vmatpush.msra.mxu0 0.0
      %1695 = vmatpush.msra.mxu0 0.0
      %1696 = vmatpush.msra.mxu0 0.0
      %1697 = vmatpush.msra.mxu0 0.0
      %1698 = vmatpush.msra.mxu0 0.0
      %1699 = vmatpush.msra.mxu0 %v1676
      %1700 = vmatpush.msra.mxu0 %v1674
      %1701 = vmatmul.f32.gmra.mxu0 %v1680
      %v1702 = vpop.f32.mrf.mxu0
      %v1703 = vadd.f32 0.0, %v1702
      %1704 = vmatmul.f32.gmra.mxu0 %v1683
      %v1705 = vpop.f32.mrf.mxu0
      %v1706 = vadd.f32 0.0, %v1705
      %1707 = vdwg.mxu0
      %v1708 = vrcp.pop %v1669
      %v1709 = vrcp.pop %v1672
      %v1710 = vmul.f32 %v1703, %v1708
      %v1711 = vmul.f32 %v1706, %v1709
      %1712 = vrot.lane.b32.xlu0 %v1610, 120
      %v1713 = vpop.permute.xlu0 %1712
      %1714 = vrot.lane.b32.xlu0 %v1611, 120
      %v1715 = vpop.permute.xlu0 %1714
      %1716 = vrot.lane.b32.xlu0 %v1605, 88
      %v1717 = vpop.permute.xlu0 %1716
      %1718 = vrot.lane.b32.xlu0 %v1608, 88
      %v1719 = vpop.permute.xlu0 %1718
      %v1720 = vsel %vm1621, %v1713, 0
      %v1722 = vsel %vm1621, %v1715, 0
      %v1724 = vsel %vm1621, %v1717, 0
      %v1726 = vsel %vm1621, %v1719, 0
      %1728 = vmatpush.xpose.msra.mxu0 0.0
      %1729 = vmatpush.xpose.msra.mxu0 0.0
      %1730 = vmatpush.xpose.msra.mxu0 0.0
      %1731 = vmatpush.xpose.msra.mxu0 0.0
      %1732 = vmatpush.xpose.msra.mxu0 0.0
      %1733 = vmatpush.xpose.msra.mxu0 0.0
      %1734 = vmatpush.xpose.msra.mxu0 0.0
      %1735 = vmatpush.xpose.msra.mxu0 0.0
      %1736 = vmatpush.xpose.msra.mxu0 0.0
      %1737 = vmatpush.xpose.msra.mxu0 0.0
      %1738 = vmatpush.xpose.msra.mxu0 0.0
      %1739 = vmatpush.xpose.msra.mxu0 0.0
      %1740 = vmatpush.xpose.msra.mxu0 0.0
      %1741 = vmatpush.xpose.msra.mxu0 0.0
      %1742 = vmatpush.xpose.msra.mxu0 %v1726
      %1743 = vmatpush.xpose.msra.mxu0 %v1724
      %1744 = vmatmul.f32.gmra.mxu0 %v1720
      %v1745 = vpop.f32.mrf.mxu0
      %v1746 = vadd.f32 %v1613, %v1745
      %1747 = vmatmul.f32.gmra.mxu0 %v1722
      %v1748 = vpop.f32.mrf.mxu0
      %v1749 = vadd.f32 %v1613, %v1748
      %1750 = vdwg.mxu0
      %v1751 = vsel %vm1338, %v1746, -inf
      %1752 = vmax.xlane.f32.xlu0 %v1751
      %v1753 = vpop.xlane.xlu0 %1752
      %v1754 = vsel %vm1338, %v1749, -inf
      %1755 = vmax.xlane.f32.xlu0 %v1754
      %v1756 = vpop.xlane.xlu0 %1755
      %v1757 = vsub.f32 %v1746, %v1753
      %v1758 = vsub.f32 %v1749, %v1756
      %v1759 = vmul.f32 %v1757, 1.442695
      %v1760 = vpow.pop %v1759
      %v1761 = vmul.f32 %v1758, 1.442695
      %v1762 = vpow.pop %v1761
      %v1763 = vsel %vm1338, %v1760, 0.0
      %1764 = vadd.xlane.f32.xlu0 %v1763
      %v1765 = vpop.xlane.xlu0 %1764
      %v1766 = vsel %vm1338, %v1762, 0.0
      %1767 = vadd.xlane.f32.xlu0 %v1766
      %v1768 = vpop.xlane.xlu0 %1767
      %1769 = vrot.lane.b32.xlu0 %v1605, 56
      %v1770 = vpop.permute.xlu0 %1769
      %1771 = vrot.lane.b32.xlu0 %v1608, 56
      %v1772 = vpop.permute.xlu0 %1771
      %v1776 = vsel %vm1338, %v1760, 0
      %v1779 = vsel %vm1338, %v1762, 0
      %1781 = vmatpush.msra.mxu0 0.0
      %1782 = vmatpush.msra.mxu0 0.0
      %1783 = vmatpush.msra.mxu0 0.0
      %1784 = vmatpush.msra.mxu0 0.0
      %1785 = vmatpush.msra.mxu0 0.0
      %1786 = vmatpush.msra.mxu0 0.0
      %1787 = vmatpush.msra.mxu0 0.0
      %1788 = vmatpush.msra.mxu0 0.0
      %1789 = vmatpush.msra.mxu0 0.0
      %1790 = vmatpush.msra.mxu0 0.0
      %1791 = vmatpush.msra.mxu0 0.0
      %1792 = vmatpush.msra.mxu0 0.0
      %1793 = vmatpush.msra.mxu0 0.0
      %1794 = vmatpush.msra.mxu0 0.0
      %1795 = vmatpush.msra.mxu0 %v1772
      %1796 = vmatpush.msra.mxu0 %v1770
      %1797 = vmatmul.f32.gmra.mxu0 %v1776
      %v1798 = vpop.f32.mrf.mxu0
      %v1799 = vadd.f32 0.0, %v1798
      %1800 = vmatmul.f32.gmra.mxu0 %v1779
      %v1801 = vpop.f32.mrf.mxu0
      %v1802 = vadd.f32 0.0, %v1801
      %1803 = vdwg.mxu0
      %v1804 = vrcp.pop %v1765
      %v1805 = vrcp.pop %v1768
      %v1806 = vmul.f32 %v1799, %v1804
      %v1807 = vmul.f32 %v1802, %v1805
      %1808 = vrot.lane.b32.xlu0 %v1610, 112
      %v1809 = vpop.permute.xlu0 %1808
      %1810 = vrot.lane.b32.xlu0 %v1611, 112
      %v1811 = vpop.permute.xlu0 %1810
      %1812 = vrot.lane.b32.xlu0 %v1605, 80
      %v1813 = vpop.permute.xlu0 %1812
      %1814 = vrot.lane.b32.xlu0 %v1608, 80
      %v1815 = vpop.permute.xlu0 %1814
      %v1816 = vsel %vm1621, %v1809, 0
      %v1818 = vsel %vm1621, %v1811, 0
      %v1820 = vsel %vm1621, %v1813, 0
      %v1822 = vsel %vm1621, %v1815, 0
      %1824 = vmatpush.xpose.msra.mxu0 0.0
      %1825 = vmatpush.xpose.msra.mxu0 0.0
      %1826 = vmatpush.xpose.msra.mxu0 0.0
      %1827 = vmatpush.xpose.msra.mxu0 0.0
      %1828 = vmatpush.xpose.msra.mxu0 0.0
      %1829 = vmatpush.xpose.msra.mxu0 0.0
      %1830 = vmatpush.xpose.msra.mxu0 0.0
      %1831 = vmatpush.xpose.msra.mxu0 0.0
      %1832 = vmatpush.xpose.msra.mxu0 0.0
      %1833 = vmatpush.xpose.msra.mxu0 0.0
      %1834 = vmatpush.xpose.msra.mxu0 0.0
      %1835 = vmatpush.xpose.msra.mxu0 0.0
      %1836 = vmatpush.xpose.msra.mxu0 0.0
      %1837 = vmatpush.xpose.msra.mxu0 0.0
      %1838 = vmatpush.xpose.msra.mxu0 %v1822
      %1839 = vmatpush.xpose.msra.mxu0 %v1820
      %1840 = vmatmul.f32.gmra.mxu0 %v1816
      %v1841 = vpop.f32.mrf.mxu0
      %v1842 = vadd.f32 %v1613, %v1841
      %1843 = vmatmul.f32.gmra.mxu0 %v1818
      %v1844 = vpop.f32.mrf.mxu0
      %v1845 = vadd.f32 %v1613, %v1844
      %1846 = vdwg.mxu0
      %v1847 = vsel %vm1338, %v1842, -inf
      %1848 = vmax.xlane.f32.xlu0 %v1847
      %v1849 = vpop.xlane.xlu0 %1848
      %v1850 = vsel %vm1338, %v1845, -inf
      %1851 = vmax.xlane.f32.xlu0 %v1850
      %v1852 = vpop.xlane.xlu0 %1851
      %v1853 = vsub.f32 %v1842, %v1849
      %v1854 = vsub.f32 %v1845, %v1852
      %v1855 = vmul.f32 %v1853, 1.442695
      %v1856 = vpow.pop %v1855
      %v1857 = vmul.f32 %v1854, 1.442695
      %v1858 = vpow.pop %v1857
      %v1859 = vsel %vm1338, %v1856, 0.0
      %1860 = vadd.xlane.f32.xlu0 %v1859
      %v1861 = vpop.xlane.xlu0 %1860
      %v1862 = vsel %vm1338, %v1858, 0.0
      %1863 = vadd.xlane.f32.xlu0 %v1862
      %v1864 = vpop.xlane.xlu0 %1863
      %1865 = vrot.lane.b32.xlu0 %v1605, 48
      %v1866 = vpop.permute.xlu0 %1865
      %1867 = vrot.lane.b32.xlu0 %v1608, 48
      %v1868 = vpop.permute.xlu0 %1867
      %v1872 = vsel %vm1338, %v1856, 0
      %v1875 = vsel %vm1338, %v1858, 0
      %1877 = vmatpush.msra.mxu0 0.0
      %1878 = vmatpush.msra.mxu0 0.0
      %1879 = vmatpush.msra.mxu0 0.0
      %1880 = vmatpush.msra.mxu0 0.0
      %1881 = vmatpush.msra.mxu0 0.0
      %1882 = vmatpush.msra.mxu0 0.0
      %1883 = vmatpush.msra.mxu0 0.0
      %1884 = vmatpush.msra.mxu0 0.0
      %1885 = vmatpush.msra.mxu0 0.0
      %1886 = vmatpush.msra.mxu0 0.0
      %1887 = vmatpush.msra.mxu0 0.0
      %1888 = vmatpush.msra.mxu0 0.0
      %1889 = vmatpush.msra.mxu0 0.0
      %1890 = vmatpush.msra.mxu0 0.0
      %1891 = vmatpush.msra.mxu0 %v1868
      %1892 = vmatpush.msra.mxu0 %v1866
      %1893 = vmatmul.f32.gmra.mxu0 %v1872
      %v1894 = vpop.f32.mrf.mxu0
      %v1895 = vadd.f32 0.0, %v1894
      %1896 = vmatmul.f32.gmra.mxu0 %v1875
      %v1897 = vpop.f32.mrf.mxu0
      %v1898 = vadd.f32 0.0, %v1897
      %1899 = vdwg.mxu0
      %v1900 = vrcp.pop %v1861
      %v1901 = vrcp.pop %v1864
      %v1902 = vmul.f32 %v1895, %v1900
      %v1903 = vmul.f32 %v1898, %v1901
      %1904 = vrot.lane.b32.xlu0 %v1610, 104
      %v1905 = vpop.permute.xlu0 %1904
      %1906 = vrot.lane.b32.xlu0 %v1611, 104
      %v1907 = vpop.permute.xlu0 %1906
      %1908 = vrot.lane.b32.xlu0 %v1605, 72
      %v1909 = vpop.permute.xlu0 %1908
      %1910 = vrot.lane.b32.xlu0 %v1608, 72
      %v1911 = vpop.permute.xlu0 %1910
      %v1912 = vsel %vm1621, %v1905, 0
      %v1914 = vsel %vm1621, %v1907, 0
      %v1916 = vsel %vm1621, %v1909, 0
      %v1918 = vsel %vm1621, %v1911, 0
      %1920 = vmatpush.xpose.msra.mxu0 0.0
      %1921 = vmatpush.xpose.msra.mxu0 0.0
      %1922 = vmatpush.xpose.msra.mxu0 0.0
      %1923 = vmatpush.xpose.msra.mxu0 0.0
      %1924 = vmatpush.xpose.msra.mxu0 0.0
      %1925 = vmatpush.xpose.msra.mxu0 0.0
      %1926 = vmatpush.xpose.msra.mxu0 0.0
      %1927 = vmatpush.xpose.msra.mxu0 0.0
      %1928 = vmatpush.xpose.msra.mxu0 0.0
      %1929 = vmatpush.xpose.msra.mxu0 0.0
      %1930 = vmatpush.xpose.msra.mxu0 0.0
      %1931 = vmatpush.xpose.msra.mxu0 0.0
      %1932 = vmatpush.xpose.msra.mxu0 0.0
      %1933 = vmatpush.xpose.msra.mxu0 0.0
      %1934 = vmatpush.xpose.msra.mxu0 %v1918
      %1935 = vmatpush.xpose.msra.mxu0 %v1916
      %1936 = vmatmul.f32.gmra.mxu0 %v1912
      %v1937 = vpop.f32.mrf.mxu0
      %v1938 = vadd.f32 %v1613, %v1937
      %1939 = vmatmul.f32.gmra.mxu0 %v1914
      %v1940 = vpop.f32.mrf.mxu0
      %v1941 = vadd.f32 %v1613, %v1940
      %1942 = vdwg.mxu0
      %v1943 = vsel %vm1338, %v1938, -inf
      %1944 = vmax.xlane.f32.xlu0 %v1943
      %v1945 = vpop.xlane.xlu0 %1944
      %v1946 = vsel %vm1338, %v1941, -inf
      %1947 = vmax.xlane.f32.xlu0 %v1946
      %v1948 = vpop.xlane.xlu0 %1947
      %v1949 = vsub.f32 %v1938, %v1945
      %v1950 = vsub.f32 %v1941, %v1948
      %v1951 = vmul.f32 %v1949, 1.442695
      %v1952 = vpow.pop %v1951
      %v1953 = vmul.f32 %v1950, 1.442695
      %v1954 = vpow.pop %v1953
      %v1955 = vsel %vm1338, %v1952, 0.0
      %1956 = vadd.xlane.f32.xlu0 %v1955
      %v1957 = vpop.xlane.xlu0 %1956
      %v1958 = vsel %vm1338, %v1954, 0.0
      %1959 = vadd.xlane.f32.xlu0 %v1958
      %v1960 = vpop.xlane.xlu0 %1959
      %1961 = vrot.lane.b32.xlu0 %v1605, 40
      %v1962 = vpop.permute.xlu0 %1961
      %1963 = vrot.lane.b32.xlu0 %v1608, 40
      %v1964 = vpop.permute.xlu0 %1963
      %v1968 = vsel %vm1338, %v1952, 0
      %v1971 = vsel %vm1338, %v1954, 0
      %1973 = vmatpush.msra.mxu0 0.0
      %1974 = vmatpush.msra.mxu0 0.0
      %1975 = vmatpush.msra.mxu0 0.0
      %1976 = vmatpush.msra.mxu0 0.0
      %1977 = vmatpush.msra.mxu0 0.0
      %1978 = vmatpush.msra.mxu0 0.0
      %1979 = vmatpush.msra.mxu0 0.0
      %1980 = vmatpush.msra.mxu0 0.0
      %1981 = vmatpush.msra.mxu0 0.0
      %1982 = vmatpush.msra.mxu0 0.0
      %1983 = vmatpush.msra.mxu0 0.0
      %1984 = vmatpush.msra.mxu0 0.0
      %1985 = vmatpush.msra.mxu0 0.0
      %1986 = vmatpush.msra.mxu0 0.0
      %1987 = vmatpush.msra.mxu0 %v1964
      %1988 = vmatpush.msra.mxu0 %v1962
      %1989 = vmatmul.f32.gmra.mxu0 %v1968
      %v1990 = vpop.f32.mrf.mxu0
      %v1991 = vadd.f32 0.0, %v1990
      %1992 = vmatmul.f32.gmra.mxu0 %v1971
      %v1993 = vpop.f32.mrf.mxu0
      %v1994 = vadd.f32 0.0, %v1993
      %1995 = vdwg.mxu0
      %v1996 = vrcp.pop %v1957
      %v1997 = vrcp.pop %v1960
      %v1998 = vmul.f32 %v1991, %v1996
      %v1999 = vmul.f32 %v1994, %v1997
      %2002 = vrot.lane.b32.xlu0 %v1806, 8
      %v2003 = vpop.permute.xlu0 %2002
      %2004 = vrot.lane.b32.xlu0 %v1807, 8
      %v2005 = vpop.permute.xlu0 %2004
      %2010 = vrot.lane.b32.xlu0 %v1902, 16
      %v2011 = vpop.permute.xlu0 %2010
      %2012 = vrot.lane.b32.xlu0 %v1903, 16
      %v2013 = vpop.permute.xlu0 %2012
      %2018 = vrot.lane.b32.xlu0 %v1998, 24
      %v2019 = vpop.permute.xlu0 %2018
      %2020 = vrot.lane.b32.xlu0 %v1999, 24
      %v2021 = vpop.permute.xlu0 %2020
      %v2024 = vsel %vm1621, %v1710, %v2003
      %v2025 = vsel %vm1621, %v1711, %v2005
      %v2026 = vsel %vm1338, %v2024, %v2011
      %v2027 = vsel %vm1338, %v2025, %v2013
      %vm2028 = vcmask 195584
      %v2029 = vsel %vm2028, %v2026, %v2019
      %v2030 = vsel %vm2028, %v2027, %v2021
      %v2031 = vld [vmem:[%s31] sm:$0xff]
      %v2032 = vld [vmem:[%s31 + $0x8] sm:$0xff]
      %v2033 = vld [vmem:[%s31 + $0x10] sm:$0xff]
      %v2034 = vld [vmem:[%s31 + $0x18] sm:$0xff]
      %v2035 = vld [vmem:[%s33] sm:$0x1]
      %v2037 = vperm.slane %v2035, 0
      %v2040 = vsel %vm1349, %v2029, 0
      %v2043 = vsel %vm1349, %v2030, 0
      %2045 = vmatpush.msra.mxu0 0.0
      %2046 = vmatpush.msra.mxu0 0.0
      %2047 = vmatpush.msra.mxu0 0.0
      %2048 = vmatpush.msra.mxu0 0.0
      %2049 = vmatpush.msra.mxu0 0.0
      %2050 = vmatpush.msra.mxu0 0.0
      %2051 = vmatpush.msra.mxu0 0.0
      %2052 = vmatpush.msra.mxu0 0.0
      %2053 = vmatpush.msra.mxu0 0.0
      %2054 = vmatpush.msra.mxu0 0.0
      %2055 = vmatpush.msra.mxu0 0.0
      %2056 = vmatpush.msra.mxu0 0.0
      %2057 = vmatpush.msra.mxu0 %v2034
      %2058 = vmatpush.msra.mxu0 %v2033
      %2059 = vmatpush.msra.mxu0 %v2032
      %2060 = vmatpush.msra.mxu0 %v2031
      %2061 = vmatmul.f32.gmra.mxu0 %v2040
      %v2062 = vpop.f32.mrf.mxu0
      %v2063 = vadd.f32 %v2037, %v2062
      %2064 = vmatmul.f32.gmra.mxu0 %v2043
      %v2065 = vpop.f32.mrf.mxu0
      %v2066 = vadd.f32 %v2037, %v2065
      %2067 = vdwg.mxu0
      %v2068 = vadd.f32 %v1570, %v2063
      %v2069 = vadd.f32 %v1571, %v2066
      %v2070 = vld [vmem:[%s35] sm:$0x1]
      %v2071 = vld [vmem:[%s37] sm:$0x1]
      %v2072 = vsel %vm1349, %v2068, 0.0
      %2073 = vadd.xlane.f32.xlu0 %v2072
      %v2074 = vpop.xlane.xlu0 %2073
      %v2075 = vsel %vm1349, %v2069, 0.0
      %2076 = vadd.xlane.f32.xlu0 %v2075
      %v2077 = vpop.xlane.xlu0 %2076
      %v2078 = vmul.f32 %v2074, %v1523
      %v2079 = vmul.f32 %v2077, %v1523
      %v2080 = vsub.f32 %v2068, %v2078
      %v2081 = vsub.f32 %v2069, %v2079
      %v2082 = vmul.f32 %v2080, %v2080
      %v2083 = vmul.f32 %v2081, %v2081
      %v2084 = vsel %vm1349, %v2082, 0.0
      %2085 = vadd.xlane.f32.xlu0 %v2084
      %v2086 = vpop.xlane.xlu0 %2085
      %v2087 = vsel %vm1349, %v2083, 0.0
      %2088 = vadd.xlane.f32.xlu0 %v2087
      %v2089 = vpop.xlane.xlu0 %2088
      %v2090 = vmul.f32 %v2086, %v1523
      %v2091 = vmul.f32 %v2089, %v1523
      %v2092 = vadd.f32 %v2090, 1e-05
      %v2093 = vadd.f32 %v2091, 1e-05
      %v2094 = vrsqrt.pop %v2092
      %v2095 = vmul.f32 %v2094, %v2092
      %v2096 = vmul.f32 %v2095, %v2094
      %v2097 = vmul.f32 0.5, %v2096
      %v2098 = vsub.f32 1.5, %v2097
      %v2099 = vmul.f32 %v2094, %v2098
      %vm2100 = vweird.f32 %v2092
      %vm2101 = vweird.f32 %v2094
      %vm2102 = vmor %vm2100, %vm2101
      %v2103 = vsel %vm2102, %v2094, %v2099
      %v2104 = vrsqrt.pop %v2093
      %v2105 = vmul.f32 %v2104, %v2093
      %v2106 = vmul.f32 %v2105, %v2104
      %v2107 = vmul.f32 0.5, %v2106
      %v2108 = vsub.f32 1.5, %v2107
      %v2109 = vmul.f32 %v2104, %v2108
      %vm2110 = vweird.f32 %v2093
      %vm2111 = vweird.f32 %v2104
      %vm2112 = vmor %vm2110, %vm2111
      %v2113 = vsel %vm2112, %v2104, %v2109
      %v2114 = vmul.f32 %v2080, %v2103
      %v2115 = vmul.f32 %v2081, %v2113
      %v2117 = vperm.slane %v2070, 0
      %v2119 = vmul.f32 %v2114, %v2117
      %v2120 = vmul.f32 %v2115, %v2117
      %v2122 = vperm.slane %v2071, 0
      %v2124 = vadd.f32 %v2119, %v2122
      %v2125 = vadd.f32 %v2120, %v2122
      %v2126 = vld [vmem:[%s39] sm:$0xff]
      %v2127 = vld [vmem:[%s39 + $0x8] sm:$0xff]
      %v2128 = vld [vmem:[%s39 + $0x10] sm:$0xff]
      %v2129 = vld [vmem:[%s39 + $0x18] sm:$0xff]
      %v2130 = vld [vmem:[%s41] sm:$0x1]
      %v2132 = vperm.slane %v2130, 0
      %v2135 = vsel %vm1349, %v2124, 0
      %v2138 = vsel %vm1349, %v2125, 0
      %2140 = vmatpush.msra.mxu0 0.0
      %2141 = vmatpush.msra.mxu0 0.0
      %2142 = vmatpush.msra.mxu0 0.0
      %2143 = vmatpush.msra.mxu0 0.0
      %2144 = vmatpush.msra.mxu0 0.0
      %2145 = vmatpush.msra.mxu0 0.0
      %2146 = vmatpush.msra.mxu0 0.0
      %2147 = vmatpush.msra.mxu0 0.0
      %2148 = vmatpush.msra.mxu0 0.0
      %2149 = vmatpush.msra.mxu0 0.0
      %2150 = vmatpush.msra.mxu0 0.0
      %2151 = vmatpush.msra.mxu0 0.0
      %2152 = vmatpush.msra.mxu0 %v2129
      %2153 = vmatpush.msra.mxu0 %v2128
      %2154 = vmatpush.msra.mxu0 %v2127
      %2155 = vmatpush.msra.mxu0 %v2126
      %2156 = vmatmul.f32.gmra.mxu0 %v2135
      %v2157 = vpop.f32.mrf.mxu0
      %v2158 = vadd.f32 %v2132, %v2157
      %2159 = vmatmul.f32.gmra.mxu0 %v2138
      %v2160 = vpop.f32.mrf.mxu0
      %v2161 = vadd.f32 %v2132, %v2160
      %2162 = vdwg.mxu0
      %v2163 = vmul.f32 %v2158, %v2158
      %v2164 = vmul.f32 %v2161, %v2161
      %v2165 = vmul.f32 %v2158, %v2163
      %v2166 = vmul.f32 %v2161, %v2164
      %v2167 = vmul.f32 %v2165, 0.044715
      %v2168 = vmul.f32 %v2166, 0.044715
      %v2169 = vadd.f32 %v2158, %v2167
      %v2170 = vadd.f32 %v2161, %v2168
      %v2171 = vmul.f32 %v2169, 0.7978846
      %v2172 = vmul.f32 %v2170, 0.7978846
      %v2173 = vtanh.pop %v2171
      %v2174 = vtanh.pop %v2172
      %v2175 = vadd.f32 %v2173, 1.0
      %v2176 = vadd.f32 %v2174, 1.0
      %v2177 = vmul.f32 %v2175, 0.5
      %v2178 = vmul.f32 %v2176, 0.5
      %v2179 = vmul.f32 %v2158, %v2177
      %v2180 = vmul.f32 %v2161, %v2178
      %v2181 = vld [vmem:[%s43] sm:$0xff]
      %v2182 = vld [vmem:[%s43 + $0x8] sm:$0xff]
      %v2183 = vld [vmem:[%s43 + $0x10] sm:$0xff]
      %v2184 = vld [vmem:[%s43 + $0x18] sm:$0xff]
      %v2185 = vld [vmem:[%s43 + $0x20] sm:$0xff]
      %v2186 = vld [vmem:[%s43 + $0x28] sm:$0xff]
      %v2187 = vld [vmem:[%s43 + $0x30] sm:$0xff]
      %v2188 = vld [vmem:[%s43 + $0x38] sm:$0xff]
      %v2189 = vld [vmem:[%s45] sm:$0x1]
      %v2191 = vperm.slane %v2189, 0
      %vm2193 = vcmask 523264
      %v2195 = vsel %vm2193, %v2179, 0
      %v2198 = vsel %vm2193, %v2180, 0
      %2200 = vmatpush.msra.mxu0 0.0
      %2201 = vmatpush.msra.mxu0 0.0
      %2202 = vmatpush.msra.mxu0 0.0
      %2203 = vmatpush.msra.mxu0 0.0
      %2204 = vmatpush.msra.mxu0 0.0
      %2205 = vmatpush.msra.mxu0 0.0
      %2206 = vmatpush.msra.mxu0 0.0
      %2207 = vmatpush.msra.mxu0 0.0
      %2208 = vmatpush.msra.mxu0 %v2188
      %2209 = vmatpush.msra.mxu0 %v2187
      %2210 = vmatpush.msra.mxu0 %v2186
      %2211 = vmatpush.msra.mxu0 %v2185
      %2212 = vmatpush.msra.mxu0 %v2184
      %2213 = vmatpush.msra.mxu0 %v2183
      %2214 = vmatpush.msra.mxu0 %v2182
      %2215 = vmatpush.msra.mxu0 %v2181
      %2216 = vmatmul.f32.gmra.mxu0 %v2195
      %v2217 = vpop.f32.mrf.mxu0
      %v2218 = vadd.f32 %v2191, %v2217
      %2219 = vmatmul.f32.gmra.mxu0 %v2198
      %v2220 = vpop.f32.mrf.mxu0
      %v2221 = vadd.f32 %v2191, %v2220
      %2222 = vdwg.mxu0
      %v2223 = vadd.f32 %v2124, %v2218
      %v2224 = vadd.f32 %v2125, %v2221
      %v2225 = vld [vmem:[%s47] sm:$0x1]
      %v2226 = vld [vmem:[%s49] sm:$0x1]
      %v2227 = vsel %vm1349, %v2223, 0.0
      %2228 = vadd.xlane.f32.xlu0 %v2227
      %v2229 = vpop.xlane.xlu0 %2228
      %v2230 = vsel %vm1349, %v2224, 0.0
      %2231 = vadd.xlane.f32.xlu0 %v2230
      %v2232 = vpop.xlane.xlu0 %2231
      %v2233 = vmul.f32 %v2229, %v1523
      %v2234 = vmul.f32 %v2232, %v1523
      %v2235 = vsub.f32 %v2223, %v2233
      %v2236 = vsub.f32 %v2224, %v2234
      %v2237 = vmul.f32 %v2235, %v2235
      %v2238 = vmul.f32 %v2236, %v2236
      %v2239 = vsel %vm1349, %v2237, 0.0
      %2240 = vadd.xlane.f32.xlu0 %v2239
      %v2241 = vpop.xlane.xlu0 %2240
      %v2242 = vsel %vm1349, %v2238, 0.0
      %2243 = vadd.xlane.f32.xlu0 %v2242
      %v2244 = vpop.xlane.xlu0 %2243
      %v2245 = vmul.f32 %v2241, %v1523
      %v2246 = vmul.f32 %v2244, %v1523
      %v2247 = vadd.f32 %v2245, 1e-05
      %v2248 = vadd.f32 %v2246, 1e-05
      %v2249 = vrsqrt.pop %v2247
      %v2250 = vmul.f32 %v2249, %v2247
      %v2251 = vmul.f32 %v2250, %v2249
      %v2252 = vmul.f32 0.5, %v2251
      %v2253 = vsub.f32 1.5, %v2252
      %v2254 = vmul.f32 %v2249, %v2253
      %vm2255 = vweird.f32 %v2247
      %vm2256 = vweird.f32 %v2249
      %vm2257 = vmor %vm2255, %vm2256
      %v2258 = vsel %vm2257, %v2249, %v2254
      %v2259 = vrsqrt.pop %v2248
      %v2260 = vmul.f32 %v2259, %v2248
      %v2261 = vmul.f32 %v2260, %v2259
      %v2262 = vmul.f32 0.5, %v2261
      %v2263 = vsub.f32 1.5, %v2262
      %v2264 = vmul.f32 %v2259, %v2263
      %vm2265 = vweird.f32 %v2248
      %vm2266 = vweird.f32 %v2259
      %vm2267 = vmor %vm2265, %vm2266
      %v2268 = vsel %vm2267, %v2259, %v2264
      %v2269 = vmul.f32 %v2235, %v2258
      %v2270 = vmul.f32 %v2236, %v2268
      %v2272 = vperm.slane %v2225, 0
      %v2274 = vmul.f32 %v2269, %v2272
      %v2275 = vmul.f32 %v2270, %v2272
      %v2277 = vperm.slane %v2226, 0
      %v2279 = vadd.f32 %v2274, %v2277
      %v2280 = vadd.f32 %v2275, %v2277
      %v2281 = vld [vmem:[%s51] sm:$0xff]
      %v2282 = vld [vmem:[%s51 + $0x8] sm:$0xff]
      %v2283 = vld [vmem:[%s51 + $0x10] sm:$0xff]
      %v2284 = vld [vmem:[%s51 + $0x18] sm:$0xff]
      %v2285 = vld [vmem:[%s53] sm:$0x1]
      %v2287 = vperm.slane %v2285, 0
      %v2290 = vsel %vm1349, %v2279, 0
      %v2293 = vsel %vm1349, %v2280, 0
      %2295 = vmatpush.msra.mxu0 0.0
      %2296 = vmatpush.msra.mxu0 0.0
      %2297 = vmatpush.msra.mxu0 0.0
      %2298 = vmatpush.msra.mxu0 0.0
      %2299 = vmatpush.msra.mxu0 0.0
      %2300 = vmatpush.msra.mxu0 0.0
      %2301 = vmatpush.msra.mxu0 0.0
      %2302 = vmatpush.msra.mxu0 0.0
      %2303 = vmatpush.msra.mxu0 0.0
      %2304 = vmatpush.msra.mxu0 0.0
      %2305 = vmatpush.msra.mxu0 0.0
      %2306 = vmatpush.msra.mxu0 0.0
      %2307 = vmatpush.msra.mxu0 %v2284
      %2308 = vmatpush.msra.mxu0 %v2283
      %2309 = vmatpush.msra.mxu0 %v2282
      %2310 = vmatpush.msra.mxu0 %v2281
      %2311 = vmatmul.f32.gmra.mxu0 %v2290
      %v2312 = vpop.f32.mrf.mxu0
      %v2313 = vadd.f32 %v2287, %v2312
      %2314 = vmatmul.f32.gmra.mxu0 %v2293
      %v2315 = vpop.f32.mrf.mxu0
      %v2316 = vadd.f32 %v2287, %v2315
      %2317 = vdwg.mxu0
      %v2318 = vmul.f32 %v2313, 0.35355338
      %v2319 = vmul.f32 %v2316, 0.35355338
      %2322 = vrot.lane.b32.xlu0 %v2313, 96
      %v2323 = vpop.permute.xlu0 %2322
      %2324 = vrot.lane.b32.xlu0 %v2316, 96
      %v2325 = vpop.permute.xlu0 %2324
      %v2327 = vsel %vm1621, %v2318, 0
      %v2330 = vsel %vm1621, %v2319, 0
      %v2332 = vsel %vm1621, %v2323, 0
      %v2334 = vsel %vm1621, %v2325, 0
      %2336 = vmatpush.xpose.msra.mxu0 0.0
      %2337 = vmatpush.xpose.msra.mxu0 0.0
      %2338 = vmatpush.xpose.msra.mxu0 0.0
      %2339 = vmatpush.xpose.msra.mxu0 0.0
      %2340 = vmatpush.xpose.msra.mxu0 0.0
      %2341 = vmatpush.xpose.msra.mxu0 0.0
      %2342 = vmatpush.xpose.msra.mxu0 0.0
      %2343 = vmatpush.xpose.msra.mxu0 0.0
      %2344 = vmatpush.xpose.msra.mxu0 0.0
      %2345 = vmatpush.xpose.msra.mxu0 0.0
      %2346 = vmatpush.xpose.msra.mxu0 0.0
      %2347 = vmatpush.xpose.msra.mxu0 0.0
      %2348 = vmatpush.xpose.msra.mxu0 0.0
      %2349 = vmatpush.xpose.msra.mxu0 0.0
      %2350 = vmatpush.xpose.msra.mxu0 %v2334
      %2351 = vmatpush.xpose.msra.mxu0 %v2332
      %2352 = vmatmul.f32.gmra.mxu0 %v2327
      %v2353 = vpop.f32.mrf.mxu0
      %v2354 = vadd.f32 %v1613, %v2353
      %2355 = vmatmul.f32.gmra.mxu0 %v2330
      %v2356 = vpop.f32.mrf.mxu0
      %v2357 = vadd.f32 %v1613, %v2356
      %2358 = vdwg.mxu0
      %v2359 = vsel %vm1338, %v2354, -inf
      %2360 = vmax.xlane.f32.xlu0 %v2359
      %v2361 = vpop.xlane.xlu0 %2360
      %v2362 = vsel %vm1338, %v2357, -inf
      %2363 = vmax.xlane.f32.xlu0 %v2362
      %v2364 = vpop.xlane.xlu0 %2363
      %v2365 = vsub.f32 %v2354, %v2361
      %v2366 = vsub.f32 %v2357, %v2364
      %v2367 = vmul.f32 %v2365, 1.442695
      %v2368 = vpow.pop %v2367
      %v2369 = vmul.f32 %v2366, 1.442695
      %v2370 = vpow.pop %v2369
      %v2371 = vsel %vm1338, %v2368, 0.0
      %2372 = vadd.xlane.f32.xlu0 %v2371
      %v2373 = vpop.xlane.xlu0 %2372
      %v2374 = vsel %vm1338, %v2370, 0.0
      %2375 = vadd.xlane.f32.xlu0 %v2374
      %v2376 = vpop.xlane.xlu0 %2375
      %2377 = vrot.lane.b32.xlu0 %v2313, 64
      %v2378 = vpop.permute.xlu0 %2377
      %2379 = vrot.lane.b32.xlu0 %v2316, 64
      %v2380 = vpop.permute.xlu0 %2379
      %v2384 = vsel %vm1338, %v2368, 0
      %v2387 = vsel %vm1338, %v2370, 0
      %2389 = vmatpush.msra.mxu0 0.0
      %2390 = vmatpush.msra.mxu0 0.0
      %2391 = vmatpush.msra.mxu0 0.0
      %2392 = vmatpush.msra.mxu0 0.0
      %2393 = vmatpush.msra.mxu0 0.0
      %2394 = vmatpush.msra.mxu0 0.0
      %2395 = vmatpush.msra.mxu0 0.0
      %2396 = vmatpush.msra.mxu0 0.0
      %2397 = vmatpush.msra.mxu0 0.0
      %2398 = vmatpush.msra.mxu0 0.0
      %2399 = vmatpush.msra.mxu0 0.0
      %2400 = vmatpush.msra.mxu0 0.0
      %2401 = vmatpush.msra.mxu0 0.0
      %2402 = vmatpush.msra.mxu0 0.0
      %2403 = vmatpush.msra.mxu0 %v2380
      %2404 = vmatpush.msra.mxu0 %v2378
      %2405 = vmatmul.f32.gmra.mxu0 %v2384
      %v2406 = vpop.f32.mrf.mxu0
      %v2407 = vadd.f32 0.0, %v2406
      %2408 = vmatmul.f32.gmra.mxu0 %v2387
      %v2409 = vpop.f32.mrf.mxu0
      %v2410 = vadd.f32 0.0, %v2409
      %2411 = vdwg.mxu0
      %v2412 = vrcp.pop %v2373
      %v2413 = vrcp.pop %v2376
      %v2414 = vmul.f32 %v2407, %v2412
      %v2415 = vmul.f32 %v2410, %v2413
      %2416 = vrot.lane.b32.xlu0 %v2318, 120
      %v2417 = vpop.permute.xlu0 %2416
      %2418 = vrot.lane.b32.xlu0 %v2319, 120
      %v2419 = vpop.permute.xlu0 %2418
      %2420 = vrot.lane.b32.xlu0 %v2313, 88
      %v2421 = vpop.permute.xlu0 %2420
      %2422 = vrot.lane.b32.xlu0 %v2316, 88
      %v2423 = vpop.permute.xlu0 %2422
      %v2424 = vsel %vm1621, %v2417, 0
      %v2426 = vsel %vm1621, %v2419, 0
      %v2428 = vsel %vm1621, %v2421, 0
      %v2430 = vsel %vm1621, %v2423, 0
      %2432 = vmatpush.xpose.msra.mxu0 0.0
      %2433 = vmatpush.xpose.msra.mxu0 0.0
      %2434 = vmatpush.xpose.msra.mxu0 0.0
      %2435 = vmatpush.xpose.msra.mxu0 0.0
      %2436 = vmatpush.xpose.msra.mxu0 0.0
      %2437 = vmatpush.xpose.msra.mxu0 0.0
      %2438 = vmatpush.xpose.msra.mxu0 0.0
      %2439 = vmatpush.xpose.msra.mxu0 0.0
      %2440 = vmatpush.xpose.msra.mxu0 0.0
      %2441 = vmatpush.xpose.msra.mxu0 0.0
      %2442 = vmatpush.xpose.msra.mxu0 0.0
      %2443 = vmatpush.xpose.msra.mxu0 0.0
      %2444 = vmatpush.xpose.msra.mxu0 0.0
      %2445 = vmatpush.xpose.msra.mxu0 0.0
      %2446 = vmatpush.xpose.msra.mxu0 %v2430
      %2447 = vmatpush.xpose.msra.mxu0 %v2428
      %2448 = vmatmul.f32.gmra.mxu0 %v2424
      %v2449 = vpop.f32.mrf.mxu0
      %v2450 = vadd.f32 %v1613, %v2449
      %2451 = vmatmul.f32.gmra.mxu0 %v2426
      %v2452 = vpop.f32.mrf.mxu0
      %v2453 = vadd.f32 %v1613, %v2452
      %2454 = vdwg.mxu0
      %v2455 = vsel %vm1338, %v2450, -inf
      %2456 = vmax.xlane.f32.xlu0 %v2455
      %v2457 = vpop.xlane.xlu0 %2456
      %v2458 = vsel %vm1338, %v2453, -inf
      %2459 = vmax.xlane.f32.xlu0 %v2458
      %v2460 = vpop.xlane.xlu0 %2459
      %v2461 = vsub.f32 %v2450, %v2457
      %v2462 = vsub.f32 %v2453, %v2460
      %v2463 = vmul.f32 %v2461, 1.442695
      %v2464 = vpow.pop %v2463
      %v2465 = vmul.f32 %v2462, 1.442695
      %v2466 = vpow.pop %v2465
      %v2467 = vsel %vm1338, %v2464, 0.0
      %2468 = vadd.xlane.f32.xlu0 %v2467
      %v2469 = vpop.xlane.xlu0 %2468
      %v2470 = vsel %vm1338, %v2466, 0.0
      %2471 = vadd.xlane.f32.xlu0 %v2470
      %v2472 = vpop.xlane.xlu0 %2471
      %2473 = vrot.lane.b32.xlu0 %v2313, 56
      %v2474 = vpop.permute.xlu0 %2473
      %2475 = vrot.lane.b32.xlu0 %v2316, 56
      %v2476 = vpop.permute.xlu0 %2475
      %v2480 = vsel %vm1338, %v2464, 0
      %v2483 = vsel %vm1338, %v2466, 0
      %2485 = vmatpush.msra.mxu0 0.0
      %2486 = vmatpush.msra.mxu0 0.0
      %2487 = vmatpush.msra.mxu0 0.0
      %2488 = vmatpush.msra.mxu0 0.0
      %2489 = vmatpush.msra.mxu0 0.0
      %2490 = vmatpush.msra.mxu0 0.0
      %2491 = vmatpush.msra.mxu0 0.0
      %2492 = vmatpush.msra.mxu0 0.0
      %2493 = vmatpush.msra.mxu0 0.0
      %2494 = vmatpush.msra.mxu0 0.0
      %2495 = vmatpush.msra.mxu0 0.0
      %2496 = vmatpush.msra.mxu0 0.0
      %2497 = vmatpush.msra.mxu0 0.0
      %2498 = vmatpush.msra.mxu0 0.0
      %2499 = vmatpush.msra.mxu0 %v2476
      %2500 = vmatpush.msra.mxu0 %v2474
      %2501 = vmatmul.f32.gmra.mxu0 %v2480
      %v2502 = vpop.f32.mrf.mxu0
      %v2503 = vadd.f32 0.0, %v2502
      %2504 = vmatmul.f32.gmra.mxu0 %v2483
      %v2505 = vpop.f32.mrf.mxu0
      %v2506 = vadd.f32 0.0, %v2505
      %2507 = vdwg.mxu0
      %v2508 = vrcp.pop %v2469
      %v2509 = vrcp.pop %v2472
      %v2510 = vmul.f32 %v2503, %v2508
      %v2511 = vmul.f32 %v2506, %v2509
      %2512 = vrot.lane.b32.xlu0 %v2318, 112
      %v2513 = vpop.permute.xlu0 %2512
      %2514 = vrot.lane.b32.xlu0 %v2319, 112
      %v2515 = vpop.permute.xlu0 %2514
      %2516 = vrot.lane.b32.xlu0 %v2313, 80
      %v2517 = vpop.permute.xlu0 %2516
      %2518 = vrot.lane.b32.xlu0 %v2316, 80
      %v2519 = vpop.permute.xlu0 %2518
      %v2520 = vsel %vm1621, %v2513, 0
      %v2522 = vsel %vm1621, %v2515, 0
      %v2524 = vsel %vm1621, %v2517, 0
      %v2526 = vsel %vm1621, %v2519, 0
      %2528 = vmatpush.xpose.msra.mxu0 0.0
      %2529 = vmatpush.xpose.msra.mxu0 0.0
      %2530 = vmatpush.xpose.msra.mxu0 0.0
      %2531 = vmatpush.xpose.msra.mxu0 0.0
      %2532 = vmatpush.xpose.msra.mxu0 0.0
      %2533 = vmatpush.xpose.msra.mxu0 0.0
      %2534 = vmatpush.xpose.msra.mxu0 0.0
      %2535 = vmatpush.xpose.msra.mxu0 0.0
      %2536 = vmatpush.xpose.msra.mxu0 0.0
      %2537 = vmatpush.xpose.msra.mxu0 0.0
      %2538 = vmatpush.xpose.msra.mxu0 0.0
      %2539 = vmatpush.xpose.msra.mxu0 0.0
      %2540 = vmatpush.xpose.msra.mxu0 0.0
      %2541 = vmatpush.xpose.msra.mxu0 0.0
      %2542 = vmatpush.xpose.msra.mxu0 %v2526
      %2543 = vmatpush.xpose.msra.mxu0 %v2524
      %2544 = vmatmul.f32.gmra.mxu0 %v2520
      %v2545 = vpop.f32.mrf.mxu0
      %v2546 = vadd.f32 %v1613, %v2545
      %2547 = vmatmul.f32.gmra.mxu0 %v2522
      %v2548 = vpop.f32.mrf.mxu0
      %v2549 = vadd.f32 %v1613, %v2548
      %2550 = vdwg.mxu0
      %v2551 = vsel %vm1338, %v2546, -inf
      %2552 = vmax.xlane.f32.xlu0 %v2551
      %v2553 = vpop.xlane.xlu0 %2552
      %v2554 = vsel %vm1338, %v2549, -inf
      %2555 = vmax.xlane.f32.xlu0 %v2554
      %v2556 = vpop.xlane.xlu0 %2555
      %v2557 = vsub.f32 %v2546, %v2553
      %v2558 = vsub.f32 %v2549, %v2556
      %v2559 = vmul.f32 %v2557, 1.442695
      %v2560 = vpow.pop %v2559
      %v2561 = vmul.f32 %v2558, 1.442695
      %v2562 = vpow.pop %v2561
      %v2563 = vsel %vm1338, %v2560, 0.0
      %2564 = vadd.xlane.f32.xlu0 %v2563
      %v2565 = vpop.xlane.xlu0 %2564
      %v2566 = vsel %vm1338, %v2562, 0.0
      %2567 = vadd.xlane.f32.xlu0 %v2566
      %v2568 = vpop.xlane.xlu0 %2567
      %2569 = vrot.lane.b32.xlu0 %v2313, 48
      %v2570 = vpop.permute.xlu0 %2569
      %2571 = vrot.lane.b32.xlu0 %v2316, 48
      %v2572 = vpop.permute.xlu0 %2571
      %v2576 = vsel %vm1338, %v2560, 0
      %v2579 = vsel %vm1338, %v2562, 0
      %2581 = vmatpush.msra.mxu0 0.0
      %2582 = vmatpush.msra.mxu0 0.0
      %2583 = vmatpush.msra.mxu0 0.0
      %2584 = vmatpush.msra.mxu0 0.0
      %2585 = vmatpush.msra.mxu0 0.0
      %2586 = vmatpush.msra.mxu0 0.0
      %2587 = vmatpush.msra.mxu0 0.0
      %2588 = vmatpush.msra.mxu0 0.0
      %2589 = vmatpush.msra.mxu0 0.0
      %2590 = vmatpush.msra.mxu0 0.0
      %2591 = vmatpush.msra.mxu0 0.0
      %2592 = vmatpush.msra.mxu0 0.0
      %2593 = vmatpush.msra.mxu0 0.0
      %2594 = vmatpush.msra.mxu0 0.0
      %2595 = vmatpush.msra.mxu0 %v2572
      %2596 = vmatpush.msra.mxu0 %v2570
      %2597 = vmatmul.f32.gmra.mxu0 %v2576
      %v2598 = vpop.f32.mrf.mxu0
      %v2599 = vadd.f32 0.0, %v2598
      %2600 = vmatmul.f32.gmra.mxu0 %v2579
      %v2601 = vpop.f32.mrf.mxu0
      %v2602 = vadd.f32 0.0, %v2601
      %2603 = vdwg.mxu0
      %v2604 = vrcp.pop %v2565
      %v2605 = vrcp.pop %v2568
      %v2606 = vmul.f32 %v2599, %v2604
      %v2607 = vmul.f32 %v2602, %v2605
      %2608 = vrot.lane.b32.xlu0 %v2318, 104
      %v2609 = vpop.permute.xlu0 %2608
      %2610 = vrot.lane.b32.xlu0 %v2319, 104
      %v2611 = vpop.permute.xlu0 %2610
      %2612 = vrot.lane.b32.xlu0 %v2313, 72
      %v2613 = vpop.permute.xlu0 %2612
      %2614 = vrot.lane.b32.xlu0 %v2316, 72
      %v2615 = vpop.permute.xlu0 %2614
      %v2616 = vsel %vm1621, %v2609, 0
      %v2618 = vsel %vm1621, %v2611, 0
      %v2620 = vsel %vm1621, %v2613, 0
      %v2622 = vsel %vm1621, %v2615, 0
      %2624 = vmatpush.xpose.msra.mxu0 0.0
      %2625 = vmatpush.xpose.msra.mxu0 0.0
      %2626 = vmatpush.xpose.msra.mxu0 0.0
      %2627 = vmatpush.xpose.msra.mxu0 0.0
      %2628 = vmatpush.xpose.msra.mxu0 0.0
      %2629 = vmatpush.xpose.msra.mxu0 0.0
      %2630 = vmatpush.xpose.msra.mxu0 0.0
      %2631 = vmatpush.xpose.msra.mxu0 0.0
      %2632 = vmatpush.xpose.msra.mxu0 0.0
      %2633 = vmatpush.xpose.msra.mxu0 0.0
      %2634 = vmatpush.xpose.msra.mxu0 0.0
      %2635 = vmatpush.xpose.msra.mxu0 0.0
      %2636 = vmatpush.xpose.msra.mxu0 0.0
      %2637 = vmatpush.xpose.msra.mxu0 0.0
      %2638 = vmatpush.xpose.msra.mxu0 %v2622
      %2639 = vmatpush.xpose.msra.mxu0 %v2620
      %2640 = vmatmul.f32.gmra.mxu0 %v2616
      %v2641 = vpop.f32.mrf.mxu0
      %v2642 = vadd.f32 %v1613, %v2641
      %2643 = vmatmul.f32.gmra.mxu0 %v2618
      %v2644 = vpop.f32.mrf.mxu0
      %v2645 = vadd.f32 %v1613, %v2644
      %2646 = vdwg.mxu0
      %v2647 = vsel %vm1338, %v2642, -inf
      %2648 = vmax.xlane.f32.xlu0 %v2647
      %v2649 = vpop.xlane.xlu0 %2648
      %v2650 = vsel %vm1338, %v2645, -inf
      %2651 = vmax.xlane.f32.xlu0 %v2650
      %v2652 = vpop.xlane.xlu0 %2651
      %v2653 = vsub.f32 %v2642, %v2649
      %v2654 = vsub.f32 %v2645, %v2652
      %v2655 = vmul.f32 %v2653, 1.442695
      %v2656 = vpow.pop %v2655
      %v2657 = vmul.f32 %v2654, 1.442695
      %v2658 = vpow.pop %v2657
      %v2659 = vsel %vm1338, %v2656, 0.0
      %2660 = vadd.xlane.f32.xlu0 %v2659
      %v2661 = vpop.xlane.xlu0 %2660
      %v2662 = vsel %vm1338, %v2658, 0.0
      %2663 = vadd.xlane.f32.xlu0 %v2662
      %v2664 = vpop.xlane.xlu0 %2663
      %2665 = vrot.lane.b32.xlu0 %v2313, 40
      %v2666 = vpop.permute.xlu0 %2665
      %2667 = vrot.lane.b32.xlu0 %v2316, 40
      %v2668 = vpop.permute.xlu0 %2667
      %v2672 = vsel %vm1338, %v2656, 0
      %v2675 = vsel %vm1338, %v2658, 0
      %2677 = vmatpush.msra.mxu0 0.0
      %2678 = vmatpush.msra.mxu0 0.0
      %2679 = vmatpush.msra.mxu0 0.0
      %2680 = vmatpush.msra.mxu0 0.0
      %2681 = vmatpush.msra.mxu0 0.0
      %2682 = vmatpush.msra.mxu0 0.0
      %2683 = vmatpush.msra.mxu0 0.0
      %2684 = vmatpush.msra.mxu0 0.0
      %2685 = vmatpush.msra.mxu0 0.0
      %2686 = vmatpush.msra.mxu0 0.0
      %2687 = vmatpush.msra.mxu0 0.0
      %2688 = vmatpush.msra.mxu0 0.0
      %2689 = vmatpush.msra.mxu0 0.0
      %2690 = vmatpush.msra.mxu0 0.0
      %2691 = vmatpush.msra.mxu0 %v2668
      %2692 = vmatpush.msra.mxu0 %v2666
      %2693 = vmatmul.f32.gmra.mxu0 %v2672
      %v2694 = vpop.f32.mrf.mxu0
      %v2695 = vadd.f32 0.0, %v2694
      %2696 = vmatmul.f32.gmra.mxu0 %v2675
      %v2697 = vpop.f32.mrf.mxu0
      %v2698 = vadd.f32 0.0, %v2697
      %2699 = vdwg.mxu0
      %v2700 = vrcp.pop %v2661
      %v2701 = vrcp.pop %v2664
      %v2702 = vmul.f32 %v2695, %v2700
      %v2703 = vmul.f32 %v2698, %v2701
      %2706 = vrot.lane.b32.xlu0 %v2510, 8
      %v2707 = vpop.permute.xlu0 %2706
      %2708 = vrot.lane.b32.xlu0 %v2511, 8
      %v2709 = vpop.permute.xlu0 %2708
      %2714 = vrot.lane.b32.xlu0 %v2606, 16
      %v2715 = vpop.permute.xlu0 %2714
      %2716 = vrot.lane.b32.xlu0 %v2607, 16
      %v2717 = vpop.permute.xlu0 %2716
      %2722 = vrot.lane.b32.xlu0 %v2702, 24
      %v2723 = vpop.permute.xlu0 %2722
      %2724 = vrot.lane.b32.xlu0 %v2703, 24
      %v2725 = vpop.permute.xlu0 %2724
      %v2728 = vsel %vm1621, %v2414, %v2707
      %v2729 = vsel %vm1621, %v2415, %v2709
      %v2730 = vsel %vm1338, %v2728, %v2715
      %v2731 = vsel %vm1338, %v2729, %v2717
      %v2732 = vsel %vm2028, %v2730, %v2723
      %v2733 = vsel %vm2028, %v2731, %v2725
      %v2734 = vld [vmem:[%s55] sm:$0xff]
      %v2735 = vld [vmem:[%s55 + $0x8] sm:$0xff]
      %v2736 = vld [vmem:[%s55 + $0x10] sm:$0xff]
      %v2737 = vld [vmem:[%s55 + $0x18] sm:$0xff]
      %v2738 = vld [vmem:[%s57] sm:$0x1]
      %v2740 = vperm.slane %v2738, 0
      %v2743 = vsel %vm1349, %v2732, 0
      %v2746 = vsel %vm1349, %v2733, 0
      %2748 = vmatpush.msra.mxu0 0.0
      %2749 = vmatpush.msra.mxu0 0.0
      %2750 = vmatpush.msra.mxu0 0.0
      %2751 = vmatpush.msra.mxu0 0.0
      %2752 = vmatpush.msra.mxu0 0.0
      %2753 = vmatpush.msra.mxu0 0.0
      %2754 = vmatpush.msra.mxu0 0.0
      %2755 = vmatpush.msra.mxu0 0.0
      %2756 = vmatpush.msra.mxu0 0.0
      %2757 = vmatpush.msra.mxu0 0.0
      %2758 = vmatpush.msra.mxu0 0.0
      %2759 = vmatpush.msra.mxu0 0.0
      %2760 = vmatpush.msra.mxu0 %v2737
      %2761 = vmatpush.msra.mxu0 %v2736
      %2762 = vmatpush.msra.mxu0 %v2735
      %2763 = vmatpush.msra.mxu0 %v2734
      %2764 = vmatmul.f32.gmra.mxu0 %v2743
      %v2765 = vpop.f32.mrf.mxu0
      %v2766 = vadd.f32 %v2740, %v2765
      %2767 = vmatmul.f32.gmra.mxu0 %v2746
      %v2768 = vpop.f32.mrf.mxu0
      %v2769 = vadd.f32 %v2740, %v2768
      %2770 = vdwg.mxu0
      %v2771 = vadd.f32 %v2279, %v2766
      %v2772 = vadd.f32 %v2280, %v2769
      %v2773 = vld [vmem:[%s59] sm:$0x1]
      %v2774 = vld [vmem:[%s61] sm:$0x1]
      %v2775 = vsel %vm1349, %v2771, 0.0
      %2776 = vadd.xlane.f32.xlu0 %v2775
      %v2777 = vpop.xlane.xlu0 %2776
      %v2778 = vsel %vm1349, %v2772, 0.0
      %2779 = vadd.xlane.f32.xlu0 %v2778
      %v2780 = vpop.xlane.xlu0 %2779
      %v2781 = vmul.f32 %v2777, %v1523
      %v2782 = vmul.f32 %v2780, %v1523
      %v2783 = vsub.f32 %v2771, %v2781
      %v2784 = vsub.f32 %v2772, %v2782
      %v2785 = vmul.f32 %v2783, %v2783
      %v2786 = vmul.f32 %v2784, %v2784
      %v2787 = vsel %vm1349, %v2785, 0.0
      %2788 = vadd.xlane.f32.xlu0 %v2787
      %v2789 = vpop.xlane.xlu0 %2788
      %v2790 = vsel %vm1349, %v2786, 0.0
      %2791 = vadd.xlane.f32.xlu0 %v2790
      %v2792 = vpop.xlane.xlu0 %2791
      %v2793 = vmul.f32 %v2789, %v1523
      %v2794 = vmul.f32 %v2792, %v1523
      %v2795 = vadd.f32 %v2793, 1e-05
      %v2796 = vadd.f32 %v2794, 1e-05
      %v2797 = vrsqrt.pop %v2795
      %v2798 = vmul.f32 %v2797, %v2795
      %v2799 = vmul.f32 %v2798, %v2797
      %v2800 = vmul.f32 0.5, %v2799
      %v2801 = vsub.f32 1.5, %v2800
      %v2802 = vmul.f32 %v2797, %v2801
      %vm2803 = vweird.f32 %v2795
      %vm2804 = vweird.f32 %v2797
      %vm2805 = vmor %vm2803, %vm2804
      %v2806 = vsel %vm2805, %v2797, %v2802
      %v2807 = vrsqrt.pop %v2796
      %v2808 = vmul.f32 %v2807, %v2796
      %v2809 = vmul.f32 %v2808, %v2807
      %v2810 = vmul.f32 0.5, %v2809
      %v2811 = vsub.f32 1.5, %v2810
      %v2812 = vmul.f32 %v2807, %v2811
      %vm2813 = vweird.f32 %v2796
      %vm2814 = vweird.f32 %v2807
      %vm2815 = vmor %vm2813, %vm2814
      %v2816 = vsel %vm2815, %v2807, %v2812
      %v2817 = vmul.f32 %v2783, %v2806
      %v2818 = vmul.f32 %v2784, %v2816
      %v2820 = vperm.slane %v2773, 0
      %v2822 = vmul.f32 %v2817, %v2820
      %v2823 = vmul.f32 %v2818, %v2820
      %v2825 = vperm.slane %v2774, 0
      %v2827 = vadd.f32 %v2822, %v2825
      %v2828 = vadd.f32 %v2823, %v2825
      %v2829 = vld [vmem:[%s63] sm:$0xff]
      %v2830 = vld [vmem:[%s63 + $0x8] sm:$0xff]
      %v2831 = vld [vmem:[%s63 + $0x10] sm:$0xff]
      %v2832 = vld [vmem:[%s63 + $0x18] sm:$0xff]
      %v2833 = vld [vmem:[%s65] sm:$0x1]
      %v2835 = vperm.slane %v2833, 0
      %v2838 = vsel %vm1349, %v2827, 0
      %v2841 = vsel %vm1349, %v2828, 0
      %2843 = vmatpush.msra.mxu0 0.0
      %2844 = vmatpush.msra.mxu0 0.0
      %2845 = vmatpush.msra.mxu0 0.0
      %2846 = vmatpush.msra.mxu0 0.0
      %2847 = vmatpush.msra.mxu0 0.0
      %2848 = vmatpush.msra.mxu0 0.0
      %2849 = vmatpush.msra.mxu0 0.0
      %2850 = vmatpush.msra.mxu0 0.0
      %2851 = vmatpush.msra.mxu0 0.0
      %2852 = vmatpush.msra.mxu0 0.0
      %2853 = vmatpush.msra.mxu0 0.0
      %2854 = vmatpush.msra.mxu0 0.0
      %2855 = vmatpush.msra.mxu0 %v2832
      %2856 = vmatpush.msra.mxu0 %v2831
      %2857 = vmatpush.msra.mxu0 %v2830
      %2858 = vmatpush.msra.mxu0 %v2829
      %2859 = vmatmul.f32.gmra.mxu0 %v2838
      %v2860 = vpop.f32.mrf.mxu0
      %v2861 = vadd.f32 %v2835, %v2860
      %2862 = vmatmul.f32.gmra.mxu0 %v2841
      %v2863 = vpop.f32.mrf.mxu0
      %v2864 = vadd.f32 %v2835, %v2863
      %2865 = vdwg.mxu0
      %v2866 = vmul.f32 %v2861, %v2861
      %v2867 = vmul.f32 %v2864, %v2864
      %v2868 = vmul.f32 %v2861, %v2866
      %v2869 = vmul.f32 %v2864, %v2867
      %v2870 = vmul.f32 %v2868, 0.044715
      %v2871 = vmul.f32 %v2869, 0.044715
      %v2872 = vadd.f32 %v2861, %v2870
      %v2873 = vadd.f32 %v2864, %v2871
      %v2874 = vmul.f32 %v2872, 0.7978846
      %v2875 = vmul.f32 %v2873, 0.7978846
      %v2876 = vtanh.pop %v2874
      %v2877 = vtanh.pop %v2875
      %v2878 = vadd.f32 %v2876, 1.0
      %v2879 = vadd.f32 %v2877, 1.0
      %v2880 = vmul.f32 %v2878, 0.5
      %v2881 = vmul.f32 %v2879, 0.5
      %v2882 = vmul.f32 %v2861, %v2880
      %v2883 = vmul.f32 %v2864, %v2881
      %v2884 = vld [vmem:[%s67] sm:$0xff]
      %v2885 = vld [vmem:[%s67 + $0x8] sm:$0xff]
      %v2886 = vld [vmem:[%s67 + $0x10] sm:$0xff]
      %v2887 = vld [vmem:[%s67 + $0x18] sm:$0xff]
      %v2888 = vld [vmem:[%s67 + $0x20] sm:$0xff]
      %v2889 = vld [vmem:[%s67 + $0x28] sm:$0xff]
      %v2890 = vld [vmem:[%s67 + $0x30] sm:$0xff]
      %v2891 = vld [vmem:[%s67 + $0x38] sm:$0xff]
      %v2892 = vld [vmem:[%s69] sm:$0x1]
      %v2894 = vperm.slane %v2892, 0
      %v2897 = vsel %vm2193, %v2882, 0
      %v2900 = vsel %vm2193, %v2883, 0
      %2902 = vmatpush.msra.mxu0 0.0
      %2903 = vmatpush.msra.mxu0 0.0
      %2904 = vmatpush.msra.mxu0 0.0
      %2905 = vmatpush.msra.mxu0 0.0
      %2906 = vmatpush.msra.mxu0 0.0
      %2907 = vmatpush.msra.mxu0 0.0
      %2908 = vmatpush.msra.mxu0 0.0
      %2909 = vmatpush.msra.mxu0 0.0
      %2910 = vmatpush.msra.mxu0 %v2891
      %2911 = vmatpush.msra.mxu0 %v2890
      %2912 = vmatpush.msra.mxu0 %v2889
      %2913 = vmatpush.msra.mxu0 %v2888
      %2914 = vmatpush.msra.mxu0 %v2887
      %2915 = vmatpush.msra.mxu0 %v2886
      %2916 = vmatpush.msra.mxu0 %v2885
      %2917 = vmatpush.msra.mxu0 %v2884
      %2918 = vmatmul.f32.gmra.mxu0 %v2897
      %v2919 = vpop.f32.mrf.mxu0
      %v2920 = vadd.f32 %v2894, %v2919
      %2921 = vmatmul.f32.gmra.mxu0 %v2900
      %v2922 = vpop.f32.mrf.mxu0
      %v2923 = vadd.f32 %v2894, %v2922
      %2924 = vdwg.mxu0
      %v2925 = vadd.f32 %v2827, %v2920
      %v2926 = vadd.f32 %v2828, %v2923
      %v2927 = vld [vmem:[%s71] sm:$0x1]
      %v2928 = vld [vmem:[%s73] sm:$0x1]
      %v2929 = vsel %vm1349, %v2925, 0.0
      %2930 = vadd.xlane.f32.xlu0 %v2929
      %v2931 = vpop.xlane.xlu0 %2930
      %v2932 = vsel %vm1349, %v2926, 0.0
      %2933 = vadd.xlane.f32.xlu0 %v2932
      %v2934 = vpop.xlane.xlu0 %2933
      %v2935 = vmul.f32 %v2931, %v1523
      %v2936 = vmul.f32 %v2934, %v1523
      %v2937 = vsub.f32 %v2925, %v2935
      %v2938 = vsub.f32 %v2926, %v2936
      %v2939 = vmul.f32 %v2937, %v2937
      %v2940 = vmul.f32 %v2938, %v2938
      %v2941 = vsel %vm1349, %v2939, 0.0
      %2942 = vadd.xlane.f32.xlu0 %v2941
      %v2943 = vpop.xlane.xlu0 %2942
      %v2944 = vsel %vm1349, %v2940, 0.0
      %2945 = vadd.xlane.f32.xlu0 %v2944
      %v2946 = vpop.xlane.xlu0 %2945
      %v2947 = vmul.f32 %v2943, %v1523
      %v2948 = vmul.f32 %v2946, %v1523
      %v2949 = vadd.f32 %v2947, 1e-05
      %v2950 = vadd.f32 %v2948, 1e-05
      %v2951 = vrsqrt.pop %v2949
      %v2952 = vmul.f32 %v2951, %v2949
      %v2953 = vmul.f32 %v2952, %v2951
      %v2954 = vmul.f32 0.5, %v2953
      %v2955 = vsub.f32 1.5, %v2954
      %v2956 = vmul.f32 %v2951, %v2955
      %vm2957 = vweird.f32 %v2949
      %vm2958 = vweird.f32 %v2951
      %vm2959 = vmor %vm2957, %vm2958
      %v2960 = vsel %vm2959, %v2951, %v2956
      %v2961 = vrsqrt.pop %v2950
      %v2962 = vmul.f32 %v2961, %v2950
      %v2963 = vmul.f32 %v2962, %v2961
      %v2964 = vmul.f32 0.5, %v2963
      %v2965 = vsub.f32 1.5, %v2964
      %v2966 = vmul.f32 %v2961, %v2965
      %vm2967 = vweird.f32 %v2950
      %vm2968 = vweird.f32 %v2961
      %vm2969 = vmor %vm2967, %vm2968
      %v2970 = vsel %vm2969, %v2961, %v2966
      %v2971 = vmul.f32 %v2937, %v2960
      %v2972 = vmul.f32 %v2938, %v2970
      %v2974 = vperm.slane %v2927, 0
      %v2976 = vmul.f32 %v2971, %v2974
      %v2977 = vmul.f32 %v2972, %v2974
      %v2979 = vperm.slane %v2928, 0
      %v2981 = vadd.f32 %v2976, %v2979
      %v2982 = vadd.f32 %v2977, %v2979
      %v2983 = vld [vmem:[%s75] sm:$0xff]
      %v2984 = vld [vmem:[%s75 + $0x8] sm:$0xff]
      %v2985 = vld [vmem:[%s75 + $0x10] sm:$0xff]
      %v2986 = vld [vmem:[%s75 + $0x18] sm:$0xff]
      %v2987 = vld [vmem:[%s77] sm:$0x1]
      %v2989 = vperm.slane %v2987, 0
      %v2992 = vsel %vm1349, %v2981, 0
      %v2995 = vsel %vm1349, %v2982, 0
      %2997 = vmatpush.msra.mxu0 0.0
      %2998 = vmatpush.msra.mxu0 0.0
      %2999 = vmatpush.msra.mxu0 0.0
      %3000 = vmatpush.msra.mxu0 0.0
      %3001 = vmatpush.msra.mxu0 0.0
      %3002 = vmatpush.msra.mxu0 0.0
      %3003 = vmatpush.msra.mxu0 0.0
      %3004 = vmatpush.msra.mxu0 0.0
      %3005 = vmatpush.msra.mxu0 0.0
      %3006 = vmatpush.msra.mxu0 0.0
      %3007 = vmatpush.msra.mxu0 0.0
      %3008 = vmatpush.msra.mxu0 0.0
      %3009 = vmatpush.msra.mxu0 %v2986
      %3010 = vmatpush.msra.mxu0 %v2985
      %3011 = vmatpush.msra.mxu0 %v2984
      %3012 = vmatpush.msra.mxu0 %v2983
      %3013 = vmatmul.f32.gmra.mxu0 %v2992
      %v3014 = vpop.f32.mrf.mxu0
      %v3015 = vadd.f32 %v2989, %v3014
      %3016 = vmatmul.f32.gmra.mxu0 %v2995
      %v3017 = vpop.f32.mrf.mxu0
      %v3018 = vadd.f32 %v2989, %v3017
      %3019 = vdwg.mxu0
      %3020 = vst.msk [vmem:[%s1220] sm:$0xff] %vm1621, %v3015
      %3021 = vst.msk [vmem:[%s1220 + $0x8] sm:$0xff] %vm1621, %v3018
      %s3022 = smul.u32 2, %s90
      %p3023 = scmp.lt.s32.totalorder %s3022, 3
      %s3024 = scalar_select %p3023, %s3022, 3
      %s3025 = smul.addr %s3024, 8
      %s3026 = scalar_lea.vmem %s79, %s3025
      // Predicated region
      $region177: #{hubert_ctc_forward.1} parent=175 // pred_check
        %p3027 = pneg %p942
      $region178: #{hubert_ctc_forward.1} parent=175 // pred_check_branch
        %3029 = sbr.rel (%p3027) target = $region180
      $region179: #{hubert_ctc_forward.1} parent=175 // pred_region
        %s3030 = smul.u32 2, %s90
      $region180: #{hubert_ctc_forward.1} parent=175 // pred_fallthru
        _
    $region176: #{hubert_ctc_forward.1} parent=5 // pred_fallthru
      _
    %p3031 = scmp.le.s32.totalorder 2, %s85
    // Predicated region
    $region181: #{hubert_ctc_forward.1} parent=5 // pred_check
      %p3032 = pneg %p3031
    $region182: #{hubert_ctc_forward.1} parent=5 // pred_check_branch
      %3034 = sbr.rel (%p3032) target = $region184
    $region183: #{hubert_ctc_forward.1} parent=5 // pred_region
      %s3035 = ssub.s32 %s85, 2
      // Predicated region
      $region185: #{hubert_ctc_forward.1} parent=183 // pred_check
        %p3036 = pneg %p948
      $region186: #{hubert_ctc_forward.1} parent=183 // pred_check_branch
        %3038 = sbr.rel (%p3036) target = $region188
      $region187: #{hubert_ctc_forward.1} parent=183 // pred_region
        %s3039 = smul.u32 2, %s91
        %p3040 = scmp.lt.s32.totalorder %s3039, 3
        %s3041 = scalar_select %p3040, %s3039, 3
        %s3042 = smul.addr %s3041, 8
        %s3043 = scalar_lea.vmem %s79, %s3042
      $region188: #{hubert_ctc_forward.1} parent=183 // pred_fallthru
        _
    $region184: #{hubert_ctc_forward.1} parent=5 // pred_fallthru
      _
  $region6: #{hubert_ctc_forward.1} parent=0 // loop_footer
    %s89 = sadd.s32 1, %s85
  $region7: #{hubert_ctc_forward.1} parent=0 // loop_footer_branch
    %84 = sbr.rel target = $region3
  $region8: #{hubert_ctc_forward.1} parent=0 // loop_exit
    _

</llo_original>
